<compile_context>
chip_gen: v7x
topology: tpu7x:2x2x1
jax: 0.10.0
libtpu: 0.0.40
codegen_flags: <defaults>
</compile_context>

<pallas_src>
import jax
import jax.numpy as jnp
from jax import lax
from jax.experimental import pallas as pl
from jax.experimental.pallas import tpu as pltpu


# ----------------------------------------------------------------------------
# exact GELU (erf-based, matches torch.nn.GELU() default), built only from ops
# that lower cleanly in Mosaic (exp / abs / where / mul / add).
# Abramowitz & Stegun 7.1.26, |erf err| < 1.5e-7 (well inside 1e-3 tolerance).
# ----------------------------------------------------------------------------
def _erf(x):
    a1, a2, a3, a4, a5 = (0.254829592, -0.284496736, 1.421413741,
                          -1.453152027, 1.061405429)
    p = 0.3275911
    s = jnp.where(x >= 0.0, 1.0, -1.0)
    ax = jnp.abs(x)
    t = 1.0 / (1.0 + p * ax)
    poly = ((((a5 * t + a4) * t + a3) * t + a2) * t + a1) * t
    return s * (1.0 - poly * jnp.exp(-ax * ax))


def _gelu_exact(x):
    return 0.5 * x * (1.0 + _erf(x * 0.7071067811865476))


# ----------------------------------------------------------------------------
# Fused BasicBlock kernel.  One grid step processes one image.
#   xp_ref  : (H+2, W+2, Cin)   zero-padded input image (VMEM)
#   w1_ref  : (9*Cin, Cmid)     conv1 weight, BN1 scale folded in
#   b1_ref  : (1, Cmid)         BN1 bias
#   w2_ref  : (9*Cmid, Cout)    conv2 weight, BN2 scale folded in
#   b2_ref  : (1, Cout)         BN2 bias
#   out_ref : (H*W, Cout)
#   hpad_ref: (H+2, W+2, Cmid)  VMEM scratch: zero-padded intermediate h
# ----------------------------------------------------------------------------
def basic_block_kernel(xp_ref, w1_ref, b1_ref, w2_ref, b2_ref, out_ref,
                       hpad_ref):
    Hp, Wp, cin = xp_ref.shape
    H, W = Hp - 2, Wp - 2
    HW = H * W
    cmid = w1_ref.shape[1]

    def taps(ref, c):
        # (H+2, W+2, c) padded image -> (HW, 9*c) tap matrix; column order
        # (dy, dx, channel) matches the (9*c, Cout) weight layout.
        cols = []
        for dy in range(3):
            for dx in range(3):
                cols.append(ref[dy:dy + H, dx:dx + W, :].reshape(HW, c))
        return jnp.concatenate(cols, axis=-1)

    # conv1 (+ folded bn1) + GELU: one MXU matmul, f32 register accumulation.
    h = jnp.dot(taps(xp_ref, cin), w1_ref[...],
                preferred_element_type=jnp.float32)
    h = _gelu_exact(h + b1_ref[...])                        # (HW, Cmid) f32

    # Zero-pad the intermediate in VMEM for conv2's padding=1 tap extraction.
    hpad_ref[...] = jnp.zeros_like(hpad_ref)
    hpad_ref[1:1 + H, 1:1 + W, :] = h.reshape(H, W, cmid)

    # conv2 (+ folded bn2) + identity residual + GELU.
    y = jnp.dot(taps(hpad_ref, cmid), w2_ref[...],
                preferred_element_type=jnp.float32)
    identity = xp_ref[1:1 + H, 1:1 + W, :].reshape(HW, cin)
    y = _gelu_exact(y + b2_ref[...] + identity.astype(jnp.float32))
    out_ref[...] = y.astype(out_ref.dtype)


# ----------------------------------------------------------------------------
# Wrapper: pads once, launches the fused kernel, grid over batch.
# ----------------------------------------------------------------------------
@jax.jit
def basic_block_forward(x, params):
    N, H, W, Cin = x.shape
    w1, b1, w2, b2 = params["w1"], params["b1"], params["w2"], params["b2"]
    Cmid, Cout = w1.shape[1], w2.shape[1]
    assert Cin == Cout, "identity residual requires inplanes == planes"
    HW = H * W

    xp = jnp.pad(x, ((0, 0), (1, 1), (1, 1), (0, 0)))  # 1x activation stream

    itemsize = x.dtype.itemsize
    cost = pl.CostEstimate(
        flops=2 * N * HW * 9 * (Cin * Cmid + Cmid * Cout),
        transcendentals=N * HW * (Cmid + Cout),
        bytes_accessed=itemsize * (N * (H + 2) * (W + 2) * Cin + N * HW * Cout
                                   + 9 * Cin * Cmid + Cmid
                                   + 9 * Cmid * Cout + Cout),
    )

    out = pl.pallas_call(
        basic_block_kernel,
        out_shape=jax.ShapeDtypeStruct((N, HW, Cout), x.dtype),
        grid_spec=pltpu.PrefetchScalarGridSpec(
            num_scalar_prefetch=0,
            grid=(N,),
            in_specs=[
                # leading batch dim squeezed -> kernel refs are shape-exact
                pl.BlockSpec((None, H + 2, W + 2, Cin),
                             lambda n: (n, 0, 0, 0)),
                pl.BlockSpec((9 * Cin, Cmid), lambda n: (0, 0)),
                pl.BlockSpec((1, Cmid), lambda n: (0, 0)),
                pl.BlockSpec((9 * Cmid, Cout), lambda n: (0, 0)),
                pl.BlockSpec((1, Cout), lambda n: (0, 0)),
            ],
            out_specs=pl.BlockSpec((None, HW, Cout), lambda n: (n, 0, 0)),
            scratch_shapes=[pltpu.VMEM((H + 2, W + 2, Cmid), jnp.float32)],
        ),
        compiler_params=pltpu.CompilerParams(
            dimension_semantics=("parallel",),
            vmem_limit_bytes=32 * 1024 * 1024,
        ),
        cost_estimate=cost,
    )(xp, w1, b1, w2, b2)
    return out.reshape(N, H, W, Cout)


# ----------------------------------------------------------------------------
# Parameter prep (done once): fold inference-mode BatchNorm into the conv
# weights/biases and lay weights out as (9*Cin, Cout) to match the tap matrix.
# ----------------------------------------------------------------------------
def prepare_params(w1_oihw, bn1, w2_oihw, bn2, eps=1e-5):
    def fold(w_oihw, bn):
        g, b, m, v = bn
        scale = g / jnp.sqrt(v + eps)                  # per output channel
        bias = b - m * scale
        w_hwio = jnp.transpose(w_oihw, (2, 3, 1, 0))   # (3, 3, Cin, Cout)
        w_folded = w_hwio * scale[None, None, None, :]
        cin, cout = w_hwio.shape[2], w_hwio.shape[3]
        return w_folded.reshape(9 * cin, cout), bias[None, :]

    w1, b1 = fold(w1_oihw, bn1)
    w2, b2 = fold(w2_oihw, bn2)
    return dict(w1=w1, b1=b1, w2=w2, b2=b2)


# ----------------------------------------------------------------------------
# Pure-JAX reference (lax.conv) for verification.
# ----------------------------------------------------------------------------
def _ref_forward(x, w1_oihw, bn1, w2_oihw, bn2, eps=1e-5):
    dn = ("NHWC", "HWIO", "NHWC")

    def conv(inp, w_oihw):
        w_hwio = jnp.transpose(w_oihw, (2, 3, 1, 0))
        return lax.conv_general_dilated(inp, w_hwio, (1, 1),
                                        [(1, 1), (1, 1)],
                                        dimension_numbers=dn)

    def bn(inp, p):
        g, b, m, v = p
        return (inp - m) / jnp.sqrt(v + eps) * g + b

    out = jax.nn.gelu(bn(conv(x, w1_oihw), bn1), approximate=False)
    out = bn(conv(out, w2_oihw), bn2) + x
    return jax.nn.gelu(out, approximate=False)


if __name__ == "__main__":
    # Small shapes consistent with BasicBlock(inplanes=8, planes=8, stride=1).
    N, H, W, C = 2, 16, 16, 8
    key = jax.random.PRNGKey(0)
    ks = jax.random.split(key, 11)

    x = jax.random.normal(ks[0], (N, H, W, C), jnp.float32)

    # PyTorch conv weights are (out, in, kh, kw); bias=False.
    w1_oihw = jax.random.normal(ks[1], (C, C, 3, 3), jnp.float32) * 0.1
    w2_oihw = jax.random.normal(ks[2], (C, C, 3, 3), jnp.float32) * 0.1

    # BatchNorm parameters / running statistics (deterministic, non-trivial).
    g1 = jax.random.uniform(ks[3], (C,), jnp.float32, 0.5, 1.5)
    b1 = jax.random.normal(ks[4], (C,), jnp.float32) * 0.1
    m1 = jax.random.normal(ks[5], (C,), jnp.float32) * 0.1
    v1 = jax.random.uniform(ks[6], (C,), jnp.float32, 0.5, 1.5)
    g2 = jax.random.uniform(ks[7], (C,), jnp.float32, 0.5, 1.5)
    b2 = jax.random.normal(ks[8], (C,), jnp.float32) * 0.1
    m2 = jax.random.normal(ks[9], (C,), jnp.float32) * 0.1
    v2 = jax.random.uniform(ks[10], (C,), jnp.float32, 0.5, 1.5)

    params = prepare_params(w1_oihw, (g1, b1, m1, v1),
                            w2_oihw, (g2, b2, m2, v2))

    out = basic_block_forward(x, params)
    out = jax.block_until_ready(out)

    ref = _ref_forward(x, w1_oihw, (g1, b1, m1, v1), w2_oihw, (g2, b2, m2, v2))
    ref = jax.block_until_ready(ref)

    max_err = float(jnp.max(jnp.abs(out - ref)))
    assert out.shape == (N, H, W, C)
    assert max_err < 1e-3, f"mismatch vs reference: {max_err}"
    print("KERNEL_OK")
</pallas_src>

<mosaic_0001>
module attributes {stable_mosaic.version = 11 : i64} {
  func.func @basic_block_kernel(%arg0: i32, %arg1: memref<1x18x18x8xf32, #tpu.memory_space<vmem>>, %arg2: memref<72x8xf32, #tpu.memory_space<vmem>>, %arg3: memref<1x8xf32, #tpu.memory_space<vmem>>, %arg4: memref<72x8xf32, #tpu.memory_space<vmem>>, %arg5: memref<1x8xf32, #tpu.memory_space<vmem>>, %arg6: memref<1x256x8xf32, #tpu.memory_space<vmem>>, %arg7: memref<18x18x8xf32, #tpu.memory_space<vmem>>) attributes {dimension_semantics = [#tpu.dimension_semantics<parallel>], iteration_bounds = array<i64: 2>, scalar_prefetch = 0 : i64, scratch_operands = 1 : i64, tpu.core_type = #tpu.core_type<tc>, window_params = [{transform_indices = @transform_0, window_bounds = array<i64: 1, 18, 18, 8>}, {pipeline_mode = #tpu.pipeline_mode<synchronous>, transform_indices = @transform_1, window_bounds = array<i64: 72, 8>}, {pipeline_mode = #tpu.pipeline_mode<synchronous>, transform_indices = @transform_2, window_bounds = array<i64: 1, 8>}, {pipeline_mode = #tpu.pipeline_mode<synchronous>, transform_indices = @transform_3, window_bounds = array<i64: 72, 8>}, {pipeline_mode = #tpu.pipeline_mode<synchronous>, transform_indices = @transform_4, window_bounds = array<i64: 1, 8>}, {transform_indices = @transform_5, window_bounds = array<i64: 1, 256, 8>}]} {
    %c0 = arith.constant 0 : index
    %c0_0 = arith.constant 0 : index
    %c0_1 = arith.constant 0 : index
    %c0_2 = arith.constant 0 : index
    %0 = vector.load %arg1[%c0, %c0_0, %c0_1, %c0_2] : memref<1x18x18x8xf32, #tpu.memory_space<vmem>>, vector<1x16x16x8xf32>
    %1 = vector.shape_cast %0 : vector<1x16x16x8xf32> to vector<16x16x8xf32>
    %2 = vector.shape_cast %1 : vector<16x16x8xf32> to vector<256x8xf32>
    %c0_3 = arith.constant 0 : index
    %c0_4 = arith.constant 0 : index
    %c1 = arith.constant 1 : index
    %c0_5 = arith.constant 0 : index
    %3 = vector.load %arg1[%c0_3, %c0_4, %c1, %c0_5] : memref<1x18x18x8xf32, #tpu.memory_space<vmem>>, vector<1x16x16x8xf32>
    %4 = vector.shape_cast %3 : vector<1x16x16x8xf32> to vector<16x16x8xf32>
    %5 = vector.shape_cast %4 : vector<16x16x8xf32> to vector<256x8xf32>
    %c0_6 = arith.constant 0 : index
    %c0_7 = arith.constant 0 : index
    %c2 = arith.constant 2 : index
    %c0_8 = arith.constant 0 : index
    %6 = vector.load %arg1[%c0_6, %c0_7, %c2, %c0_8] : memref<1x18x18x8xf32, #tpu.memory_space<vmem>>, vector<1x16x16x8xf32>
    %7 = vector.shape_cast %6 : vector<1x16x16x8xf32> to vector<16x16x8xf32>
    %8 = vector.shape_cast %7 : vector<16x16x8xf32> to vector<256x8xf32>
    %c0_9 = arith.constant 0 : index
    %c1_10 = arith.constant 1 : index
    %c0_11 = arith.constant 0 : index
    %c0_12 = arith.constant 0 : index
    %9 = vector.load %arg1[%c0_9, %c1_10, %c0_11, %c0_12] : memref<1x18x18x8xf32, #tpu.memory_space<vmem>>, vector<1x16x16x8xf32>
    %10 = vector.shape_cast %9 : vector<1x16x16x8xf32> to vector<16x16x8xf32>
    %11 = vector.shape_cast %10 : vector<16x16x8xf32> to vector<256x8xf32>
    %c0_13 = arith.constant 0 : index
    %c1_14 = arith.constant 1 : index
    %c1_15 = arith.constant 1 : index
    %c0_16 = arith.constant 0 : index
    %12 = vector.load %arg1[%c0_13, %c1_14, %c1_15, %c0_16] : memref<1x18x18x8xf32, #tpu.memory_space<vmem>>, vector<1x16x16x8xf32>
    %13 = vector.shape_cast %12 : vector<1x16x16x8xf32> to vector<16x16x8xf32>
    %14 = vector.shape_cast %13 : vector<16x16x8xf32> to vector<256x8xf32>
    %c0_17 = arith.constant 0 : index
    %c1_18 = arith.constant 1 : index
    %c2_19 = arith.constant 2 : index
    %c0_20 = arith.constant 0 : index
    %15 = vector.load %arg1[%c0_17, %c1_18, %c2_19, %c0_20] : memref<1x18x18x8xf32, #tpu.memory_space<vmem>>, vector<1x16x16x8xf32>
    %16 = vector.shape_cast %15 : vector<1x16x16x8xf32> to vector<16x16x8xf32>
    %17 = vector.shape_cast %16 : vector<16x16x8xf32> to vector<256x8xf32>
    %c0_21 = arith.constant 0 : index
    %c2_22 = arith.constant 2 : index
    %c0_23 = arith.constant 0 : index
    %c0_24 = arith.constant 0 : index
    %18 = vector.load %arg1[%c0_21, %c2_22, %c0_23, %c0_24] : memref<1x18x18x8xf32, #tpu.memory_space<vmem>>, vector<1x16x16x8xf32>
    %19 = vector.shape_cast %18 : vector<1x16x16x8xf32> to vector<16x16x8xf32>
    %20 = vector.shape_cast %19 : vector<16x16x8xf32> to vector<256x8xf32>
    %c0_25 = arith.constant 0 : index
    %c2_26 = arith.constant 2 : index
    %c1_27 = arith.constant 1 : index
    %c0_28 = arith.constant 0 : index
    %21 = vector.load %arg1[%c0_25, %c2_26, %c1_27, %c0_28] : memref<1x18x18x8xf32, #tpu.memory_space<vmem>>, vector<1x16x16x8xf32>
    %22 = vector.shape_cast %21 : vector<1x16x16x8xf32> to vector<16x16x8xf32>
    %23 = vector.shape_cast %22 : vector<16x16x8xf32> to vector<256x8xf32>
    %c0_29 = arith.constant 0 : index
    %c2_30 = arith.constant 2 : index
    %c2_31 = arith.constant 2 : index
    %c0_32 = arith.constant 0 : index
    %24 = vector.load %arg1[%c0_29, %c2_30, %c2_31, %c0_32] : memref<1x18x18x8xf32, #tpu.memory_space<vmem>>, vector<1x16x16x8xf32>
    %25 = vector.shape_cast %24 : vector<1x16x16x8xf32> to vector<16x16x8xf32>
    %26 = vector.shape_cast %25 : vector<16x16x8xf32> to vector<256x8xf32>
    %27 = tpu.concatenate %2, %5, %8, %11, %14, %17, %20, %23, %26 in 1 : vector<256x8xf32>, vector<256x8xf32>, vector<256x8xf32>, vector<256x8xf32>, vector<256x8xf32>, vector<256x8xf32>, vector<256x8xf32>, vector<256x8xf32>, vector<256x8xf32> -> vector<256x72xf32>
    %c0_33 = arith.constant 0 : index
    %c0_34 = arith.constant 0 : index
    %28 = vector.load %arg2[%c0_33, %c0_34] : memref<72x8xf32, #tpu.memory_space<vmem>>, vector<72x8xf32>
    %cst = arith.constant dense<0.000000e+00> : vector<256x8xf32>
    %29 = tpu.matmul %27, %28, %cst {dimension_numbers = #tpu.dot_dimension_numbers<[1], [0], [0], [1], [0, 0, 1, 1], [], []>} : vector<256x72xf32>, vector<72x8xf32>, vector<256x8xf32> -> vector<256x8xf32>
    %c0_35 = arith.constant 0 : index
    %c0_36 = arith.constant 0 : index
    %30 = vector.load %arg3[%c0_35, %c0_36] : memref<1x8xf32, #tpu.memory_space<vmem>>, vector<1x8xf32>
    %31 = vector.broadcast %30 : vector<1x8xf32> to vector<256x8xf32>
    %32 = arith.addf %29, %31 : vector<256x8xf32>
    %cst_37 = arith.constant 5.000000e-01 : f32
    %33 = vector.broadcast %cst_37 : f32 to vector<256x8xf32>
    %34 = arith.mulf %33, %32 : vector<256x8xf32>
    %cst_38 = arith.constant 0.707106769 : f32
    %35 = vector.broadcast %cst_38 : f32 to vector<256x8xf32>
    %36 = arith.mulf %32, %35 : vector<256x8xf32>
    %cst_39 = arith.constant 0.000000e+00 : f32
    %37 = vector.broadcast %cst_39 : f32 to vector<256x8xf32>
    %38 = arith.cmpf oge, %36, %37 : vector<256x8xf32>
    %cst_40 = arith.constant 1.000000e+00 : f32
    %cst_41 = arith.constant -1.000000e+00 : f32
    %39 = vector.broadcast %cst_40 : f32 to vector<256x8xf32>
    %40 = vector.broadcast %cst_41 : f32 to vector<256x8xf32>
    %41 = arith.select %38, %39, %40 : vector<256x8xi1>, vector<256x8xf32>
    %42 = math.absf %36 : vector<256x8xf32>
    %cst_42 = arith.constant 0.327591091 : f32
    %43 = vector.broadcast %cst_42 : f32 to vector<256x8xf32>
    %44 = arith.mulf %43, %42 : vector<256x8xf32>
    %cst_43 = arith.constant 1.000000e+00 : f32
    %45 = vector.broadcast %cst_43 : f32 to vector<256x8xf32>
    %46 = arith.addf %45, %44 : vector<256x8xf32>
    %cst_44 = arith.constant 1.000000e+00 : f32
    %47 = vector.broadcast %cst_44 : f32 to vector<256x8xf32>
    %48 = arith.divf %47, %46 : vector<256x8xf32>
    %cst_45 = arith.constant 1.06140542 : f32
    %49 = vector.broadcast %cst_45 : f32 to vector<256x8xf32>
    %50 = arith.mulf %49, %48 : vector<256x8xf32>
    %cst_46 = arith.constant -1.45315206 : f32
    %51 = vector.broadcast %cst_46 : f32 to vector<256x8xf32>
    %52 = arith.addf %50, %51 : vector<256x8xf32>
    %53 = arith.mulf %52, %48 : vector<256x8xf32>
    %cst_47 = arith.constant 1.42141378 : f32
    %54 = vector.broadcast %cst_47 : f32 to vector<256x8xf32>
    %55 = arith.addf %53, %54 : vector<256x8xf32>
    %56 = arith.mulf %55, %48 : vector<256x8xf32>
    %cst_48 = arith.constant -0.284496725 : f32
    %57 = vector.broadcast %cst_48 : f32 to vector<256x8xf32>
    %58 = arith.addf %56, %57 : vector<256x8xf32>
    %59 = arith.mulf %58, %48 : vector<256x8xf32>
    %cst_49 = arith.constant 0.254829586 : f32
    %60 = vector.broadcast %cst_49 : f32 to vector<256x8xf32>
    %61 = arith.addf %59, %60 : vector<256x8xf32>
    %62 = arith.mulf %61, %48 : vector<256x8xf32>
    %cst_50 = arith.constant 0.000000e+00 : f32
    %63 = vector.broadcast %cst_50 : f32 to vector<256x8xf32>
    %64 = arith.subf %63, %42 : vector<256x8xf32>
    %65 = arith.mulf %64, %42 : vector<256x8xf32>
    %66 = math.exp %65 : vector<256x8xf32>
    %67 = arith.mulf %62, %66 : vector<256x8xf32>
    %cst_51 = arith.constant 1.000000e+00 : f32
    %68 = vector.broadcast %cst_51 : f32 to vector<256x8xf32>
    %69 = arith.subf %68, %67 : vector<256x8xf32>
    %70 = arith.mulf %41, %69 : vector<256x8xf32>
    %cst_52 = arith.constant 1.000000e+00 : f32
    %71 = vector.broadcast %cst_52 : f32 to vector<256x8xf32>
    %72 = arith.addf %71, %70 : vector<256x8xf32>
    %73 = arith.mulf %34, %72 : vector<256x8xf32>
    %cst_53 = arith.constant 0.000000e+00 : f32
    %74 = vector.broadcast %cst_53 : f32 to vector<18x18x8xf32>
    %c0_54 = arith.constant 0 : index
    %c0_55 = arith.constant 0 : index
    %c0_56 = arith.constant 0 : index
    %75 = vector.load %arg7[%c0_54, %c0_55, %c0_56] : memref<18x18x8xf32, #tpu.memory_space<vmem>>, vector<18x18x8xf32>
    tpu.vector_store %arg7[%c0_54, %c0_55, %c0_56], %74 {strides = array<i32>} : memref<18x18x8xf32, #tpu.memory_space<vmem>>, vector<18x18x8xf32>,
    %76 = vector.shape_cast %73 : vector<256x8xf32> to vector<16x16x8xf32>
    %c1_57 = arith.constant 1 : index
    %c1_58 = arith.constant 1 : index
    %c0_59 = arith.constant 0 : index
    %77 = vector.load %arg7[%c1_57, %c1_58, %c0_59] : memref<18x18x8xf32, #tpu.memory_space<vmem>>, vector<16x16x8xf32>
    tpu.vector_store %arg7[%c1_57, %c1_58, %c0_59], %76 {strides = array<i32>} : memref<18x18x8xf32, #tpu.memory_space<vmem>>, vector<16x16x8xf32>,
    %c0_60 = arith.constant 0 : index
    %c0_61 = arith.constant 0 : index
    %c0_62 = arith.constant 0 : index
    %78 = vector.load %arg7[%c0_60, %c0_61, %c0_62] : memref<18x18x8xf32, #tpu.memory_space<vmem>>, vector<16x16x8xf32>
    %79 = vector.shape_cast %78 : vector<16x16x8xf32> to vector<256x8xf32>
    %c0_63 = arith.constant 0 : index
    %c1_64 = arith.constant 1 : index
    %c0_65 = arith.constant 0 : index
    %80 = vector.load %arg7[%c0_63, %c1_64, %c0_65] : memref<18x18x8xf32, #tpu.memory_space<vmem>>, vector<16x16x8xf32>
    %81 = vector.shape_cast %80 : vector<16x16x8xf32> to vector<256x8xf32>
    %c0_66 = arith.constant 0 : index
    %c2_67 = arith.constant 2 : index
    %c0_68 = arith.constant 0 : index
    %82 = vector.load %arg7[%c0_66, %c2_67, %c0_68] : memref<18x18x8xf32, #tpu.memory_space<vmem>>, vector<16x16x8xf32>
    %83 = vector.shape_cast %82 : vector<16x16x8xf32> to vector<256x8xf32>
    %c1_69 = arith.constant 1 : index
    %c0_70 = arith.constant 0 : index
    %c0_71 = arith.constant 0 : index
    %84 = vector.load %arg7[%c1_69, %c0_70, %c0_71] : memref<18x18x8xf32, #tpu.memory_space<vmem>>, vector<16x16x8xf32>
    %85 = vector.shape_cast %84 : vector<16x16x8xf32> to vector<256x8xf32>
    %c1_72 = arith.constant 1 : index
    %c1_73 = arith.constant 1 : index
    %c0_74 = arith.constant 0 : index
    %86 = vector.load %arg7[%c1_72, %c1_73, %c0_74] : memref<18x18x8xf32, #tpu.memory_space<vmem>>, vector<16x16x8xf32>
    %87 = vector.shape_cast %86 : vector<16x16x8xf32> to vector<256x8xf32>
    %c1_75 = arith.constant 1 : index
    %c2_76 = arith.constant 2 : index
    %c0_77 = arith.constant 0 : index
    %88 = vector.load %arg7[%c1_75, %c2_76, %c0_77] : memref<18x18x8xf32, #tpu.memory_space<vmem>>, vector<16x16x8xf32>
    %89 = vector.shape_cast %88 : vector<16x16x8xf32> to vector<256x8xf32>
    %c2_78 = arith.constant 2 : index
    %c0_79 = arith.constant 0 : index
    %c0_80 = arith.constant 0 : index
    %90 = vector.load %arg7[%c2_78, %c0_79, %c0_80] : memref<18x18x8xf32, #tpu.memory_space<vmem>>, vector<16x16x8xf32>
    %91 = vector.shape_cast %90 : vector<16x16x8xf32> to vector<256x8xf32>
    %c2_81 = arith.constant 2 : index
    %c1_82 = arith.constant 1 : index
    %c0_83 = arith.constant 0 : index
    %92 = vector.load %arg7[%c2_81, %c1_82, %c0_83] : memref<18x18x8xf32, #tpu.memory_space<vmem>>, vector<16x16x8xf32>
    %93 = vector.shape_cast %92 : vector<16x16x8xf32> to vector<256x8xf32>
    %c2_84 = arith.constant 2 : index
    %c2_85 = arith.constant 2 : index
    %c0_86 = arith.constant 0 : index
    %94 = vector.load %arg7[%c2_84, %c2_85, %c0_86] : memref<18x18x8xf32, #tpu.memory_space<vmem>>, vector<16x16x8xf32>
    %95 = vector.shape_cast %94 : vector<16x16x8xf32> to vector<256x8xf32>
    %96 = tpu.concatenate %79, %81, %83, %85, %87, %89, %91, %93, %95 in 1 : vector<256x8xf32>, vector<256x8xf32>, vector<256x8xf32>, vector<256x8xf32>, vector<256x8xf32>, vector<256x8xf32>, vector<256x8xf32>, vector<256x8xf32>, vector<256x8xf32> -> vector<256x72xf32>
    %c0_87 = arith.constant 0 : index
    %c0_88 = arith.constant 0 : index
    %97 = vector.load %arg4[%c0_87, %c0_88] : memref<72x8xf32, #tpu.memory_space<vmem>>, vector<72x8xf32>
    %cst_89 = arith.constant dense<0.000000e+00> : vector<256x8xf32>
    %98 = tpu.matmul %96, %97, %cst_89 {dimension_numbers = #tpu.dot_dimension_numbers<[1], [0], [0], [1], [0, 0, 1, 1], [], []>} : vector<256x72xf32>, vector<72x8xf32>, vector<256x8xf32> -> vector<256x8xf32>
    %c0_90 = arith.constant 0 : index
    %c1_91 = arith.constant 1 : index
    %c1_92 = arith.constant 1 : index
    %c0_93 = arith.constant 0 : index
    %99 = vector.load %arg1[%c0_90, %c1_91, %c1_92, %c0_93] : memref<1x18x18x8xf32, #tpu.memory_space<vmem>>, vector<1x16x16x8xf32>
    %100 = vector.shape_cast %99 : vector<1x16x16x8xf32> to vector<16x16x8xf32>
    %101 = vector.shape_cast %100 : vector<16x16x8xf32> to vector<256x8xf32>
    %c0_94 = arith.constant 0 : index
    %c0_95 = arith.constant 0 : index
    %102 = vector.load %arg5[%c0_94, %c0_95] : memref<1x8xf32, #tpu.memory_space<vmem>>, vector<1x8xf32>
    %103 = vector.broadcast %102 : vector<1x8xf32> to vector<256x8xf32>
    %104 = arith.addf %98, %103 : vector<256x8xf32>
    %105 = arith.addf %104, %101 : vector<256x8xf32>
    %cst_96 = arith.constant 5.000000e-01 : f32
    %106 = vector.broadcast %cst_96 : f32 to vector<256x8xf32>
    %107 = arith.mulf %106, %105 : vector<256x8xf32>
    %cst_97 = arith.constant 0.707106769 : f32
    %108 = vector.broadcast %cst_97 : f32 to vector<256x8xf32>
    %109 = arith.mulf %105, %108 : vector<256x8xf32>
    %cst_98 = arith.constant 0.000000e+00 : f32
    %110 = vector.broadcast %cst_98 : f32 to vector<256x8xf32>
    %111 = arith.cmpf oge, %109, %110 : vector<256x8xf32>
    %cst_99 = arith.constant 1.000000e+00 : f32
    %cst_100 = arith.constant -1.000000e+00 : f32
    %112 = vector.broadcast %cst_99 : f32 to vector<256x8xf32>
    %113 = vector.broadcast %cst_100 : f32 to vector<256x8xf32>
    %114 = arith.select %111, %112, %113 : vector<256x8xi1>, vector<256x8xf32>
    %115 = math.absf %109 : vector<256x8xf32>
    %cst_101 = arith.constant 0.327591091 : f32
    %116 = vector.broadcast %cst_101 : f32 to vector<256x8xf32>
    %117 = arith.mulf %116, %115 : vector<256x8xf32>
    %cst_102 = arith.constant 1.000000e+00 : f32
    %118 = vector.broadcast %cst_102 : f32 to vector<256x8xf32>
    %119 = arith.addf %118, %117 : vector<256x8xf32>
    %cst_103 = arith.constant 1.000000e+00 : f32
    %120 = vector.broadcast %cst_103 : f32 to vector<256x8xf32>
    %121 = arith.divf %120, %119 : vector<256x8xf32>
    %cst_104 = arith.constant 1.06140542 : f32
    %122 = vector.broadcast %cst_104 : f32 to vector<256x8xf32>
    %123 = arith.mulf %122, %121 : vector<256x8xf32>
    %cst_105 = arith.constant -1.45315206 : f32
    %124 = vector.broadcast %cst_105 : f32 to vector<256x8xf32>
    %125 = arith.addf %123, %124 : vector<256x8xf32>
    %126 = arith.mulf %125, %121 : vector<256x8xf32>
    %cst_106 = arith.constant 1.42141378 : f32
    %127 = vector.broadcast %cst_106 : f32 to vector<256x8xf32>
    %128 = arith.addf %126, %127 : vector<256x8xf32>
    %129 = arith.mulf %128, %121 : vector<256x8xf32>
    %cst_107 = arith.constant -0.284496725 : f32
    %130 = vector.broadcast %cst_107 : f32 to vector<256x8xf32>
    %131 = arith.addf %129, %130 : vector<256x8xf32>
    %132 = arith.mulf %131, %121 : vector<256x8xf32>
    %cst_108 = arith.constant 0.254829586 : f32
    %133 = vector.broadcast %cst_108 : f32 to vector<256x8xf32>
    %134 = arith.addf %132, %133 : vector<256x8xf32>
    %135 = arith.mulf %134, %121 : vector<256x8xf32>
    %cst_109 = arith.constant 0.000000e+00 : f32
    %136 = vector.broadcast %cst_109 : f32 to vector<256x8xf32>
    %137 = arith.subf %136, %115 : vector<256x8xf32>
    %138 = arith.mulf %137, %115 : vector<256x8xf32>
    %139 = math.exp %138 : vector<256x8xf32>
    %140 = arith.mulf %135, %139 : vector<256x8xf32>
    %cst_110 = arith.constant 1.000000e+00 : f32
    %141 = vector.broadcast %cst_110 : f32 to vector<256x8xf32>
    %142 = arith.subf %141, %140 : vector<256x8xf32>
    %143 = arith.mulf %114, %142 : vector<256x8xf32>
    %cst_111 = arith.constant 1.000000e+00 : f32
    %144 = vector.broadcast %cst_111 : f32 to vector<256x8xf32>
    %145 = arith.addf %144, %143 : vector<256x8xf32>
    %146 = arith.mulf %107, %145 : vector<256x8xf32>
    %c0_112 = arith.constant 0 : index
    %c0_113 = arith.constant 0 : index
    %c0_114 = arith.constant 0 : index
    %147 = vector.load %arg6[%c0_112, %c0_113, %c0_114] : memref<1x256x8xf32, #tpu.memory_space<vmem>>, vector<1x256x8xf32>
    %148 = vector.shape_cast %147 : vector<1x256x8xf32> to vector<256x8xf32>
    %149 = vector.shape_cast %146 : vector<256x8xf32> to vector<1x256x8xf32>
    tpu.vector_store %arg6[%c0_112, %c0_113, %c0_114], %149 {strides = array<i32>} : memref<1x256x8xf32, #tpu.memory_space<vmem>>, vector<1x256x8xf32>,
    return
  }
  func.func @transform_0(%arg0: i32) -> (i32, i32, i32, i32) {
    %c0_i32 = arith.constant 0 : i32
    %c0_i32_0 = arith.constant 0 : i32
    %c0_i32_1 = arith.constant 0 : i32
    %c0_i32_2 = arith.constant 0 : i32
    return %arg0, %c0_i32, %c0_i32_0, %c0_i32_1 : i32, i32, i32, i32
  }
  func.func @transform_1(%arg0: i32) -> (i32, i32) {
    %c0_i32 = arith.constant 0 : i32
    %c0_i32_0 = arith.constant 0 : i32
    %c0_i32_1 = arith.constant 0 : i32
    return %c0_i32, %c0_i32_0 : i32, i32
  }
  func.func @transform_2(%arg0: i32) -> (i32, i32) {
    %c0_i32 = arith.constant 0 : i32
    %c0_i32_0 = arith.constant 0 : i32
    %c0_i32_1 = arith.constant 0 : i32
    return %c0_i32, %c0_i32_0 : i32, i32
  }
  func.func @transform_3(%arg0: i32) -> (i32, i32) {
    %c0_i32 = arith.constant 0 : i32
    %c0_i32_0 = arith.constant 0 : i32
    %c0_i32_1 = arith.constant 0 : i32
    return %c0_i32, %c0_i32_0 : i32, i32
  }
  func.func @transform_4(%arg0: i32) -> (i32, i32) {
    %c0_i32 = arith.constant 0 : i32
    %c0_i32_0 = arith.constant 0 : i32
    %c0_i32_1 = arith.constant 0 : i32
    return %c0_i32, %c0_i32_0 : i32, i32
  }
  func.func @transform_5(%arg0: i32) -> (i32, i32, i32) {
    %c0_i32 = arith.constant 0 : i32
    %c0_i32_0 = arith.constant 0 : i32
    %c0_i32_1 = arith.constant 0 : i32
    return %arg0, %c0_i32, %c0_i32_0 : i32, i32, i32
  }
}

</mosaic_0001>

<llo_original>
// kernel: basic_block_forward.1
$region0: #{basic_block_forward.1}
  #allocation0 [shape = 'u32[]', space=smem, size = 0x4, offset = 0x4, fixed_abs, tag = 'smem constant byte address 0x4 - core index']
  #allocation1 [shape = 'u32[144,128]{1,0:T(1,128)}', space=vmem, size = 0x12000, scoped, tag = 'internal scratch']
  #allocation2 [shape = 'f32[18,18,8]{2,1,0:T(8,128)}', space=vmem, size = 0x36000, scoped, tag = 'scratch operand']
  %s0 = inlined_call_operand.vmem [shape: f32[2,18,18,8], index: 0, kind: input, shape index: {}]
  %s1 = inlined_call_operand.vmem [shape: f32[72,8], index: 1, kind: input, shape index: {}]
  %s2 = inlined_call_operand.vmem [shape: f32[1,8], index: 2, kind: input, shape index: {}]
  %s3 = inlined_call_operand.vmem [shape: f32[72,8], index: 3, kind: input, shape index: {}]
  %s4 = inlined_call_operand.vmem [shape: f32[1,8], index: 4, kind: input, shape index: {}]
  %s5 = inlined_call_operand.vmem [shape: f32[2,256,8], index: 5, kind: output, shape index: {}]
  %s6 = sld [smem:[#allocation0]]
  $region53: #{basic_block_forward.1} parent=0
    _
  %s8 = ssub.s32 1, %s6
  %s9 = scalar_select 0, %s8, %s6
  loop: start=0, step=1, limit=4
  $region2: #{basic_block_forward.1} parent=0 // loop_pre_header
    _
  $region3: #{basic_block_forward.1} parent=0 // loop_header
    %s11 = sphi 0, %s15
    %p12 = scmp.ge.s32.totalorder %s11, 4
    %s21 = sphi 0, %s23
    %s24 = sphi 0, %s21
    %s25 = sphi 0, %s24
    %s41 = sphi 0, %s25
    %s45 = sphi 0, %s45
    %s47 = sphi 0, %s45
    %s48 = sphi 0, %s47
    %s62 = sphi 0, %s48
    %s66 = sphi 0, %s66
    %s68 = sphi 0, %s66
    %s69 = sphi 0, %s68
    %s83 = sphi 0, %s69
    %s87 = sphi 0, %s87
    %s89 = sphi 0, %s87
    %s90 = sphi 0, %s89
    %s104 = sphi 0, %s90
    %s108 = sphi 0, %s108
    %s110 = sphi 0, %s108
    %s111 = sphi 0, %s110
    %s125 = sphi 0, %s111
    %s131 = sphi 0, %s133
    %s134 = sphi 0, %s131
    %s135 = sphi 0, %s134
    %s151 = sphi 0, %s135
  $region4: #{basic_block_forward.1} parent=0 // loop_header_branch
    %14 = sbr.rel (%p12) target = $region8
  $region5: #{basic_block_forward.1} parent=0 // loop_body
    %s16 = ssub.s32 %s11, 1
    %s17 = ssub.s32 %s11, 2
    %s18 = sadd.s32 %s11, 1
    %s19 = ssub.s32 %s11, %s18
    %p20 = scmp.eq.s32.totalorder %s19, 0
    %s22 = sadd.s32 %s21, 1
    %s23 = scalar_select %p20, %s21, %s22
    %p26 = pneg %p20
    %p27 = scmp.eq.s32.totalorder %s11, 1
    %p28 = por %p26, %p27
    %p29 = scmp.ne.s32.totalorder %s21, %s24
    %p30 = scmp.eq.s32.totalorder %s11, 0
    %p31 = por %p29, %p30
    %p32 = scmp.ne.s32.totalorder %s21, %s24
    %p33 = scmp.eq.s32.totalorder %s16, 1
    %p34 = por %p32, %p33
    %p35 = scmp.ne.s32.totalorder %s24, %s25
    %p36 = scmp.eq.s32.totalorder %s16, 0
    %p37 = por %p35, %p36
    %p38 = scmp.ne.s32.totalorder %s24, %s25
    %p39 = scmp.eq.s32.totalorder %s17, 1
    %p40 = por %p38, %p39
    %p42 = scmp.ne.s32.totalorder %s25, %s41
    %p43 = scmp.eq.s32.totalorder %s17, 0
    %p44 = por %p42, %p43
    %s46 = sadd.s32 %s45, 1
    %p49 = scmp.eq.s32.totalorder %s11, 1
    %p50 = scmp.ne.s32.totalorder %s45, %s47
    %p51 = scmp.eq.s32.totalorder %s11, 0
    %p52 = por %p50, %p51
    %p53 = scmp.ne.s32.totalorder %s45, %s47
    %p54 = scmp.eq.s32.totalorder %s16, 1
    %p55 = por %p53, %p54
    %p56 = scmp.ne.s32.totalorder %s47, %s48
    %p57 = scmp.eq.s32.totalorder %s16, 0
    %p58 = por %p56, %p57
    %p59 = scmp.ne.s32.totalorder %s47, %s48
    %p60 = scmp.eq.s32.totalorder %s17, 1
    %p61 = por %p59, %p60
    %p63 = scmp.ne.s32.totalorder %s48, %s62
    %p64 = scmp.eq.s32.totalorder %s17, 0
    %p65 = por %p63, %p64
    %s67 = sadd.s32 %s66, 1
    %p70 = scmp.eq.s32.totalorder %s11, 1
    %p71 = scmp.ne.s32.totalorder %s66, %s68
    %p72 = scmp.eq.s32.totalorder %s11, 0
    %p73 = por %p71, %p72
    %p74 = scmp.ne.s32.totalorder %s66, %s68
    %p75 = scmp.eq.s32.totalorder %s16, 1
    %p76 = por %p74, %p75
    %p77 = scmp.ne.s32.totalorder %s68, %s69
    %p78 = scmp.eq.s32.totalorder %s16, 0
    %p79 = por %p77, %p78
    %p80 = scmp.ne.s32.totalorder %s68, %s69
    %p81 = scmp.eq.s32.totalorder %s17, 1
    %p82 = por %p80, %p81
    %p84 = scmp.ne.s32.totalorder %s69, %s83
    %p85 = scmp.eq.s32.totalorder %s17, 0
    %p86 = por %p84, %p85
    %s88 = sadd.s32 %s87, 1
    %p91 = scmp.eq.s32.totalorder %s11, 1
    %p92 = scmp.ne.s32.totalorder %s87, %s89
    %p93 = scmp.eq.s32.totalorder %s11, 0
    %p94 = por %p92, %p93
    %p95 = scmp.ne.s32.totalorder %s87, %s89
    %p96 = scmp.eq.s32.totalorder %s16, 1
    %p97 = por %p95, %p96
    %p98 = scmp.ne.s32.totalorder %s89, %s90
    %p99 = scmp.eq.s32.totalorder %s16, 0
    %p100 = por %p98, %p99
    %p101 = scmp.ne.s32.totalorder %s89, %s90
    %p102 = scmp.eq.s32.totalorder %s17, 1
    %p103 = por %p101, %p102
    %p105 = scmp.ne.s32.totalorder %s90, %s104
    %p106 = scmp.eq.s32.totalorder %s17, 0
    %p107 = por %p105, %p106
    %s109 = sadd.s32 %s108, 1
    %p112 = scmp.eq.s32.totalorder %s11, 1
    %p113 = scmp.ne.s32.totalorder %s108, %s110
    %p114 = scmp.eq.s32.totalorder %s11, 0
    %p115 = por %p113, %p114
    %p116 = scmp.ne.s32.totalorder %s108, %s110
    %p117 = scmp.eq.s32.totalorder %s16, 1
    %p118 = por %p116, %p117
    %p119 = scmp.ne.s32.totalorder %s110, %s111
    %p120 = scmp.eq.s32.totalorder %s16, 0
    %p121 = por %p119, %p120
    %p122 = scmp.ne.s32.totalorder %s110, %s111
    %p123 = scmp.eq.s32.totalorder %s17, 1
    %p124 = por %p122, %p123
    %p126 = scmp.ne.s32.totalorder %s111, %s125
    %p127 = scmp.eq.s32.totalorder %s17, 0
    %p128 = por %p126, %p127
    %s129 = ssub.s32 %s11, %s18
    %p130 = scmp.eq.s32.totalorder %s129, 0
    %s132 = sadd.s32 %s131, 1
    %s133 = scalar_select %p130, %s131, %s132
    %p136 = pneg %p130
    %p137 = scmp.eq.s32.totalorder %s11, 1
    %p138 = por %p136, %p137
    %p139 = scmp.ne.s32.totalorder %s131, %s134
    %p140 = scmp.eq.s32.totalorder %s11, 0
    %p141 = por %p139, %p140
    %p142 = scmp.ne.s32.totalorder %s131, %s134
    %p143 = scmp.eq.s32.totalorder %s16, 1
    %p144 = por %p142, %p143
    %p145 = scmp.ne.s32.totalorder %s134, %s135
    %p146 = scmp.eq.s32.totalorder %s16, 0
    %p147 = por %p145, %p146
    %p148 = scmp.ne.s32.totalorder %s134, %s135
    %p149 = scmp.eq.s32.totalorder %s17, 1
    %p150 = por %p148, %p149
    %p152 = scmp.ne.s32.totalorder %s135, %s151
    %p153 = scmp.eq.s32.totalorder %s17, 0
    %p154 = por %p152, %p153
    %p155 = scmp.le.s32.totalorder 1, %s11
    %p156 = scmp.lt.s32.totalorder %s11, 3
    %p157 = pnand %p155, %p156
    %p158 = pneg %p157
    // Predicated region
    $region9: #{basic_block_forward.1} parent=5 // pred_check
      _
    $region10: #{basic_block_forward.1} parent=5 // pred_check_branch
      %160 = sbr.rel (%p157) target = $region12
    $region11: #{basic_block_forward.1} parent=5 // pred_region
      %s161 = ssub.s32 %s11, 1
      // Predicated region
      $region13: #{basic_block_forward.1} parent=11 // pred_check
        %p162 = pneg %p58
      $region14: #{basic_block_forward.1} parent=11 // pred_check_branch
        %164 = sbr.rel (%p162) target = $region16
      $region15: #{basic_block_forward.1} parent=11 // pred_region
        _
      $region16: #{basic_block_forward.1} parent=11 // pred_fallthru
        _
      // Predicated region
      $region17: #{basic_block_forward.1} parent=11 // pred_check
        %p165 = pneg %p79
      $region18: #{basic_block_forward.1} parent=11 // pred_check_branch
        %167 = sbr.rel (%p165) target = $region20
      $region19: #{basic_block_forward.1} parent=11 // pred_region
        _
      $region20: #{basic_block_forward.1} parent=11 // pred_fallthru
        _
      // Predicated region
      $region21: #{basic_block_forward.1} parent=11 // pred_check
        %p168 = pneg %p100
      $region22: #{basic_block_forward.1} parent=11 // pred_check_branch
        %170 = sbr.rel (%p168) target = $region24
      $region23: #{basic_block_forward.1} parent=11 // pred_region
        _
      $region24: #{basic_block_forward.1} parent=11 // pred_fallthru
        _
      // Predicated region
      $region25: #{basic_block_forward.1} parent=11 // pred_check
        %p171 = pneg %p121
      $region26: #{basic_block_forward.1} parent=11 // pred_check_branch
        %173 = sbr.rel (%p171) target = $region28
      $region27: #{basic_block_forward.1} parent=11 // pred_region
        _
      $region28: #{basic_block_forward.1} parent=11 // pred_fallthru
        _
    $region12: #{basic_block_forward.1} parent=5 // pred_fallthru
      _
    %p174 = scmp.lt.s32.totalorder %s11, 2
    // Predicated region
    $region29: #{basic_block_forward.1} parent=5 // pred_check
      %p175 = pneg %p174
    $region30: #{basic_block_forward.1} parent=5 // pred_check_branch
      %177 = sbr.rel (%p175) target = $region32
    $region31: #{basic_block_forward.1} parent=5 // pred_region
      // Predicated region
      $region33: #{basic_block_forward.1} parent=31 // pred_check
        %p178 = pneg %p31
      $region34: #{basic_block_forward.1} parent=31 // pred_check_branch
        %180 = sbr.rel (%p178) target = $region36
      $region35: #{basic_block_forward.1} parent=31 // pred_region
        %p181 = scmp.lt.s32.totalorder %s11, 1
        %s182 = scalar_select %p181, %s11, 1
        %s183 = smul.addr %s182, 54
        %s184 = smul.addr %s183, 8
        %s185 = scalar_lea.vmem %s0, %s184
      $region36: #{basic_block_forward.1} parent=31 // pred_fallthru
        _
    $region32: #{basic_block_forward.1} parent=5 // pred_fallthru
      _
    %p186 = scmp.le.s32.totalorder 1, %s11
    %p187 = scmp.lt.s32.totalorder %s11, 3
    %p188 = pnand %p186, %p187
    %p189 = pneg %p188
    // Predicated region
    $region37: #{basic_block_forward.1} parent=5 // pred_check
      _
    $region38: #{basic_block_forward.1} parent=5 // pred_check_branch
      %191 = sbr.rel (%p188) target = $region40
    $region39: #{basic_block_forward.1} parent=5 // pred_region
      %s192 = ssub.s32 %s11, 1
      %p193 = scmp.lt.s32.totalorder %s16, 1
      %s194 = scalar_select %p193, %s16, 1
      %s195 = smul.addr %s194, 54
      %s196 = smul.addr %s195, 8
      %s197 = scalar_lea.vmem %s0, %s196
      %p198 = pneg %p37
      %p199 = pneg %p34
      %p200 = pneg %p58
      %p201 = pneg %p55
      %p202 = pneg %p79
      %p203 = pneg %p76
      %p204 = pneg %p100
      %p205 = pneg %p97
      %p206 = pneg %p121
      %p207 = pneg %p118
      %p208 = pneg %p147
      %p209 = pneg %p144
      %p210 = scmp.lt.s32.totalorder %s16, 1
      %s211 = scalar_select %p210, %s16, 1
      %s212 = smul.addr %s211, 32
      %s213 = smul.addr %s212, 8
      %s214 = scalar_lea.vmem %s5, %s213
      %p215 = scmp.lt.s32.totalorder %s16, 1
      %s216 = scalar_select %p215, %s16, 1
      %s217 = smul.addr %s216, 54
      %s218 = smul.addr %s217, 8
      %s219 = scalar_lea.vmem %s0, %s218
      %p220 = scmp.lt.s32.totalorder %s16, 1
      %s221 = scalar_select %p220, %s16, 1
      %s222 = smul.addr %s221, 32
      %s223 = smul.addr %s222, 8
      %s224 = scalar_lea.vmem %s5, %s223
      %v225 = vld [vmem:[%s219] sm:$0xff]
      %v226 = vld [vmem:[%s219 + $0x8] sm:$0xff]
      %v227 = vld [vmem:[%s219 + $0x18] sm:$0xff]
      %v228 = vld [vmem:[%s219 + $0x20] sm:$0xff]
      %v229 = vld [vmem:[%s219 + $0x30] sm:$0xff]
      %v230 = vld [vmem:[%s219 + $0x38] sm:$0xff]
      %v231 = vld [vmem:[%s219 + $0x48] sm:$0xff]
      %v232 = vld [vmem:[%s219 + $0x50] sm:$0xff]
      %v233 = vld [vmem:[%s219 + $0x60] sm:$0xff]
      %v234 = vld [vmem:[%s219 + $0x68] sm:$0xff]
      %v235 = vld [vmem:[%s219 + $0x78] sm:$0xff]
      %v236 = vld [vmem:[%s219 + $0x80] sm:$0xff]
      %v237 = vld [vmem:[%s219 + $0x90] sm:$0xff]
      %v238 = vld [vmem:[%s219 + $0x98] sm:$0xff]
      %v239 = vld [vmem:[%s219 + $0xa8] sm:$0xff]
      %v240 = vld [vmem:[%s219 + $0xb0] sm:$0xff]
      %v241 = vld [vmem:[%s219 + $0xc0] sm:$0xff]
      %v242 = vld [vmem:[%s219 + $0xc8] sm:$0xff]
      %v243 = vld [vmem:[%s219 + $0xd8] sm:$0xff]
      %v244 = vld [vmem:[%s219 + $0xe0] sm:$0xff]
      %v245 = vld [vmem:[%s219 + $0xf0] sm:$0xff]
      %v246 = vld [vmem:[%s219 + $0xf8] sm:$0xff]
      %v247 = vld [vmem:[%s219 + $0x108] sm:$0xff]
      %v248 = vld [vmem:[%s219 + $0x110] sm:$0xff]
      %v249 = vld [vmem:[%s219 + $0x120] sm:$0xff]
      %v250 = vld [vmem:[%s219 + $0x128] sm:$0xff]
      %v251 = vld [vmem:[%s219 + $0x138] sm:$0xff]
      %v252 = vld [vmem:[%s219 + $0x140] sm:$0xff]
      %v253 = vld [vmem:[%s219 + $0x150] sm:$0xff]
      %v254 = vld [vmem:[%s219 + $0x158] sm:$0xff]
      %v255 = vld [vmem:[%s219 + $0x168] sm:$0xff]
      %v256 = vld [vmem:[%s219 + $0x170] sm:$0xff]
      %v257 = vld [vmem:[%s219 + $0x1] sm:$0xff]
      %v258 = vld [vmem:[%s219 + $0x9] sm:$0xff]
      %v259 = vld [vmem:[%s219 + $0x19] sm:$0xff]
      %v260 = vld [vmem:[%s219 + $0x21] sm:$0xff]
      %v261 = vld [vmem:[%s219 + $0x31] sm:$0xff]
      %v262 = vld [vmem:[%s219 + $0x39] sm:$0xff]
      %v263 = vld [vmem:[%s219 + $0x49] sm:$0xff]
      %v264 = vld [vmem:[%s219 + $0x51] sm:$0xff]
      %v265 = vld [vmem:[%s219 + $0x61] sm:$0xff]
      %v266 = vld [vmem:[%s219 + $0x69] sm:$0xff]
      %v267 = vld [vmem:[%s219 + $0x79] sm:$0xff]
      %v268 = vld [vmem:[%s219 + $0x81] sm:$0xff]
      %v269 = vld [vmem:[%s219 + $0x91] sm:$0xff]
      %v270 = vld [vmem:[%s219 + $0x99] sm:$0xff]
      %v271 = vld [vmem:[%s219 + $0xa9] sm:$0xff]
      %v272 = vld [vmem:[%s219 + $0xb1] sm:$0xff]
      %v273 = vld [vmem:[%s219 + $0xc1] sm:$0xff]
      %v274 = vld [vmem:[%s219 + $0xc9] sm:$0xff]
      %v275 = vld [vmem:[%s219 + $0xd9] sm:$0xff]
      %v276 = vld [vmem:[%s219 + $0xe1] sm:$0xff]
      %v277 = vld [vmem:[%s219 + $0xf1] sm:$0xff]
      %v278 = vld [vmem:[%s219 + $0xf9] sm:$0xff]
      %v279 = vld [vmem:[%s219 + $0x109] sm:$0xff]
      %v280 = vld [vmem:[%s219 + $0x111] sm:$0xff]
      %v281 = vld [vmem:[%s219 + $0x121] sm:$0xff]
      %v282 = vld [vmem:[%s219 + $0x129] sm:$0xff]
      %v283 = vld [vmem:[%s219 + $0x139] sm:$0xff]
      %v284 = vld [vmem:[%s219 + $0x141] sm:$0xff]
      %v285 = vld [vmem:[%s219 + $0x151] sm:$0xff]
      %v286 = vld [vmem:[%s219 + $0x159] sm:$0xff]
      %v287 = vld [vmem:[%s219 + $0x169] sm:$0xff]
      %v288 = vld [vmem:[%s219 + $0x171] sm:$0xff]
      %v289 = vld [vmem:[%s219 + $0x2] sm:$0xff]
      %v290 = vld [vmem:[%s219 + $0xa] sm:$0xff]
      %v291 = vld [vmem:[%s219 + $0x1a] sm:$0xff]
      %v292 = vld [vmem:[%s219 + $0x22] sm:$0xff]
      %v293 = vld [vmem:[%s219 + $0x32] sm:$0xff]
      %v294 = vld [vmem:[%s219 + $0x3a] sm:$0xff]
      %v295 = vld [vmem:[%s219 + $0x4a] sm:$0xff]
      %v296 = vld [vmem:[%s219 + $0x52] sm:$0xff]
      %v297 = vld [vmem:[%s219 + $0x62] sm:$0xff]
      %v298 = vld [vmem:[%s219 + $0x6a] sm:$0xff]
      %v299 = vld [vmem:[%s219 + $0x7a] sm:$0xff]
      %v300 = vld [vmem:[%s219 + $0x82] sm:$0xff]
      %v301 = vld [vmem:[%s219 + $0x92] sm:$0xff]
      %v302 = vld [vmem:[%s219 + $0x9a] sm:$0xff]
      %v303 = vld [vmem:[%s219 + $0xaa] sm:$0xff]
      %v304 = vld [vmem:[%s219 + $0xb2] sm:$0xff]
      %v305 = vld [vmem:[%s219 + $0xc2] sm:$0xff]
      %v306 = vld [vmem:[%s219 + $0xca] sm:$0xff]
      %v307 = vld [vmem:[%s219 + $0xda] sm:$0xff]
      %v308 = vld [vmem:[%s219 + $0xe2] sm:$0xff]
      %v309 = vld [vmem:[%s219 + $0xf2] sm:$0xff]
      %v310 = vld [vmem:[%s219 + $0xfa] sm:$0xff]
      %v311 = vld [vmem:[%s219 + $0x10a] sm:$0xff]
      %v312 = vld [vmem:[%s219 + $0x112] sm:$0xff]
      %v313 = vld [vmem:[%s219 + $0x122] sm:$0xff]
      %v314 = vld [vmem:[%s219 + $0x12a] sm:$0xff]
      %v315 = vld [vmem:[%s219 + $0x13a] sm:$0xff]
      %v316 = vld [vmem:[%s219 + $0x142] sm:$0xff]
      %v317 = vld [vmem:[%s219 + $0x152] sm:$0xff]
      %v318 = vld [vmem:[%s219 + $0x15a] sm:$0xff]
      %v319 = vld [vmem:[%s219 + $0x16a] sm:$0xff]
      %v320 = vld [vmem:[%s219 + $0x172] sm:$0xff]
      %s321 = scalar_lea.vmem %s219, 24
      %v322 = vld [vmem:[%s321] sm:$0xff]
      %v323 = vld [vmem:[%s321 + $0x8] sm:$0xff]
      %v324 = vld [vmem:[%s321 + $0x18] sm:$0xff]
      %v325 = vld [vmem:[%s321 + $0x20] sm:$0xff]
      %v326 = vld [vmem:[%s321 + $0x30] sm:$0xff]
      %v327 = vld [vmem:[%s321 + $0x38] sm:$0xff]
      %v328 = vld [vmem:[%s321 + $0x48] sm:$0xff]
      %v329 = vld [vmem:[%s321 + $0x50] sm:$0xff]
      %v330 = vld [vmem:[%s321 + $0x60] sm:$0xff]
      %v331 = vld [vmem:[%s321 + $0x68] sm:$0xff]
      %v332 = vld [vmem:[%s321 + $0x78] sm:$0xff]
      %v333 = vld [vmem:[%s321 + $0x80] sm:$0xff]
      %v334 = vld [vmem:[%s321 + $0x90] sm:$0xff]
      %v335 = vld [vmem:[%s321 + $0x98] sm:$0xff]
      %v336 = vld [vmem:[%s321 + $0xa8] sm:$0xff]
      %v337 = vld [vmem:[%s321 + $0xb0] sm:$0xff]
      %v338 = vld [vmem:[%s321 + $0xc0] sm:$0xff]
      %v339 = vld [vmem:[%s321 + $0xc8] sm:$0xff]
      %v340 = vld [vmem:[%s321 + $0xd8] sm:$0xff]
      %v341 = vld [vmem:[%s321 + $0xe0] sm:$0xff]
      %v342 = vld [vmem:[%s321 + $0xf0] sm:$0xff]
      %v343 = vld [vmem:[%s321 + $0xf8] sm:$0xff]
      %v344 = vld [vmem:[%s321 + $0x108] sm:$0xff]
      %v345 = vld [vmem:[%s321 + $0x110] sm:$0xff]
      %v346 = vld [vmem:[%s321 + $0x120] sm:$0xff]
      %v347 = vld [vmem:[%s321 + $0x128] sm:$0xff]
      %v348 = vld [vmem:[%s321 + $0x138] sm:$0xff]
      %v349 = vld [vmem:[%s321 + $0x140] sm:$0xff]
      %v350 = vld [vmem:[%s321 + $0x150] sm:$0xff]
      %v351 = vld [vmem:[%s321 + $0x158] sm:$0xff]
      %v352 = vld [vmem:[%s321 + $0x168] sm:$0xff]
      %v353 = vld [vmem:[%s321 + $0x170] sm:$0xff]
      %v354 = vld [vmem:[%s321 + $0x1] sm:$0xff]
      %v355 = vld [vmem:[%s321 + $0x9] sm:$0xff]
      %v356 = vld [vmem:[%s321 + $0x19] sm:$0xff]
      %v357 = vld [vmem:[%s321 + $0x21] sm:$0xff]
      %v358 = vld [vmem:[%s321 + $0x31] sm:$0xff]
      %v359 = vld [vmem:[%s321 + $0x39] sm:$0xff]
      %v360 = vld [vmem:[%s321 + $0x49] sm:$0xff]
      %v361 = vld [vmem:[%s321 + $0x51] sm:$0xff]
      %v362 = vld [vmem:[%s321 + $0x61] sm:$0xff]
      %v363 = vld [vmem:[%s321 + $0x69] sm:$0xff]
      %v364 = vld [vmem:[%s321 + $0x79] sm:$0xff]
      %v365 = vld [vmem:[%s321 + $0x81] sm:$0xff]
      %v366 = vld [vmem:[%s321 + $0x91] sm:$0xff]
      %v367 = vld [vmem:[%s321 + $0x99] sm:$0xff]
      %v368 = vld [vmem:[%s321 + $0xa9] sm:$0xff]
      %v369 = vld [vmem:[%s321 + $0xb1] sm:$0xff]
      %v370 = vld [vmem:[%s321 + $0xc1] sm:$0xff]
      %v371 = vld [vmem:[%s321 + $0xc9] sm:$0xff]
      %v372 = vld [vmem:[%s321 + $0xd9] sm:$0xff]
      %v373 = vld [vmem:[%s321 + $0xe1] sm:$0xff]
      %v374 = vld [vmem:[%s321 + $0xf1] sm:$0xff]
      %v375 = vld [vmem:[%s321 + $0xf9] sm:$0xff]
      %v376 = vld [vmem:[%s321 + $0x109] sm:$0xff]
      %v377 = vld [vmem:[%s321 + $0x111] sm:$0xff]
      %v378 = vld [vmem:[%s321 + $0x121] sm:$0xff]
      %v379 = vld [vmem:[%s321 + $0x129] sm:$0xff]
      %v380 = vld [vmem:[%s321 + $0x139] sm:$0xff]
      %v381 = vld [vmem:[%s321 + $0x141] sm:$0xff]
      %v382 = vld [vmem:[%s321 + $0x151] sm:$0xff]
      %v383 = vld [vmem:[%s321 + $0x159] sm:$0xff]
      %v384 = vld [vmem:[%s321 + $0x169] sm:$0xff]
      %v385 = vld [vmem:[%s321 + $0x171] sm:$0xff]
      %v386 = vld [vmem:[%s321 + $0x2] sm:$0xff]
      %v387 = vld [vmem:[%s321 + $0xa] sm:$0xff]
      %v388 = vld [vmem:[%s321 + $0x1a] sm:$0xff]
      %v389 = vld [vmem:[%s321 + $0x22] sm:$0xff]
      %v390 = vld [vmem:[%s321 + $0x32] sm:$0xff]
      %v391 = vld [vmem:[%s321 + $0x3a] sm:$0xff]
      %v392 = vld [vmem:[%s321 + $0x4a] sm:$0xff]
      %v393 = vld [vmem:[%s321 + $0x52] sm:$0xff]
      %v394 = vld [vmem:[%s321 + $0x62] sm:$0xff]
      %v395 = vld [vmem:[%s321 + $0x6a] sm:$0xff]
      %v396 = vld [vmem:[%s321 + $0x7a] sm:$0xff]
      %v397 = vld [vmem:[%s321 + $0x82] sm:$0xff]
      %v398 = vld [vmem:[%s321 + $0x92] sm:$0xff]
      %v399 = vld [vmem:[%s321 + $0x9a] sm:$0xff]
      %v400 = vld [vmem:[%s321 + $0xaa] sm:$0xff]
      %v401 = vld [vmem:[%s321 + $0xb2] sm:$0xff]
      %v402 = vld [vmem:[%s321 + $0xc2] sm:$0xff]
      %v403 = vld [vmem:[%s321 + $0xca] sm:$0xff]
      %v404 = vld [vmem:[%s321 + $0xda] sm:$0xff]
      %v405 = vld [vmem:[%s321 + $0xe2] sm:$0xff]
      %v406 = vld [vmem:[%s321 + $0xf2] sm:$0xff]
      %v407 = vld [vmem:[%s321 + $0xfa] sm:$0xff]
      %v408 = vld [vmem:[%s321 + $0x10a] sm:$0xff]
      %v409 = vld [vmem:[%s321 + $0x112] sm:$0xff]
      %v410 = vld [vmem:[%s321 + $0x122] sm:$0xff]
      %v411 = vld [vmem:[%s321 + $0x12a] sm:$0xff]
      %v412 = vld [vmem:[%s321 + $0x13a] sm:$0xff]
      %v413 = vld [vmem:[%s321 + $0x142] sm:$0xff]
      %v414 = vld [vmem:[%s321 + $0x152] sm:$0xff]
      %v415 = vld [vmem:[%s321 + $0x15a] sm:$0xff]
      %v416 = vld [vmem:[%s321 + $0x16a] sm:$0xff]
      %v417 = vld [vmem:[%s321 + $0x172] sm:$0xff]
      %s418 = scalar_lea.vmem %s219, 48
      %v419 = vld [vmem:[%s418] sm:$0xff]
      %v420 = vld [vmem:[%s418 + $0x8] sm:$0xff]
      %v421 = vld [vmem:[%s418 + $0x18] sm:$0xff]
      %v422 = vld [vmem:[%s418 + $0x20] sm:$0xff]
      %v423 = vld [vmem:[%s418 + $0x30] sm:$0xff]
      %v424 = vld [vmem:[%s418 + $0x38] sm:$0xff]
      %v425 = vld [vmem:[%s418 + $0x48] sm:$0xff]
      %v426 = vld [vmem:[%s418 + $0x50] sm:$0xff]
      %v427 = vld [vmem:[%s418 + $0x60] sm:$0xff]
      %v428 = vld [vmem:[%s418 + $0x68] sm:$0xff]
      %v429 = vld [vmem:[%s418 + $0x78] sm:$0xff]
      %v430 = vld [vmem:[%s418 + $0x80] sm:$0xff]
      %v431 = vld [vmem:[%s418 + $0x90] sm:$0xff]
      %v432 = vld [vmem:[%s418 + $0x98] sm:$0xff]
      %v433 = vld [vmem:[%s418 + $0xa8] sm:$0xff]
      %v434 = vld [vmem:[%s418 + $0xb0] sm:$0xff]
      %v435 = vld [vmem:[%s418 + $0xc0] sm:$0xff]
      %v436 = vld [vmem:[%s418 + $0xc8] sm:$0xff]
      %v437 = vld [vmem:[%s418 + $0xd8] sm:$0xff]
      %v438 = vld [vmem:[%s418 + $0xe0] sm:$0xff]
      %v439 = vld [vmem:[%s418 + $0xf0] sm:$0xff]
      %v440 = vld [vmem:[%s418 + $0xf8] sm:$0xff]
      %v441 = vld [vmem:[%s418 + $0x108] sm:$0xff]
      %v442 = vld [vmem:[%s418 + $0x110] sm:$0xff]
      %v443 = vld [vmem:[%s418 + $0x120] sm:$0xff]
      %v444 = vld [vmem:[%s418 + $0x128] sm:$0xff]
      %v445 = vld [vmem:[%s418 + $0x138] sm:$0xff]
      %v446 = vld [vmem:[%s418 + $0x140] sm:$0xff]
      %v447 = vld [vmem:[%s418 + $0x150] sm:$0xff]
      %v448 = vld [vmem:[%s418 + $0x158] sm:$0xff]
      %v449 = vld [vmem:[%s418 + $0x168] sm:$0xff]
      %v450 = vld [vmem:[%s418 + $0x170] sm:$0xff]
      %v451 = vld [vmem:[%s418 + $0x1] sm:$0xff]
      %v452 = vld [vmem:[%s418 + $0x9] sm:$0xff]
      %v453 = vld [vmem:[%s418 + $0x19] sm:$0xff]
      %v454 = vld [vmem:[%s418 + $0x21] sm:$0xff]
      %v455 = vld [vmem:[%s418 + $0x31] sm:$0xff]
      %v456 = vld [vmem:[%s418 + $0x39] sm:$0xff]
      %v457 = vld [vmem:[%s418 + $0x49] sm:$0xff]
      %v458 = vld [vmem:[%s418 + $0x51] sm:$0xff]
      %v459 = vld [vmem:[%s418 + $0x61] sm:$0xff]
      %v460 = vld [vmem:[%s418 + $0x69] sm:$0xff]
      %v461 = vld [vmem:[%s418 + $0x79] sm:$0xff]
      %v462 = vld [vmem:[%s418 + $0x81] sm:$0xff]
      %v463 = vld [vmem:[%s418 + $0x91] sm:$0xff]
      %v464 = vld [vmem:[%s418 + $0x99] sm:$0xff]
      %v465 = vld [vmem:[%s418 + $0xa9] sm:$0xff]
      %v466 = vld [vmem:[%s418 + $0xb1] sm:$0xff]
      %v467 = vld [vmem:[%s418 + $0xc1] sm:$0xff]
      %v468 = vld [vmem:[%s418 + $0xc9] sm:$0xff]
      %v469 = vld [vmem:[%s418 + $0xd9] sm:$0xff]
      %v470 = vld [vmem:[%s418 + $0xe1] sm:$0xff]
      %v471 = vld [vmem:[%s418 + $0xf1] sm:$0xff]
      %v472 = vld [vmem:[%s418 + $0xf9] sm:$0xff]
      %v473 = vld [vmem:[%s418 + $0x109] sm:$0xff]
      %v474 = vld [vmem:[%s418 + $0x111] sm:$0xff]
      %v475 = vld [vmem:[%s418 + $0x121] sm:$0xff]
      %v476 = vld [vmem:[%s418 + $0x129] sm:$0xff]
      %v477 = vld [vmem:[%s418 + $0x139] sm:$0xff]
      %v478 = vld [vmem:[%s418 + $0x141] sm:$0xff]
      %v479 = vld [vmem:[%s418 + $0x151] sm:$0xff]
      %v480 = vld [vmem:[%s418 + $0x159] sm:$0xff]
      %v481 = vld [vmem:[%s418 + $0x169] sm:$0xff]
      %v482 = vld [vmem:[%s418 + $0x171] sm:$0xff]
      %v483 = vld [vmem:[%s418 + $0x2] sm:$0xff]
      %v484 = vld [vmem:[%s418 + $0xa] sm:$0xff]
      %v485 = vld [vmem:[%s418 + $0x1a] sm:$0xff]
      %v486 = vld [vmem:[%s418 + $0x22] sm:$0xff]
      %v487 = vld [vmem:[%s418 + $0x32] sm:$0xff]
      %v488 = vld [vmem:[%s418 + $0x3a] sm:$0xff]
      %v489 = vld [vmem:[%s418 + $0x4a] sm:$0xff]
      %v490 = vld [vmem:[%s418 + $0x52] sm:$0xff]
      %v491 = vld [vmem:[%s418 + $0x62] sm:$0xff]
      %v492 = vld [vmem:[%s418 + $0x6a] sm:$0xff]
      %v493 = vld [vmem:[%s418 + $0x7a] sm:$0xff]
      %v494 = vld [vmem:[%s418 + $0x82] sm:$0xff]
      %v495 = vld [vmem:[%s418 + $0x92] sm:$0xff]
      %v496 = vld [vmem:[%s418 + $0x9a] sm:$0xff]
      %v497 = vld [vmem:[%s418 + $0xaa] sm:$0xff]
      %v498 = vld [vmem:[%s418 + $0xb2] sm:$0xff]
      %v499 = vld [vmem:[%s418 + $0xc2] sm:$0xff]
      %v500 = vld [vmem:[%s418 + $0xca] sm:$0xff]
      %v501 = vld [vmem:[%s418 + $0xda] sm:$0xff]
      %v502 = vld [vmem:[%s418 + $0xe2] sm:$0xff]
      %v503 = vld [vmem:[%s418 + $0xf2] sm:$0xff]
      %v504 = vld [vmem:[%s418 + $0xfa] sm:$0xff]
      %v505 = vld [vmem:[%s418 + $0x10a] sm:$0xff]
      %v506 = vld [vmem:[%s418 + $0x112] sm:$0xff]
      %v507 = vld [vmem:[%s418 + $0x122] sm:$0xff]
      %v508 = vld [vmem:[%s418 + $0x12a] sm:$0xff]
      %v509 = vld [vmem:[%s418 + $0x13a] sm:$0xff]
      %v510 = vld [vmem:[%s418 + $0x142] sm:$0xff]
      %v511 = vld [vmem:[%s418 + $0x152] sm:$0xff]
      %v512 = vld [vmem:[%s418 + $0x15a] sm:$0xff]
      %v513 = vld [vmem:[%s418 + $0x16a] sm:$0xff]
      %v514 = vld [vmem:[%s418 + $0x172] sm:$0xff]
      %547 = vrot.lane.b32.xlu0 %v257, 8
      %v548 = vpop.permute.xlu0 %547
      %549 = vrot.lane.b32.xlu0 %v258, 8
      %v550 = vpop.permute.xlu0 %549
      %551 = vrot.lane.b32.xlu0 %v259, 8
      %v552 = vpop.permute.xlu0 %551
      %553 = vrot.lane.b32.xlu0 %v260, 8
      %v554 = vpop.permute.xlu0 %553
      %555 = vrot.lane.b32.xlu0 %v261, 8
      %v556 = vpop.permute.xlu0 %555
      %557 = vrot.lane.b32.xlu0 %v262, 8
      %v558 = vpop.permute.xlu0 %557
      %559 = vrot.lane.b32.xlu0 %v263, 8
      %v560 = vpop.permute.xlu0 %559
      %561 = vrot.lane.b32.xlu0 %v264, 8
      %v562 = vpop.permute.xlu0 %561
      %563 = vrot.lane.b32.xlu0 %v265, 8
      %v564 = vpop.permute.xlu0 %563
      %565 = vrot.lane.b32.xlu0 %v266, 8
      %v566 = vpop.permute.xlu0 %565
      %567 = vrot.lane.b32.xlu0 %v267, 8
      %v568 = vpop.permute.xlu0 %567
      %569 = vrot.lane.b32.xlu0 %v268, 8
      %v570 = vpop.permute.xlu0 %569
      %571 = vrot.lane.b32.xlu0 %v269, 8
      %v572 = vpop.permute.xlu0 %571
      %573 = vrot.lane.b32.xlu0 %v270, 8
      %v574 = vpop.permute.xlu0 %573
      %575 = vrot.lane.b32.xlu0 %v271, 8
      %v576 = vpop.permute.xlu0 %575
      %577 = vrot.lane.b32.xlu0 %v272, 8
      %v578 = vpop.permute.xlu0 %577
      %579 = vrot.lane.b32.xlu0 %v273, 8
      %v580 = vpop.permute.xlu0 %579
      %581 = vrot.lane.b32.xlu0 %v274, 8
      %v582 = vpop.permute.xlu0 %581
      %583 = vrot.lane.b32.xlu0 %v275, 8
      %v584 = vpop.permute.xlu0 %583
      %585 = vrot.lane.b32.xlu0 %v276, 8
      %v586 = vpop.permute.xlu0 %585
      %587 = vrot.lane.b32.xlu0 %v277, 8
      %v588 = vpop.permute.xlu0 %587
      %589 = vrot.lane.b32.xlu0 %v278, 8
      %v590 = vpop.permute.xlu0 %589
      %591 = vrot.lane.b32.xlu0 %v279, 8
      %v592 = vpop.permute.xlu0 %591
      %593 = vrot.lane.b32.xlu0 %v280, 8
      %v594 = vpop.permute.xlu0 %593
      %595 = vrot.lane.b32.xlu0 %v281, 8
      %v596 = vpop.permute.xlu0 %595
      %597 = vrot.lane.b32.xlu0 %v282, 8
      %v598 = vpop.permute.xlu0 %597
      %599 = vrot.lane.b32.xlu0 %v283, 8
      %v600 = vpop.permute.xlu0 %599
      %601 = vrot.lane.b32.xlu0 %v284, 8
      %v602 = vpop.permute.xlu0 %601
      %603 = vrot.lane.b32.xlu0 %v285, 8
      %v604 = vpop.permute.xlu0 %603
      %605 = vrot.lane.b32.xlu0 %v286, 8
      %v606 = vpop.permute.xlu0 %605
      %607 = vrot.lane.b32.xlu0 %v287, 8
      %v608 = vpop.permute.xlu0 %607
      %609 = vrot.lane.b32.xlu0 %v288, 8
      %v610 = vpop.permute.xlu0 %609
      %675 = vrot.lane.b32.xlu0 %v289, 16
      %v676 = vpop.permute.xlu0 %675
      %677 = vrot.lane.b32.xlu0 %v290, 16
      %v678 = vpop.permute.xlu0 %677
      %679 = vrot.lane.b32.xlu0 %v291, 16
      %v680 = vpop.permute.xlu0 %679
      %681 = vrot.lane.b32.xlu0 %v292, 16
      %v682 = vpop.permute.xlu0 %681
      %683 = vrot.lane.b32.xlu0 %v293, 16
      %v684 = vpop.permute.xlu0 %683
      %685 = vrot.lane.b32.xlu0 %v294, 16
      %v686 = vpop.permute.xlu0 %685
      %687 = vrot.lane.b32.xlu0 %v295, 16
      %v688 = vpop.permute.xlu0 %687
      %689 = vrot.lane.b32.xlu0 %v296, 16
      %v690 = vpop.permute.xlu0 %689
      %691 = vrot.lane.b32.xlu0 %v297, 16
      %v692 = vpop.permute.xlu0 %691
      %693 = vrot.lane.b32.xlu0 %v298, 16
      %v694 = vpop.permute.xlu0 %693
      %695 = vrot.lane.b32.xlu0 %v299, 16
      %v696 = vpop.permute.xlu0 %695
      %697 = vrot.lane.b32.xlu0 %v300, 16
      %v698 = vpop.permute.xlu0 %697
      %699 = vrot.lane.b32.xlu0 %v301, 16
      %v700 = vpop.permute.xlu0 %699
      %701 = vrot.lane.b32.xlu0 %v302, 16
      %v702 = vpop.permute.xlu0 %701
      %703 = vrot.lane.b32.xlu0 %v303, 16
      %v704 = vpop.permute.xlu0 %703
      %705 = vrot.lane.b32.xlu0 %v304, 16
      %v706 = vpop.permute.xlu0 %705
      %707 = vrot.lane.b32.xlu0 %v305, 16
      %v708 = vpop.permute.xlu0 %707
      %709 = vrot.lane.b32.xlu0 %v306, 16
      %v710 = vpop.permute.xlu0 %709
      %711 = vrot.lane.b32.xlu0 %v307, 16
      %v712 = vpop.permute.xlu0 %711
      %713 = vrot.lane.b32.xlu0 %v308, 16
      %v714 = vpop.permute.xlu0 %713
      %715 = vrot.lane.b32.xlu0 %v309, 16
      %v716 = vpop.permute.xlu0 %715
      %717 = vrot.lane.b32.xlu0 %v310, 16
      %v718 = vpop.permute.xlu0 %717
      %719 = vrot.lane.b32.xlu0 %v311, 16
      %v720 = vpop.permute.xlu0 %719
      %721 = vrot.lane.b32.xlu0 %v312, 16
      %v722 = vpop.permute.xlu0 %721
      %723 = vrot.lane.b32.xlu0 %v313, 16
      %v724 = vpop.permute.xlu0 %723
      %725 = vrot.lane.b32.xlu0 %v314, 16
      %v726 = vpop.permute.xlu0 %725
      %727 = vrot.lane.b32.xlu0 %v315, 16
      %v728 = vpop.permute.xlu0 %727
      %729 = vrot.lane.b32.xlu0 %v316, 16
      %v730 = vpop.permute.xlu0 %729
      %731 = vrot.lane.b32.xlu0 %v317, 16
      %v732 = vpop.permute.xlu0 %731
      %733 = vrot.lane.b32.xlu0 %v318, 16
      %v734 = vpop.permute.xlu0 %733
      %735 = vrot.lane.b32.xlu0 %v319, 16
      %v736 = vpop.permute.xlu0 %735
      %737 = vrot.lane.b32.xlu0 %v320, 16
      %v738 = vpop.permute.xlu0 %737
      %803 = vrot.lane.b32.xlu0 %v322, 24
      %v804 = vpop.permute.xlu0 %803
      %805 = vrot.lane.b32.xlu0 %v323, 24
      %v806 = vpop.permute.xlu0 %805
      %807 = vrot.lane.b32.xlu0 %v324, 24
      %v808 = vpop.permute.xlu0 %807
      %809 = vrot.lane.b32.xlu0 %v325, 24
      %v810 = vpop.permute.xlu0 %809
      %811 = vrot.lane.b32.xlu0 %v326, 24
      %v812 = vpop.permute.xlu0 %811
      %813 = vrot.lane.b32.xlu0 %v327, 24
      %v814 = vpop.permute.xlu0 %813
      %815 = vrot.lane.b32.xlu0 %v328, 24
      %v816 = vpop.permute.xlu0 %815
      %817 = vrot.lane.b32.xlu0 %v329, 24
      %v818 = vpop.permute.xlu0 %817
      %819 = vrot.lane.b32.xlu0 %v330, 24
      %v820 = vpop.permute.xlu0 %819
      %821 = vrot.lane.b32.xlu0 %v331, 24
      %v822 = vpop.permute.xlu0 %821
      %823 = vrot.lane.b32.xlu0 %v332, 24
      %v824 = vpop.permute.xlu0 %823
      %825 = vrot.lane.b32.xlu0 %v333, 24
      %v826 = vpop.permute.xlu0 %825
      %827 = vrot.lane.b32.xlu0 %v334, 24
      %v828 = vpop.permute.xlu0 %827
      %829 = vrot.lane.b32.xlu0 %v335, 24
      %v830 = vpop.permute.xlu0 %829
      %831 = vrot.lane.b32.xlu0 %v336, 24
      %v832 = vpop.permute.xlu0 %831
      %833 = vrot.lane.b32.xlu0 %v337, 24
      %v834 = vpop.permute.xlu0 %833
      %835 = vrot.lane.b32.xlu0 %v338, 24
      %v836 = vpop.permute.xlu0 %835
      %837 = vrot.lane.b32.xlu0 %v339, 24
      %v838 = vpop.permute.xlu0 %837
      %839 = vrot.lane.b32.xlu0 %v340, 24
      %v840 = vpop.permute.xlu0 %839
      %841 = vrot.lane.b32.xlu0 %v341, 24
      %v842 = vpop.permute.xlu0 %841
      %843 = vrot.lane.b32.xlu0 %v342, 24
      %v844 = vpop.permute.xlu0 %843
      %845 = vrot.lane.b32.xlu0 %v343, 24
      %v846 = vpop.permute.xlu0 %845
      %847 = vrot.lane.b32.xlu0 %v344, 24
      %v848 = vpop.permute.xlu0 %847
      %849 = vrot.lane.b32.xlu0 %v345, 24
      %v850 = vpop.permute.xlu0 %849
      %851 = vrot.lane.b32.xlu0 %v346, 24
      %v852 = vpop.permute.xlu0 %851
      %853 = vrot.lane.b32.xlu0 %v347, 24
      %v854 = vpop.permute.xlu0 %853
      %855 = vrot.lane.b32.xlu0 %v348, 24
      %v856 = vpop.permute.xlu0 %855
      %857 = vrot.lane.b32.xlu0 %v349, 24
      %v858 = vpop.permute.xlu0 %857
      %859 = vrot.lane.b32.xlu0 %v350, 24
      %v860 = vpop.permute.xlu0 %859
      %861 = vrot.lane.b32.xlu0 %v351, 24
      %v862 = vpop.permute.xlu0 %861
      %863 = vrot.lane.b32.xlu0 %v352, 24
      %v864 = vpop.permute.xlu0 %863
      %865 = vrot.lane.b32.xlu0 %v353, 24
      %v866 = vpop.permute.xlu0 %865
      %931 = vrot.lane.b32.xlu0 %v354, 32
      %v932 = vpop.permute.xlu0 %931
      %933 = vrot.lane.b32.xlu0 %v355, 32
      %v934 = vpop.permute.xlu0 %933
      %935 = vrot.lane.b32.xlu0 %v356, 32
      %v936 = vpop.permute.xlu0 %935
      %937 = vrot.lane.b32.xlu0 %v357, 32
      %v938 = vpop.permute.xlu0 %937
      %939 = vrot.lane.b32.xlu0 %v358, 32
      %v940 = vpop.permute.xlu0 %939
      %941 = vrot.lane.b32.xlu0 %v359, 32
      %v942 = vpop.permute.xlu0 %941
      %943 = vrot.lane.b32.xlu0 %v360, 32
      %v944 = vpop.permute.xlu0 %943
      %945 = vrot.lane.b32.xlu0 %v361, 32
      %v946 = vpop.permute.xlu0 %945
      %947 = vrot.lane.b32.xlu0 %v362, 32
      %v948 = vpop.permute.xlu0 %947
      %949 = vrot.lane.b32.xlu0 %v363, 32
      %v950 = vpop.permute.xlu0 %949
      %951 = vrot.lane.b32.xlu0 %v364, 32
      %v952 = vpop.permute.xlu0 %951
      %953 = vrot.lane.b32.xlu0 %v365, 32
      %v954 = vpop.permute.xlu0 %953
      %955 = vrot.lane.b32.xlu0 %v366, 32
      %v956 = vpop.permute.xlu0 %955
      %957 = vrot.lane.b32.xlu0 %v367, 32
      %v958 = vpop.permute.xlu0 %957
      %959 = vrot.lane.b32.xlu0 %v368, 32
      %v960 = vpop.permute.xlu0 %959
      %961 = vrot.lane.b32.xlu0 %v369, 32
      %v962 = vpop.permute.xlu0 %961
      %963 = vrot.lane.b32.xlu0 %v370, 32
      %v964 = vpop.permute.xlu0 %963
      %965 = vrot.lane.b32.xlu0 %v371, 32
      %v966 = vpop.permute.xlu0 %965
      %967 = vrot.lane.b32.xlu0 %v372, 32
      %v968 = vpop.permute.xlu0 %967
      %969 = vrot.lane.b32.xlu0 %v373, 32
      %v970 = vpop.permute.xlu0 %969
      %971 = vrot.lane.b32.xlu0 %v374, 32
      %v972 = vpop.permute.xlu0 %971
      %973 = vrot.lane.b32.xlu0 %v375, 32
      %v974 = vpop.permute.xlu0 %973
      %975 = vrot.lane.b32.xlu0 %v376, 32
      %v976 = vpop.permute.xlu0 %975
      %977 = vrot.lane.b32.xlu0 %v377, 32
      %v978 = vpop.permute.xlu0 %977
      %979 = vrot.lane.b32.xlu0 %v378, 32
      %v980 = vpop.permute.xlu0 %979
      %981 = vrot.lane.b32.xlu0 %v379, 32
      %v982 = vpop.permute.xlu0 %981
      %983 = vrot.lane.b32.xlu0 %v380, 32
      %v984 = vpop.permute.xlu0 %983
      %985 = vrot.lane.b32.xlu0 %v381, 32
      %v986 = vpop.permute.xlu0 %985
      %987 = vrot.lane.b32.xlu0 %v382, 32
      %v988 = vpop.permute.xlu0 %987
      %989 = vrot.lane.b32.xlu0 %v383, 32
      %v990 = vpop.permute.xlu0 %989
      %991 = vrot.lane.b32.xlu0 %v384, 32
      %v992 = vpop.permute.xlu0 %991
      %993 = vrot.lane.b32.xlu0 %v385, 32
      %v994 = vpop.permute.xlu0 %993
      %1059 = vrot.lane.b32.xlu0 %v386, 40
      %v1060 = vpop.permute.xlu0 %1059
      %1061 = vrot.lane.b32.xlu0 %v387, 40
      %v1062 = vpop.permute.xlu0 %1061
      %1063 = vrot.lane.b32.xlu0 %v388, 40
      %v1064 = vpop.permute.xlu0 %1063
      %1065 = vrot.lane.b32.xlu0 %v389, 40
      %v1066 = vpop.permute.xlu0 %1065
      %1067 = vrot.lane.b32.xlu0 %v390, 40
      %v1068 = vpop.permute.xlu0 %1067
      %1069 = vrot.lane.b32.xlu0 %v391, 40
      %v1070 = vpop.permute.xlu0 %1069
      %1071 = vrot.lane.b32.xlu0 %v392, 40
      %v1072 = vpop.permute.xlu0 %1071
      %1073 = vrot.lane.b32.xlu0 %v393, 40
      %v1074 = vpop.permute.xlu0 %1073
      %1075 = vrot.lane.b32.xlu0 %v394, 40
      %v1076 = vpop.permute.xlu0 %1075
      %1077 = vrot.lane.b32.xlu0 %v395, 40
      %v1078 = vpop.permute.xlu0 %1077
      %1079 = vrot.lane.b32.xlu0 %v396, 40
      %v1080 = vpop.permute.xlu0 %1079
      %1081 = vrot.lane.b32.xlu0 %v397, 40
      %v1082 = vpop.permute.xlu0 %1081
      %1083 = vrot.lane.b32.xlu0 %v398, 40
      %v1084 = vpop.permute.xlu0 %1083
      %1085 = vrot.lane.b32.xlu0 %v399, 40
      %v1086 = vpop.permute.xlu0 %1085
      %1087 = vrot.lane.b32.xlu0 %v400, 40
      %v1088 = vpop.permute.xlu0 %1087
      %1089 = vrot.lane.b32.xlu0 %v401, 40
      %v1090 = vpop.permute.xlu0 %1089
      %1091 = vrot.lane.b32.xlu0 %v402, 40
      %v1092 = vpop.permute.xlu0 %1091
      %1093 = vrot.lane.b32.xlu0 %v403, 40
      %v1094 = vpop.permute.xlu0 %1093
      %1095 = vrot.lane.b32.xlu0 %v404, 40
      %v1096 = vpop.permute.xlu0 %1095
      %1097 = vrot.lane.b32.xlu0 %v405, 40
      %v1098 = vpop.permute.xlu0 %1097
      %1099 = vrot.lane.b32.xlu0 %v406, 40
      %v1100 = vpop.permute.xlu0 %1099
      %1101 = vrot.lane.b32.xlu0 %v407, 40
      %v1102 = vpop.permute.xlu0 %1101
      %1103 = vrot.lane.b32.xlu0 %v408, 40
      %v1104 = vpop.permute.xlu0 %1103
      %1105 = vrot.lane.b32.xlu0 %v409, 40
      %v1106 = vpop.permute.xlu0 %1105
      %1107 = vrot.lane.b32.xlu0 %v410, 40
      %v1108 = vpop.permute.xlu0 %1107
      %1109 = vrot.lane.b32.xlu0 %v411, 40
      %v1110 = vpop.permute.xlu0 %1109
      %1111 = vrot.lane.b32.xlu0 %v412, 40
      %v1112 = vpop.permute.xlu0 %1111
      %1113 = vrot.lane.b32.xlu0 %v413, 40
      %v1114 = vpop.permute.xlu0 %1113
      %1115 = vrot.lane.b32.xlu0 %v414, 40
      %v1116 = vpop.permute.xlu0 %1115
      %1117 = vrot.lane.b32.xlu0 %v415, 40
      %v1118 = vpop.permute.xlu0 %1117
      %1119 = vrot.lane.b32.xlu0 %v416, 40
      %v1120 = vpop.permute.xlu0 %1119
      %1121 = vrot.lane.b32.xlu0 %v417, 40
      %v1122 = vpop.permute.xlu0 %1121
      %1187 = vrot.lane.b32.xlu0 %v419, 48
      %v1188 = vpop.permute.xlu0 %1187
      %1189 = vrot.lane.b32.xlu0 %v420, 48
      %v1190 = vpop.permute.xlu0 %1189
      %1191 = vrot.lane.b32.xlu0 %v421, 48
      %v1192 = vpop.permute.xlu0 %1191
      %1193 = vrot.lane.b32.xlu0 %v422, 48
      %v1194 = vpop.permute.xlu0 %1193
      %1195 = vrot.lane.b32.xlu0 %v423, 48
      %v1196 = vpop.permute.xlu0 %1195
      %1197 = vrot.lane.b32.xlu0 %v424, 48
      %v1198 = vpop.permute.xlu0 %1197
      %1199 = vrot.lane.b32.xlu0 %v425, 48
      %v1200 = vpop.permute.xlu0 %1199
      %1201 = vrot.lane.b32.xlu0 %v426, 48
      %v1202 = vpop.permute.xlu0 %1201
      %1203 = vrot.lane.b32.xlu0 %v427, 48
      %v1204 = vpop.permute.xlu0 %1203
      %1205 = vrot.lane.b32.xlu0 %v428, 48
      %v1206 = vpop.permute.xlu0 %1205
      %1207 = vrot.lane.b32.xlu0 %v429, 48
      %v1208 = vpop.permute.xlu0 %1207
      %1209 = vrot.lane.b32.xlu0 %v430, 48
      %v1210 = vpop.permute.xlu0 %1209
      %1211 = vrot.lane.b32.xlu0 %v431, 48
      %v1212 = vpop.permute.xlu0 %1211
      %1213 = vrot.lane.b32.xlu0 %v432, 48
      %v1214 = vpop.permute.xlu0 %1213
      %1215 = vrot.lane.b32.xlu0 %v433, 48
      %v1216 = vpop.permute.xlu0 %1215
      %1217 = vrot.lane.b32.xlu0 %v434, 48
      %v1218 = vpop.permute.xlu0 %1217
      %1219 = vrot.lane.b32.xlu0 %v435, 48
      %v1220 = vpop.permute.xlu0 %1219
      %1221 = vrot.lane.b32.xlu0 %v436, 48
      %v1222 = vpop.permute.xlu0 %1221
      %1223 = vrot.lane.b32.xlu0 %v437, 48
      %v1224 = vpop.permute.xlu0 %1223
      %1225 = vrot.lane.b32.xlu0 %v438, 48
      %v1226 = vpop.permute.xlu0 %1225
      %1227 = vrot.lane.b32.xlu0 %v439, 48
      %v1228 = vpop.permute.xlu0 %1227
      %1229 = vrot.lane.b32.xlu0 %v440, 48
      %v1230 = vpop.permute.xlu0 %1229
      %1231 = vrot.lane.b32.xlu0 %v441, 48
      %v1232 = vpop.permute.xlu0 %1231
      %1233 = vrot.lane.b32.xlu0 %v442, 48
      %v1234 = vpop.permute.xlu0 %1233
      %1235 = vrot.lane.b32.xlu0 %v443, 48
      %v1236 = vpop.permute.xlu0 %1235
      %1237 = vrot.lane.b32.xlu0 %v444, 48
      %v1238 = vpop.permute.xlu0 %1237
      %1239 = vrot.lane.b32.xlu0 %v445, 48
      %v1240 = vpop.permute.xlu0 %1239
      %1241 = vrot.lane.b32.xlu0 %v446, 48
      %v1242 = vpop.permute.xlu0 %1241
      %1243 = vrot.lane.b32.xlu0 %v447, 48
      %v1244 = vpop.permute.xlu0 %1243
      %1245 = vrot.lane.b32.xlu0 %v448, 48
      %v1246 = vpop.permute.xlu0 %1245
      %1247 = vrot.lane.b32.xlu0 %v449, 48
      %v1248 = vpop.permute.xlu0 %1247
      %1249 = vrot.lane.b32.xlu0 %v450, 48
      %v1250 = vpop.permute.xlu0 %1249
      %1315 = vrot.lane.b32.xlu0 %v451, 56
      %v1316 = vpop.permute.xlu0 %1315
      %1317 = vrot.lane.b32.xlu0 %v452, 56
      %v1318 = vpop.permute.xlu0 %1317
      %1319 = vrot.lane.b32.xlu0 %v453, 56
      %v1320 = vpop.permute.xlu0 %1319
      %1321 = vrot.lane.b32.xlu0 %v454, 56
      %v1322 = vpop.permute.xlu0 %1321
      %1323 = vrot.lane.b32.xlu0 %v455, 56
      %v1324 = vpop.permute.xlu0 %1323
      %1325 = vrot.lane.b32.xlu0 %v456, 56
      %v1326 = vpop.permute.xlu0 %1325
      %1327 = vrot.lane.b32.xlu0 %v457, 56
      %v1328 = vpop.permute.xlu0 %1327
      %1329 = vrot.lane.b32.xlu0 %v458, 56
      %v1330 = vpop.permute.xlu0 %1329
      %1331 = vrot.lane.b32.xlu0 %v459, 56
      %v1332 = vpop.permute.xlu0 %1331
      %1333 = vrot.lane.b32.xlu0 %v460, 56
      %v1334 = vpop.permute.xlu0 %1333
      %1335 = vrot.lane.b32.xlu0 %v461, 56
      %v1336 = vpop.permute.xlu0 %1335
      %1337 = vrot.lane.b32.xlu0 %v462, 56
      %v1338 = vpop.permute.xlu0 %1337
      %1339 = vrot.lane.b32.xlu0 %v463, 56
      %v1340 = vpop.permute.xlu0 %1339
      %1341 = vrot.lane.b32.xlu0 %v464, 56
      %v1342 = vpop.permute.xlu0 %1341
      %1343 = vrot.lane.b32.xlu0 %v465, 56
      %v1344 = vpop.permute.xlu0 %1343
      %1345 = vrot.lane.b32.xlu0 %v466, 56
      %v1346 = vpop.permute.xlu0 %1345
      %1347 = vrot.lane.b32.xlu0 %v467, 56
      %v1348 = vpop.permute.xlu0 %1347
      %1349 = vrot.lane.b32.xlu0 %v468, 56
      %v1350 = vpop.permute.xlu0 %1349
      %1351 = vrot.lane.b32.xlu0 %v469, 56
      %v1352 = vpop.permute.xlu0 %1351
      %1353 = vrot.lane.b32.xlu0 %v470, 56
      %v1354 = vpop.permute.xlu0 %1353
      %1355 = vrot.lane.b32.xlu0 %v471, 56
      %v1356 = vpop.permute.xlu0 %1355
      %1357 = vrot.lane.b32.xlu0 %v472, 56
      %v1358 = vpop.permute.xlu0 %1357
      %1359 = vrot.lane.b32.xlu0 %v473, 56
      %v1360 = vpop.permute.xlu0 %1359
      %1361 = vrot.lane.b32.xlu0 %v474, 56
      %v1362 = vpop.permute.xlu0 %1361
      %1363 = vrot.lane.b32.xlu0 %v475, 56
      %v1364 = vpop.permute.xlu0 %1363
      %1365 = vrot.lane.b32.xlu0 %v476, 56
      %v1366 = vpop.permute.xlu0 %1365
      %1367 = vrot.lane.b32.xlu0 %v477, 56
      %v1368 = vpop.permute.xlu0 %1367
      %1369 = vrot.lane.b32.xlu0 %v478, 56
      %v1370 = vpop.permute.xlu0 %1369
      %1371 = vrot.lane.b32.xlu0 %v479, 56
      %v1372 = vpop.permute.xlu0 %1371
      %1373 = vrot.lane.b32.xlu0 %v480, 56
      %v1374 = vpop.permute.xlu0 %1373
      %1375 = vrot.lane.b32.xlu0 %v481, 56
      %v1376 = vpop.permute.xlu0 %1375
      %1377 = vrot.lane.b32.xlu0 %v482, 56
      %v1378 = vpop.permute.xlu0 %1377
      %1443 = vrot.lane.b32.xlu0 %v483, 64
      %v1444 = vpop.permute.xlu0 %1443
      %1445 = vrot.lane.b32.xlu0 %v484, 64
      %v1446 = vpop.permute.xlu0 %1445
      %1447 = vrot.lane.b32.xlu0 %v485, 64
      %v1448 = vpop.permute.xlu0 %1447
      %1449 = vrot.lane.b32.xlu0 %v486, 64
      %v1450 = vpop.permute.xlu0 %1449
      %1451 = vrot.lane.b32.xlu0 %v487, 64
      %v1452 = vpop.permute.xlu0 %1451
      %1453 = vrot.lane.b32.xlu0 %v488, 64
      %v1454 = vpop.permute.xlu0 %1453
      %1455 = vrot.lane.b32.xlu0 %v489, 64
      %v1456 = vpop.permute.xlu0 %1455
      %1457 = vrot.lane.b32.xlu0 %v490, 64
      %v1458 = vpop.permute.xlu0 %1457
      %1459 = vrot.lane.b32.xlu0 %v491, 64
      %v1460 = vpop.permute.xlu0 %1459
      %1461 = vrot.lane.b32.xlu0 %v492, 64
      %v1462 = vpop.permute.xlu0 %1461
      %1463 = vrot.lane.b32.xlu0 %v493, 64
      %v1464 = vpop.permute.xlu0 %1463
      %1465 = vrot.lane.b32.xlu0 %v494, 64
      %v1466 = vpop.permute.xlu0 %1465
      %1467 = vrot.lane.b32.xlu0 %v495, 64
      %v1468 = vpop.permute.xlu0 %1467
      %1469 = vrot.lane.b32.xlu0 %v496, 64
      %v1470 = vpop.permute.xlu0 %1469
      %1471 = vrot.lane.b32.xlu0 %v497, 64
      %v1472 = vpop.permute.xlu0 %1471
      %1473 = vrot.lane.b32.xlu0 %v498, 64
      %v1474 = vpop.permute.xlu0 %1473
      %1475 = vrot.lane.b32.xlu0 %v499, 64
      %v1476 = vpop.permute.xlu0 %1475
      %1477 = vrot.lane.b32.xlu0 %v500, 64
      %v1478 = vpop.permute.xlu0 %1477
      %1479 = vrot.lane.b32.xlu0 %v501, 64
      %v1480 = vpop.permute.xlu0 %1479
      %1481 = vrot.lane.b32.xlu0 %v502, 64
      %v1482 = vpop.permute.xlu0 %1481
      %1483 = vrot.lane.b32.xlu0 %v503, 64
      %v1484 = vpop.permute.xlu0 %1483
      %1485 = vrot.lane.b32.xlu0 %v504, 64
      %v1486 = vpop.permute.xlu0 %1485
      %1487 = vrot.lane.b32.xlu0 %v505, 64
      %v1488 = vpop.permute.xlu0 %1487
      %1489 = vrot.lane.b32.xlu0 %v506, 64
      %v1490 = vpop.permute.xlu0 %1489
      %1491 = vrot.lane.b32.xlu0 %v507, 64
      %v1492 = vpop.permute.xlu0 %1491
      %1493 = vrot.lane.b32.xlu0 %v508, 64
      %v1494 = vpop.permute.xlu0 %1493
      %1495 = vrot.lane.b32.xlu0 %v509, 64
      %v1496 = vpop.permute.xlu0 %1495
      %1497 = vrot.lane.b32.xlu0 %v510, 64
      %v1498 = vpop.permute.xlu0 %1497
      %1499 = vrot.lane.b32.xlu0 %v511, 64
      %v1500 = vpop.permute.xlu0 %1499
      %1501 = vrot.lane.b32.xlu0 %v512, 64
      %v1502 = vpop.permute.xlu0 %1501
      %1503 = vrot.lane.b32.xlu0 %v513, 64
      %v1504 = vpop.permute.xlu0 %1503
      %1505 = vrot.lane.b32.xlu0 %v514, 64
      %v1506 = vpop.permute.xlu0 %1505
      %vm1539 = vcmask 64512
      %v1540 = vsel %vm1539, %v225, %v548
      %v1541 = vsel %vm1539, %v226, %v550
      %v1542 = vsel %vm1539, %v227, %v552
      %v1543 = vsel %vm1539, %v228, %v554
      %v1544 = vsel %vm1539, %v229, %v556
      %v1545 = vsel %vm1539, %v230, %v558
      %v1546 = vsel %vm1539, %v231, %v560
      %v1547 = vsel %vm1539, %v232, %v562
      %v1548 = vsel %vm1539, %v233, %v564
      %v1549 = vsel %vm1539, %v234, %v566
      %v1550 = vsel %vm1539, %v235, %v568
      %v1551 = vsel %vm1539, %v236, %v570
      %v1552 = vsel %vm1539, %v237, %v572
      %v1553 = vsel %vm1539, %v238, %v574
      %v1554 = vsel %vm1539, %v239, %v576
      %v1555 = vsel %vm1539, %v240, %v578
      %v1556 = vsel %vm1539, %v241, %v580
      %v1557 = vsel %vm1539, %v242, %v582
      %v1558 = vsel %vm1539, %v243, %v584
      %v1559 = vsel %vm1539, %v244, %v586
      %v1560 = vsel %vm1539, %v245, %v588
      %v1561 = vsel %vm1539, %v246, %v590
      %v1562 = vsel %vm1539, %v247, %v592
      %v1563 = vsel %vm1539, %v248, %v594
      %v1564 = vsel %vm1539, %v249, %v596
      %v1565 = vsel %vm1539, %v250, %v598
      %v1566 = vsel %vm1539, %v251, %v600
      %v1567 = vsel %vm1539, %v252, %v602
      %v1568 = vsel %vm1539, %v253, %v604
      %v1569 = vsel %vm1539, %v254, %v606
      %v1570 = vsel %vm1539, %v255, %v608
      %v1571 = vsel %vm1539, %v256, %v610
      %vm1572 = vcmask 130048
      %v1573 = vsel %vm1572, %v1540, %v676
      %v1574 = vsel %vm1572, %v1541, %v678
      %v1575 = vsel %vm1572, %v1542, %v680
      %v1576 = vsel %vm1572, %v1543, %v682
      %v1577 = vsel %vm1572, %v1544, %v684
      %v1578 = vsel %vm1572, %v1545, %v686
      %v1579 = vsel %vm1572, %v1546, %v688
      %v1580 = vsel %vm1572, %v1547, %v690
      %v1581 = vsel %vm1572, %v1548, %v692
      %v1582 = vsel %vm1572, %v1549, %v694
      %v1583 = vsel %vm1572, %v1550, %v696
      %v1584 = vsel %vm1572, %v1551, %v698
      %v1585 = vsel %vm1572, %v1552, %v700
      %v1586 = vsel %vm1572, %v1553, %v702
      %v1587 = vsel %vm1572, %v1554, %v704
      %v1588 = vsel %vm1572, %v1555, %v706
      %v1589 = vsel %vm1572, %v1556, %v708
      %v1590 = vsel %vm1572, %v1557, %v710
      %v1591 = vsel %vm1572, %v1558, %v712
      %v1592 = vsel %vm1572, %v1559, %v714
      %v1593 = vsel %vm1572, %v1560, %v716
      %v1594 = vsel %vm1572, %v1561, %v718
      %v1595 = vsel %vm1572, %v1562, %v720
      %v1596 = vsel %vm1572, %v1563, %v722
      %v1597 = vsel %vm1572, %v1564, %v724
      %v1598 = vsel %vm1572, %v1565, %v726
      %v1599 = vsel %vm1572, %v1566, %v728
      %v1600 = vsel %vm1572, %v1567, %v730
      %v1601 = vsel %vm1572, %v1568, %v732
      %v1602 = vsel %vm1572, %v1569, %v734
      %v1603 = vsel %vm1572, %v1570, %v736
      %v1604 = vsel %vm1572, %v1571, %v738
      %vm1605 = vcmask 195584
      %v1606 = vsel %vm1605, %v1573, %v804
      %v1607 = vsel %vm1605, %v1574, %v806
      %v1608 = vsel %vm1605, %v1575, %v808
      %v1609 = vsel %vm1605, %v1576, %v810
      %v1610 = vsel %vm1605, %v1577, %v812
      %v1611 = vsel %vm1605, %v1578, %v814
      %v1612 = vsel %vm1605, %v1579, %v816
      %v1613 = vsel %vm1605, %v1580, %v818
      %v1614 = vsel %vm1605, %v1581, %v820
      %v1615 = vsel %vm1605, %v1582, %v822
      %v1616 = vsel %vm1605, %v1583, %v824
      %v1617 = vsel %vm1605, %v1584, %v826
      %v1618 = vsel %vm1605, %v1585, %v828
      %v1619 = vsel %vm1605, %v1586, %v830
      %v1620 = vsel %vm1605, %v1587, %v832
      %v1621 = vsel %vm1605, %v1588, %v834
      %v1622 = vsel %vm1605, %v1589, %v836
      %v1623 = vsel %vm1605, %v1590, %v838
      %v1624 = vsel %vm1605, %v1591, %v840
      %v1625 = vsel %vm1605, %v1592, %v842
      %v1626 = vsel %vm1605, %v1593, %v844
      %v1627 = vsel %vm1605, %v1594, %v846
      %v1628 = vsel %vm1605, %v1595, %v848
      %v1629 = vsel %vm1605, %v1596, %v850
      %v1630 = vsel %vm1605, %v1597, %v852
      %v1631 = vsel %vm1605, %v1598, %v854
      %v1632 = vsel %vm1605, %v1599, %v856
      %v1633 = vsel %vm1605, %v1600, %v858
      %v1634 = vsel %vm1605, %v1601, %v860
      %v1635 = vsel %vm1605, %v1602, %v862
      %v1636 = vsel %vm1605, %v1603, %v864
      %v1637 = vsel %vm1605, %v1604, %v866
      %vm1638 = vcmask 261120
      %v1639 = vsel %vm1638, %v1606, %v932
      %v1640 = vsel %vm1638, %v1607, %v934
      %v1641 = vsel %vm1638, %v1608, %v936
      %v1642 = vsel %vm1638, %v1609, %v938
      %v1643 = vsel %vm1638, %v1610, %v940
      %v1644 = vsel %vm1638, %v1611, %v942
      %v1645 = vsel %vm1638, %v1612, %v944
      %v1646 = vsel %vm1638, %v1613, %v946
      %v1647 = vsel %vm1638, %v1614, %v948
      %v1648 = vsel %vm1638, %v1615, %v950
      %v1649 = vsel %vm1638, %v1616, %v952
      %v1650 = vsel %vm1638, %v1617, %v954
      %v1651 = vsel %vm1638, %v1618, %v956
      %v1652 = vsel %vm1638, %v1619, %v958
      %v1653 = vsel %vm1638, %v1620, %v960
      %v1654 = vsel %vm1638, %v1621, %v962
      %v1655 = vsel %vm1638, %v1622, %v964
      %v1656 = vsel %vm1638, %v1623, %v966
      %v1657 = vsel %vm1638, %v1624, %v968
      %v1658 = vsel %vm1638, %v1625, %v970
      %v1659 = vsel %vm1638, %v1626, %v972
      %v1660 = vsel %vm1638, %v1627, %v974
      %v1661 = vsel %vm1638, %v1628, %v976
      %v1662 = vsel %vm1638, %v1629, %v978
      %v1663 = vsel %vm1638, %v1630, %v980
      %v1664 = vsel %vm1638, %v1631, %v982
      %v1665 = vsel %vm1638, %v1632, %v984
      %v1666 = vsel %vm1638, %v1633, %v986
      %v1667 = vsel %vm1638, %v1634, %v988
      %v1668 = vsel %vm1638, %v1635, %v990
      %v1669 = vsel %vm1638, %v1636, %v992
      %v1670 = vsel %vm1638, %v1637, %v994
      %vm1671 = vcmask 326656
      %v1672 = vsel %vm1671, %v1639, %v1060
      %v1673 = vsel %vm1671, %v1640, %v1062
      %v1674 = vsel %vm1671, %v1641, %v1064
      %v1675 = vsel %vm1671, %v1642, %v1066
      %v1676 = vsel %vm1671, %v1643, %v1068
      %v1677 = vsel %vm1671, %v1644, %v1070
      %v1678 = vsel %vm1671, %v1645, %v1072
      %v1679 = vsel %vm1671, %v1646, %v1074
      %v1680 = vsel %vm1671, %v1647, %v1076
      %v1681 = vsel %vm1671, %v1648, %v1078
      %v1682 = vsel %vm1671, %v1649, %v1080
      %v1683 = vsel %vm1671, %v1650, %v1082
      %v1684 = vsel %vm1671, %v1651, %v1084
      %v1685 = vsel %vm1671, %v1652, %v1086
      %v1686 = vsel %vm1671, %v1653, %v1088
      %v1687 = vsel %vm1671, %v1654, %v1090
      %v1688 = vsel %vm1671, %v1655, %v1092
      %v1689 = vsel %vm1671, %v1656, %v1094
      %v1690 = vsel %vm1671, %v1657, %v1096
      %v1691 = vsel %vm1671, %v1658, %v1098
      %v1692 = vsel %vm1671, %v1659, %v1100
      %v1693 = vsel %vm1671, %v1660, %v1102
      %v1694 = vsel %vm1671, %v1661, %v1104
      %v1695 = vsel %vm1671, %v1662, %v1106
      %v1696 = vsel %vm1671, %v1663, %v1108
      %v1697 = vsel %vm1671, %v1664, %v1110
      %v1698 = vsel %vm1671, %v1665, %v1112
      %v1699 = vsel %vm1671, %v1666, %v1114
      %v1700 = vsel %vm1671, %v1667, %v1116
      %v1701 = vsel %vm1671, %v1668, %v1118
      %v1702 = vsel %vm1671, %v1669, %v1120
      %v1703 = vsel %vm1671, %v1670, %v1122
      %vm1704 = vcmask 392192
      %v1705 = vsel %vm1704, %v1672, %v1188
      %v1706 = vsel %vm1704, %v1673, %v1190
      %v1707 = vsel %vm1704, %v1674, %v1192
      %v1708 = vsel %vm1704, %v1675, %v1194
      %v1709 = vsel %vm1704, %v1676, %v1196
      %v1710 = vsel %vm1704, %v1677, %v1198
      %v1711 = vsel %vm1704, %v1678, %v1200
      %v1712 = vsel %vm1704, %v1679, %v1202
      %v1713 = vsel %vm1704, %v1680, %v1204
      %v1714 = vsel %vm1704, %v1681, %v1206
      %v1715 = vsel %vm1704, %v1682, %v1208
      %v1716 = vsel %vm1704, %v1683, %v1210
      %v1717 = vsel %vm1704, %v1684, %v1212
      %v1718 = vsel %vm1704, %v1685, %v1214
      %v1719 = vsel %vm1704, %v1686, %v1216
      %v1720 = vsel %vm1704, %v1687, %v1218
      %v1721 = vsel %vm1704, %v1688, %v1220
      %v1722 = vsel %vm1704, %v1689, %v1222
      %v1723 = vsel %vm1704, %v1690, %v1224
      %v1724 = vsel %vm1704, %v1691, %v1226
      %v1725 = vsel %vm1704, %v1692, %v1228
      %v1726 = vsel %vm1704, %v1693, %v1230
      %v1727 = vsel %vm1704, %v1694, %v1232
      %v1728 = vsel %vm1704, %v1695, %v1234
      %v1729 = vsel %vm1704, %v1696, %v1236
      %v1730 = vsel %vm1704, %v1697, %v1238
      %v1731 = vsel %vm1704, %v1698, %v1240
      %v1732 = vsel %vm1704, %v1699, %v1242
      %v1733 = vsel %vm1704, %v1700, %v1244
      %v1734 = vsel %vm1704, %v1701, %v1246
      %v1735 = vsel %vm1704, %v1702, %v1248
      %v1736 = vsel %vm1704, %v1703, %v1250
      %vm1737 = vcmask 457728
      %v1738 = vsel %vm1737, %v1705, %v1316
      %v1739 = vsel %vm1737, %v1706, %v1318
      %v1740 = vsel %vm1737, %v1707, %v1320
      %v1741 = vsel %vm1737, %v1708, %v1322
      %v1742 = vsel %vm1737, %v1709, %v1324
      %v1743 = vsel %vm1737, %v1710, %v1326
      %v1744 = vsel %vm1737, %v1711, %v1328
      %v1745 = vsel %vm1737, %v1712, %v1330
      %v1746 = vsel %vm1737, %v1713, %v1332
      %v1747 = vsel %vm1737, %v1714, %v1334
      %v1748 = vsel %vm1737, %v1715, %v1336
      %v1749 = vsel %vm1737, %v1716, %v1338
      %v1750 = vsel %vm1737, %v1717, %v1340
      %v1751 = vsel %vm1737, %v1718, %v1342
      %v1752 = vsel %vm1737, %v1719, %v1344
      %v1753 = vsel %vm1737, %v1720, %v1346
      %v1754 = vsel %vm1737, %v1721, %v1348
      %v1755 = vsel %vm1737, %v1722, %v1350
      %v1756 = vsel %vm1737, %v1723, %v1352
      %v1757 = vsel %vm1737, %v1724, %v1354
      %v1758 = vsel %vm1737, %v1725, %v1356
      %v1759 = vsel %vm1737, %v1726, %v1358
      %v1760 = vsel %vm1737, %v1727, %v1360
      %v1761 = vsel %vm1737, %v1728, %v1362
      %v1762 = vsel %vm1737, %v1729, %v1364
      %v1763 = vsel %vm1737, %v1730, %v1366
      %v1764 = vsel %vm1737, %v1731, %v1368
      %v1765 = vsel %vm1737, %v1732, %v1370
      %v1766 = vsel %vm1737, %v1733, %v1372
      %v1767 = vsel %vm1737, %v1734, %v1374
      %v1768 = vsel %vm1737, %v1735, %v1376
      %v1769 = vsel %vm1737, %v1736, %v1378
      %vm1770 = vcmask 523264
      %v1771 = vsel %vm1770, %v1738, %v1444
      %v1772 = vsel %vm1770, %v1739, %v1446
      %v1773 = vsel %vm1770, %v1740, %v1448
      %v1774 = vsel %vm1770, %v1741, %v1450
      %v1775 = vsel %vm1770, %v1742, %v1452
      %v1776 = vsel %vm1770, %v1743, %v1454
      %v1777 = vsel %vm1770, %v1744, %v1456
      %v1778 = vsel %vm1770, %v1745, %v1458
      %v1779 = vsel %vm1770, %v1746, %v1460
      %v1780 = vsel %vm1770, %v1747, %v1462
      %v1781 = vsel %vm1770, %v1748, %v1464
      %v1782 = vsel %vm1770, %v1749, %v1466
      %v1783 = vsel %vm1770, %v1750, %v1468
      %v1784 = vsel %vm1770, %v1751, %v1470
      %v1785 = vsel %vm1770, %v1752, %v1472
      %v1786 = vsel %vm1770, %v1753, %v1474
      %v1787 = vsel %vm1770, %v1754, %v1476
      %v1788 = vsel %vm1770, %v1755, %v1478
      %v1789 = vsel %vm1770, %v1756, %v1480
      %v1790 = vsel %vm1770, %v1757, %v1482
      %v1791 = vsel %vm1770, %v1758, %v1484
      %v1792 = vsel %vm1770, %v1759, %v1486
      %v1793 = vsel %vm1770, %v1760, %v1488
      %v1794 = vsel %vm1770, %v1761, %v1490
      %v1795 = vsel %vm1770, %v1762, %v1492
      %v1796 = vsel %vm1770, %v1763, %v1494
      %v1797 = vsel %vm1770, %v1764, %v1496
      %v1798 = vsel %vm1770, %v1765, %v1498
      %v1799 = vsel %vm1770, %v1766, %v1500
      %v1800 = vsel %vm1770, %v1767, %v1502
      %v1801 = vsel %vm1770, %v1768, %v1504
      %v1802 = vsel %vm1770, %v1769, %v1506
      %v1803 = vld [vmem:[%s1] sm:$0xff]
      %v1804 = vld [vmem:[%s1 + $0x8] sm:$0xff]
      %v1805 = vld [vmem:[%s1 + $0x10] sm:$0xff]
      %v1806 = vld [vmem:[%s1 + $0x18] sm:$0xff]
      %v1807 = vld [vmem:[%s1 + $0x20] sm:$0xff]
      %v1808 = vld [vmem:[%s1 + $0x28] sm:$0xff]
      %v1809 = vld [vmem:[%s1 + $0x30] sm:$0xff]
      %v1810 = vld [vmem:[%s1 + $0x38] sm:$0xff]
      %v1811 = vld [vmem:[%s1 + $0x40] sm:$0xff]
      %v1812 = vld [vmem:[%s2] sm:$0x1]
      %v1814 = vlaneseq
      %v1815 = vshrl.u32 %v1814, 7
      %v1816 = vsub.s32 0, %v1815
      %v1817 = vrot.slane %v1812, %v1816
      %vm1819 = vcmask 588800
      %v1821 = vsel %vm1819, %v1771, 0
      %v1824 = vsel %vm1819, %v1772, 0
      %v1827 = vsel %vm1819, %v1773, 0
      %v1830 = vsel %vm1819, %v1774, 0
      %v1833 = vsel %vm1819, %v1775, 0
      %v1836 = vsel %vm1819, %v1776, 0
      %v1839 = vsel %vm1819, %v1777, 0
      %v1842 = vsel %vm1819, %v1778, 0
      %v1845 = vsel %vm1819, %v1779, 0
      %v1848 = vsel %vm1819, %v1780, 0
      %v1851 = vsel %vm1819, %v1781, 0
      %v1854 = vsel %vm1819, %v1782, 0
      %v1857 = vsel %vm1819, %v1783, 0
      %v1860 = vsel %vm1819, %v1784, 0
      %v1863 = vsel %vm1819, %v1785, 0
      %v1866 = vsel %vm1819, %v1786, 0
      %v1869 = vsel %vm1819, %v1787, 0
      %v1872 = vsel %vm1819, %v1788, 0
      %v1875 = vsel %vm1819, %v1789, 0
      %v1878 = vsel %vm1819, %v1790, 0
      %v1881 = vsel %vm1819, %v1791, 0
      %v1884 = vsel %vm1819, %v1792, 0
      %v1887 = vsel %vm1819, %v1793, 0
      %v1890 = vsel %vm1819, %v1794, 0
      %v1893 = vsel %vm1819, %v1795, 0
      %v1896 = vsel %vm1819, %v1796, 0
      %v1899 = vsel %vm1819, %v1797, 0
      %v1902 = vsel %vm1819, %v1798, 0
      %v1905 = vsel %vm1819, %v1799, 0
      %v1908 = vsel %vm1819, %v1800, 0
      %v1911 = vsel %vm1819, %v1801, 0
      %v1914 = vsel %vm1819, %v1802, 0
      %1916 = vmatprep.subr.mxu0 0.0
      %1917 = vmatpush1.msra.mxu0 %v1803
      %1918 = vmatprep.subr.mxu0 0.0
      %1919 = vmatpush1.msra.mxu0 %v1804
      %1920 = vmatprep.subr.mxu0 0.0
      %1921 = vmatpush1.msra.mxu0 %v1805
      %1922 = vmatprep.subr.mxu0 0.0
      %1923 = vmatpush1.msra.mxu0 %v1806
      %1924 = vmatprep.subr.mxu0 0.0
      %1925 = vmatpush1.msra.mxu0 %v1807
      %1926 = vmatprep.subr.mxu0 0.0
      %1927 = vmatpush1.msra.mxu0 %v1808
      %1928 = vmatprep.subr.mxu0 0.0
      %1929 = vmatpush1.msra.mxu0 %v1809
      %1930 = vmatprep.subr.mxu0 0.0
      %1931 = vmatpush1.msra.mxu0 %v1810
      %1932 = vmatprep.subr.mxu0 0.0
      %1933 = vmatpush1.msra.mxu0 %v1811
      %1934 = vmatprep.subr.mxu0 0.0
      %1935 = vmatpush1.msra.mxu0 0.0
      %1936 = vmatprep.subr.mxu0 0.0
      %1937 = vmatpush1.msra.mxu0 0.0
      %1938 = vmatprep.subr.mxu0 0.0
      %1939 = vmatpush1.msra.mxu0 0.0
      %1940 = vmatprep.subr.mxu0 0.0
      %1941 = vmatpush1.msra.mxu0 0.0
      %1942 = vmatprep.subr.mxu0 0.0
      %1943 = vmatpush1.msra.mxu0 0.0
      %1944 = vmatprep.subr.mxu0 0.0
      %1945 = vmatpush1.msra.mxu0 0.0
      %1946 = vmatprep.subr.mxu0 0.0
      %1947 = vmatpush1.msra.mxu0 0.0
      %1948 = vmatprep.subr.mxu0 0.0
      %1949 = vmatpush1.msra.mxu0 0.0
      %1950 = vmatprep.subr.mxu0 0.0
      %1951 = vmatpush1.msra.mxu0 0.0
      %1952 = vmatprep.subr.mxu0 0.0
      %1953 = vmatpush1.msra.mxu0 0.0
      %1954 = vmatprep.subr.mxu0 0.0
      %1955 = vmatpush1.msra.mxu0 0.0
      %1956 = vmatprep.subr.mxu0 0.0
      %1957 = vmatpush1.msra.mxu0 0.0
      %1958 = vmatprep.subr.mxu0 0.0
      %1959 = vmatpush1.msra.mxu0 0.0
      %1960 = vmatprep.subr.mxu0 0.0
      %1961 = vmatpush1.msra.mxu0 0.0
      %1962 = vmatprep.subr.mxu0 0.0
      %1963 = vmatpush1.msra.mxu0 0.0
      %1964 = vmatprep.subr.mxu0 0.0
      %1965 = vmatpush1.msra.mxu0 0.0
      %1966 = vmatprep.subr.mxu0 0.0
      %1967 = vmatpush1.msra.mxu0 0.0
      %1968 = vmatprep.subr.mxu0 0.0
      %1969 = vmatpush1.msra.mxu0 0.0
      %1970 = vmatprep.subr.mxu0 0.0
      %1971 = vmatpush1.msra.mxu0 0.0
      %1972 = vmatprep.subr.mxu0 0.0
      %1973 = vmatpush1.msra.mxu0 0.0
      %1974 = vmatprep.subr.mxu0 0.0
      %1975 = vmatpush1.msra.mxu0 0.0
      %1976 = vmatprep.subr.mxu0 0.0
      %1977 = vmatpush1.msra.mxu0 0.0
      %1978 = vmatprep.subr.mxu0 0.0
      %1979 = vmatpush1.msra.mxu0 0.0
      %1980 = vmatprep.mubr.f32.mxu0 0.0
      %1981 = vmatmul.mubr.f32.gmra.mrb[0].mxu0 %v1821
      %v1982 = vpop.f32.mrb[0].mxu0
      %v1983 = vadd.f32 %v1817, %v1982
      %v1984 = vpop.f32.mrb[0].mxu0
      %1985 = vmatprep.mubr.f32.mxu0 0.0
      %1986 = vmatmul.mubr.f32.gmra.mrb[0].mxu0 %v1824
      %v1987 = vpop.f32.mrb[0].mxu0
      %v1988 = vadd.f32 %v1817, %v1987
      %v1989 = vpop.f32.mrb[0].mxu0
      %1990 = vmatprep.mubr.f32.mxu0 0.0
      %1991 = vmatmul.mubr.f32.gmra.mrb[0].mxu0 %v1827
      %v1992 = vpop.f32.mrb[0].mxu0
      %v1993 = vadd.f32 %v1817, %v1992
      %v1994 = vpop.f32.mrb[0].mxu0
      %1995 = vmatprep.mubr.f32.mxu0 0.0
      %1996 = vmatmul.mubr.f32.gmra.mrb[0].mxu0 %v1830
      %v1997 = vpop.f32.mrb[0].mxu0
      %v1998 = vadd.f32 %v1817, %v1997
      %v1999 = vpop.f32.mrb[0].mxu0
      %2000 = vmatprep.mubr.f32.mxu0 0.0
      %2001 = vmatmul.mubr.f32.gmra.mrb[0].mxu0 %v1833
      %v2002 = vpop.f32.mrb[0].mxu0
      %v2003 = vadd.f32 %v1817, %v2002
      %v2004 = vpop.f32.mrb[0].mxu0
      %2005 = vmatprep.mubr.f32.mxu0 0.0
      %2006 = vmatmul.mubr.f32.gmra.mrb[0].mxu0 %v1836
      %v2007 = vpop.f32.mrb[0].mxu0
      %v2008 = vadd.f32 %v1817, %v2007
      %v2009 = vpop.f32.mrb[0].mxu0
      %2010 = vmatprep.mubr.f32.mxu0 0.0
      %2011 = vmatmul.mubr.f32.gmra.mrb[0].mxu0 %v1839
      %v2012 = vpop.f32.mrb[0].mxu0
      %v2013 = vadd.f32 %v1817, %v2012
      %v2014 = vpop.f32.mrb[0].mxu0
      %2015 = vmatprep.mubr.f32.mxu0 0.0
      %2016 = vmatmul.mubr.f32.gmra.mrb[0].mxu0 %v1842
      %v2017 = vpop.f32.mrb[0].mxu0
      %v2018 = vadd.f32 %v1817, %v2017
      %v2019 = vpop.f32.mrb[0].mxu0
      %2020 = vmatprep.mubr.f32.mxu0 0.0
      %2021 = vmatmul.mubr.f32.gmra.mrb[0].mxu0 %v1845
      %v2022 = vpop.f32.mrb[0].mxu0
      %v2023 = vadd.f32 %v1817, %v2022
      %v2024 = vpop.f32.mrb[0].mxu0
      %2025 = vmatprep.mubr.f32.mxu0 0.0
      %2026 = vmatmul.mubr.f32.gmra.mrb[0].mxu0 %v1848
      %v2027 = vpop.f32.mrb[0].mxu0
      %v2028 = vadd.f32 %v1817, %v2027
      %v2029 = vpop.f32.mrb[0].mxu0
      %2030 = vmatprep.mubr.f32.mxu0 0.0
      %2031 = vmatmul.mubr.f32.gmra.mrb[0].mxu0 %v1851
      %v2032 = vpop.f32.mrb[0].mxu0
      %v2033 = vadd.f32 %v1817, %v2032
      %v2034 = vpop.f32.mrb[0].mxu0
      %2035 = vmatprep.mubr.f32.mxu0 0.0
      %2036 = vmatmul.mubr.f32.gmra.mrb[0].mxu0 %v1854
      %v2037 = vpop.f32.mrb[0].mxu0
      %v2038 = vadd.f32 %v1817, %v2037
      %v2039 = vpop.f32.mrb[0].mxu0
      %2040 = vmatprep.mubr.f32.mxu0 0.0
      %2041 = vmatmul.mubr.f32.gmra.mrb[0].mxu0 %v1857
      %v2042 = vpop.f32.mrb[0].mxu0
      %v2043 = vadd.f32 %v1817, %v2042
      %v2044 = vpop.f32.mrb[0].mxu0
      %2045 = vmatprep.mubr.f32.mxu0 0.0
      %2046 = vmatmul.mubr.f32.gmra.mrb[0].mxu0 %v1860
      %v2047 = vpop.f32.mrb[0].mxu0
      %v2048 = vadd.f32 %v1817, %v2047
      %v2049 = vpop.f32.mrb[0].mxu0
      %2050 = vmatprep.mubr.f32.mxu0 0.0
      %2051 = vmatmul.mubr.f32.gmra.mrb[0].mxu0 %v1863
      %v2052 = vpop.f32.mrb[0].mxu0
      %v2053 = vadd.f32 %v1817, %v2052
      %v2054 = vpop.f32.mrb[0].mxu0
      %2055 = vmatprep.mubr.f32.mxu0 0.0
      %2056 = vmatmul.mubr.f32.gmra.mrb[0].mxu0 %v1866
      %v2057 = vpop.f32.mrb[0].mxu0
      %v2058 = vadd.f32 %v1817, %v2057
      %v2059 = vpop.f32.mrb[0].mxu0
      %2060 = vmatprep.mubr.f32.mxu0 0.0
      %2061 = vmatmul.mubr.f32.gmra.mrb[0].mxu0 %v1869
      %v2062 = vpop.f32.mrb[0].mxu0
      %v2063 = vadd.f32 %v1817, %v2062
      %v2064 = vpop.f32.mrb[0].mxu0
      %2065 = vmatprep.mubr.f32.mxu0 0.0
      %2066 = vmatmul.mubr.f32.gmra.mrb[0].mxu0 %v1872
      %v2067 = vpop.f32.mrb[0].mxu0
      %v2068 = vadd.f32 %v1817, %v2067
      %v2069 = vpop.f32.mrb[0].mxu0
      %2070 = vmatprep.mubr.f32.mxu0 0.0
      %2071 = vmatmul.mubr.f32.gmra.mrb[0].mxu0 %v1875
      %v2072 = vpop.f32.mrb[0].mxu0
      %v2073 = vadd.f32 %v1817, %v2072
      %v2074 = vpop.f32.mrb[0].mxu0
      %2075 = vmatprep.mubr.f32.mxu0 0.0
      %2076 = vmatmul.mubr.f32.gmra.mrb[0].mxu0 %v1878
      %v2077 = vpop.f32.mrb[0].mxu0
      %v2078 = vadd.f32 %v1817, %v2077
      %v2079 = vpop.f32.mrb[0].mxu0
      %2080 = vmatprep.mubr.f32.mxu0 0.0
      %2081 = vmatmul.mubr.f32.gmra.mrb[0].mxu0 %v1881
      %v2082 = vpop.f32.mrb[0].mxu0
      %v2083 = vadd.f32 %v1817, %v2082
      %v2084 = vpop.f32.mrb[0].mxu0
      %2085 = vmatprep.mubr.f32.mxu0 0.0
      %2086 = vmatmul.mubr.f32.gmra.mrb[0].mxu0 %v1884
      %v2087 = vpop.f32.mrb[0].mxu0
      %v2088 = vadd.f32 %v1817, %v2087
      %v2089 = vpop.f32.mrb[0].mxu0
      %2090 = vmatprep.mubr.f32.mxu0 0.0
      %2091 = vmatmul.mubr.f32.gmra.mrb[0].mxu0 %v1887
      %v2092 = vpop.f32.mrb[0].mxu0
      %v2093 = vadd.f32 %v1817, %v2092
      %v2094 = vpop.f32.mrb[0].mxu0
      %2095 = vmatprep.mubr.f32.mxu0 0.0
      %2096 = vmatmul.mubr.f32.gmra.mrb[0].mxu0 %v1890
      %v2097 = vpop.f32.mrb[0].mxu0
      %v2098 = vadd.f32 %v1817, %v2097
      %v2099 = vpop.f32.mrb[0].mxu0
      %2100 = vmatprep.mubr.f32.mxu0 0.0
      %2101 = vmatmul.mubr.f32.gmra.mrb[0].mxu0 %v1893
      %v2102 = vpop.f32.mrb[0].mxu0
      %v2103 = vadd.f32 %v1817, %v2102
      %v2104 = vpop.f32.mrb[0].mxu0
      %2105 = vmatprep.mubr.f32.mxu0 0.0
      %2106 = vmatmul.mubr.f32.gmra.mrb[0].mxu0 %v1896
      %v2107 = vpop.f32.mrb[0].mxu0
      %v2108 = vadd.f32 %v1817, %v2107
      %v2109 = vpop.f32.mrb[0].mxu0
      %2110 = vmatprep.mubr.f32.mxu0 0.0
      %2111 = vmatmul.mubr.f32.gmra.mrb[0].mxu0 %v1899
      %v2112 = vpop.f32.mrb[0].mxu0
      %v2113 = vadd.f32 %v1817, %v2112
      %v2114 = vpop.f32.mrb[0].mxu0
      %2115 = vmatprep.mubr.f32.mxu0 0.0
      %2116 = vmatmul.mubr.f32.gmra.mrb[0].mxu0 %v1902
      %v2117 = vpop.f32.mrb[0].mxu0
      %v2118 = vadd.f32 %v1817, %v2117
      %v2119 = vpop.f32.mrb[0].mxu0
      %2120 = vmatprep.mubr.f32.mxu0 0.0
      %2121 = vmatmul.mubr.f32.gmra.mrb[0].mxu0 %v1905
      %v2122 = vpop.f32.mrb[0].mxu0
      %v2123 = vadd.f32 %v1817, %v2122
      %v2124 = vpop.f32.mrb[0].mxu0
      %2125 = vmatprep.mubr.f32.mxu0 0.0
      %2126 = vmatmul.mubr.f32.gmra.mrb[0].mxu0 %v1908
      %v2127 = vpop.f32.mrb[0].mxu0
      %v2128 = vadd.f32 %v1817, %v2127
      %v2129 = vpop.f32.mrb[0].mxu0
      %2130 = vmatprep.mubr.f32.mxu0 0.0
      %2131 = vmatmul.mubr.f32.gmra.mrb[0].mxu0 %v1911
      %v2132 = vpop.f32.mrb[0].mxu0
      %v2133 = vadd.f32 %v1817, %v2132
      %v2134 = vpop.f32.mrb[0].mxu0
      %2135 = vmatprep.mubr.f32.mxu0 0.0
      %2136 = vmatmul.mubr.f32.gmra.mrb[0].mxu0 %v1914
      %v2137 = vpop.f32.mrb[0].mxu0
      %v2138 = vadd.f32 %v1817, %v2137
      %v2139 = vpop.f32.mrb[0].mxu0
      %2140 = vdwg.mxu0
      %v2141 = vmul.f32 %v1983, 0.5
      %v2142 = vmul.f32 %v1988, 0.5
      %v2143 = vmul.f32 %v1993, 0.5
      %v2144 = vmul.f32 %v1998, 0.5
      %v2145 = vmul.f32 %v2003, 0.5
      %v2146 = vmul.f32 %v2008, 0.5
      %v2147 = vmul.f32 %v2013, 0.5
      %v2148 = vmul.f32 %v2018, 0.5
      %v2149 = vmul.f32 %v2023, 0.5
      %v2150 = vmul.f32 %v2028, 0.5
      %v2151 = vmul.f32 %v2033, 0.5
      %v2152 = vmul.f32 %v2038, 0.5
      %v2153 = vmul.f32 %v2043, 0.5
      %v2154 = vmul.f32 %v2048, 0.5
      %v2155 = vmul.f32 %v2053, 0.5
      %v2156 = vmul.f32 %v2058, 0.5
      %v2157 = vmul.f32 %v2063, 0.5
      %v2158 = vmul.f32 %v2068, 0.5
      %v2159 = vmul.f32 %v2073, 0.5
      %v2160 = vmul.f32 %v2078, 0.5
      %v2161 = vmul.f32 %v2083, 0.5
      %v2162 = vmul.f32 %v2088, 0.5
      %v2163 = vmul.f32 %v2093, 0.5
      %v2164 = vmul.f32 %v2098, 0.5
      %v2165 = vmul.f32 %v2103, 0.5
      %v2166 = vmul.f32 %v2108, 0.5
      %v2167 = vmul.f32 %v2113, 0.5
      %v2168 = vmul.f32 %v2118, 0.5
      %v2169 = vmul.f32 %v2123, 0.5
      %v2170 = vmul.f32 %v2128, 0.5
      %v2171 = vmul.f32 %v2133, 0.5
      %v2172 = vmul.f32 %v2138, 0.5
      %v2173 = vmul.f32 %v1983, 0.70710677
      %v2174 = vmul.f32 %v1988, 0.70710677
      %v2175 = vmul.f32 %v1993, 0.70710677
      %v2176 = vmul.f32 %v1998, 0.70710677
      %v2177 = vmul.f32 %v2003, 0.70710677
      %v2178 = vmul.f32 %v2008, 0.70710677
      %v2179 = vmul.f32 %v2013, 0.70710677
      %v2180 = vmul.f32 %v2018, 0.70710677
      %v2181 = vmul.f32 %v2023, 0.70710677
      %v2182 = vmul.f32 %v2028, 0.70710677
      %v2183 = vmul.f32 %v2033, 0.70710677
      %v2184 = vmul.f32 %v2038, 0.70710677
      %v2185 = vmul.f32 %v2043, 0.70710677
      %v2186 = vmul.f32 %v2048, 0.70710677
      %v2187 = vmul.f32 %v2053, 0.70710677
      %v2188 = vmul.f32 %v2058, 0.70710677
      %v2189 = vmul.f32 %v2063, 0.70710677
      %v2190 = vmul.f32 %v2068, 0.70710677
      %v2191 = vmul.f32 %v2073, 0.70710677
      %v2192 = vmul.f32 %v2078, 0.70710677
      %v2193 = vmul.f32 %v2083, 0.70710677
      %v2194 = vmul.f32 %v2088, 0.70710677
      %v2195 = vmul.f32 %v2093, 0.70710677
      %v2196 = vmul.f32 %v2098, 0.70710677
      %v2197 = vmul.f32 %v2103, 0.70710677
      %v2198 = vmul.f32 %v2108, 0.70710677
      %v2199 = vmul.f32 %v2113, 0.70710677
      %v2200 = vmul.f32 %v2118, 0.70710677
      %v2201 = vmul.f32 %v2123, 0.70710677
      %v2202 = vmul.f32 %v2128, 0.70710677
      %v2203 = vmul.f32 %v2133, 0.70710677
      %v2204 = vmul.f32 %v2138, 0.70710677
      %vm2205 = vcmp.ge.f32.partialorder %v2173, 0.0
      %vm2206 = vcmp.ge.f32.partialorder %v2174, 0.0
      %vm2207 = vcmp.ge.f32.partialorder %v2175, 0.0
      %vm2208 = vcmp.ge.f32.partialorder %v2176, 0.0
      %vm2209 = vcmp.ge.f32.partialorder %v2177, 0.0
      %vm2210 = vcmp.ge.f32.partialorder %v2178, 0.0
      %vm2211 = vcmp.ge.f32.partialorder %v2179, 0.0
      %vm2212 = vcmp.ge.f32.partialorder %v2180, 0.0
      %vm2213 = vcmp.ge.f32.partialorder %v2181, 0.0
      %vm2214 = vcmp.ge.f32.partialorder %v2182, 0.0
      %vm2215 = vcmp.ge.f32.partialorder %v2183, 0.0
      %vm2216 = vcmp.ge.f32.partialorder %v2184, 0.0
      %vm2217 = vcmp.ge.f32.partialorder %v2185, 0.0
      %vm2218 = vcmp.ge.f32.partialorder %v2186, 0.0
      %vm2219 = vcmp.ge.f32.partialorder %v2187, 0.0
      %vm2220 = vcmp.ge.f32.partialorder %v2188, 0.0
      %vm2221 = vcmp.ge.f32.partialorder %v2189, 0.0
      %vm2222 = vcmp.ge.f32.partialorder %v2190, 0.0
      %vm2223 = vcmp.ge.f32.partialorder %v2191, 0.0
      %vm2224 = vcmp.ge.f32.partialorder %v2192, 0.0
      %vm2225 = vcmp.ge.f32.partialorder %v2193, 0.0
      %vm2226 = vcmp.ge.f32.partialorder %v2194, 0.0
      %vm2227 = vcmp.ge.f32.partialorder %v2195, 0.0
      %vm2228 = vcmp.ge.f32.partialorder %v2196, 0.0
      %vm2229 = vcmp.ge.f32.partialorder %v2197, 0.0
      %vm2230 = vcmp.ge.f32.partialorder %v2198, 0.0
      %vm2231 = vcmp.ge.f32.partialorder %v2199, 0.0
      %vm2232 = vcmp.ge.f32.partialorder %v2200, 0.0
      %vm2233 = vcmp.ge.f32.partialorder %v2201, 0.0
      %vm2234 = vcmp.ge.f32.partialorder %v2202, 0.0
      %vm2235 = vcmp.ge.f32.partialorder %v2203, 0.0
      %vm2236 = vcmp.ge.f32.partialorder %v2204, 0.0
      %v2237 = vsel %vm2205, 1.0, -1.0
      %v2238 = vsel %vm2206, 1.0, -1.0
      %v2239 = vsel %vm2207, 1.0, -1.0
      %v2240 = vsel %vm2208, 1.0, -1.0
      %v2241 = vsel %vm2209, 1.0, -1.0
      %v2242 = vsel %vm2210, 1.0, -1.0
      %v2243 = vsel %vm2211, 1.0, -1.0
      %v2244 = vsel %vm2212, 1.0, -1.0
      %v2245 = vsel %vm2213, 1.0, -1.0
      %v2246 = vsel %vm2214, 1.0, -1.0
      %v2247 = vsel %vm2215, 1.0, -1.0
      %v2248 = vsel %vm2216, 1.0, -1.0
      %v2249 = vsel %vm2217, 1.0, -1.0
      %v2250 = vsel %vm2218, 1.0, -1.0
      %v2251 = vsel %vm2219, 1.0, -1.0
      %v2252 = vsel %vm2220, 1.0, -1.0
      %v2253 = vsel %vm2221, 1.0, -1.0
      %v2254 = vsel %vm2222, 1.0, -1.0
      %v2255 = vsel %vm2223, 1.0, -1.0
      %v2256 = vsel %vm2224, 1.0, -1.0
      %v2257 = vsel %vm2225, 1.0, -1.0
      %v2258 = vsel %vm2226, 1.0, -1.0
      %v2259 = vsel %vm2227, 1.0, -1.0
      %v2260 = vsel %vm2228, 1.0, -1.0
      %v2261 = vsel %vm2229, 1.0, -1.0
      %v2262 = vsel %vm2230, 1.0, -1.0
      %v2263 = vsel %vm2231, 1.0, -1.0
      %v2264 = vsel %vm2232, 1.0, -1.0
      %v2265 = vsel %vm2233, 1.0, -1.0
      %v2266 = vsel %vm2234, 1.0, -1.0
      %v2267 = vsel %vm2235, 1.0, -1.0
      %v2268 = vsel %vm2236, 1.0, -1.0
      %v2269 = vand.u32 2147483647, %v2173
      %v2270 = vand.u32 2147483647, %v2174
      %v2271 = vand.u32 2147483647, %v2175
      %v2272 = vand.u32 2147483647, %v2176
      %v2273 = vand.u32 2147483647, %v2177
      %v2274 = vand.u32 2147483647, %v2178
      %v2275 = vand.u32 2147483647, %v2179
      %v2276 = vand.u32 2147483647, %v2180
      %v2277 = vand.u32 2147483647, %v2181
      %v2278 = vand.u32 2147483647, %v2182
      %v2279 = vand.u32 2147483647, %v2183
      %v2280 = vand.u32 2147483647, %v2184
      %v2281 = vand.u32 2147483647, %v2185
      %v2282 = vand.u32 2147483647, %v2186
      %v2283 = vand.u32 2147483647, %v2187
      %v2284 = vand.u32 2147483647, %v2188
      %v2285 = vand.u32 2147483647, %v2189
      %v2286 = vand.u32 2147483647, %v2190
      %v2287 = vand.u32 2147483647, %v2191
      %v2288 = vand.u32 2147483647, %v2192
      %v2289 = vand.u32 2147483647, %v2193
      %v2290 = vand.u32 2147483647, %v2194
      %v2291 = vand.u32 2147483647, %v2195
      %v2292 = vand.u32 2147483647, %v2196
      %v2293 = vand.u32 2147483647, %v2197
      %v2294 = vand.u32 2147483647, %v2198
      %v2295 = vand.u32 2147483647, %v2199
      %v2296 = vand.u32 2147483647, %v2200
      %v2297 = vand.u32 2147483647, %v2201
      %v2298 = vand.u32 2147483647, %v2202
      %v2299 = vand.u32 2147483647, %v2203
      %v2300 = vand.u32 2147483647, %v2204
      %v2301 = vmul.f32 %v2269, 0.3275911
      %v2302 = vmul.f32 %v2270, 0.3275911
      %v2303 = vmul.f32 %v2271, 0.3275911
      %v2304 = vmul.f32 %v2272, 0.3275911
      %v2305 = vmul.f32 %v2273, 0.3275911
      %v2306 = vmul.f32 %v2274, 0.3275911
      %v2307 = vmul.f32 %v2275, 0.3275911
      %v2308 = vmul.f32 %v2276, 0.3275911
      %v2309 = vmul.f32 %v2277, 0.3275911
      %v2310 = vmul.f32 %v2278, 0.3275911
      %v2311 = vmul.f32 %v2279, 0.3275911
      %v2312 = vmul.f32 %v2280, 0.3275911
      %v2313 = vmul.f32 %v2281, 0.3275911
      %v2314 = vmul.f32 %v2282, 0.3275911
      %v2315 = vmul.f32 %v2283, 0.3275911
      %v2316 = vmul.f32 %v2284, 0.3275911
      %v2317 = vmul.f32 %v2285, 0.3275911
      %v2318 = vmul.f32 %v2286, 0.3275911
      %v2319 = vmul.f32 %v2287, 0.3275911
      %v2320 = vmul.f32 %v2288, 0.3275911
      %v2321 = vmul.f32 %v2289, 0.3275911
      %v2322 = vmul.f32 %v2290, 0.3275911
      %v2323 = vmul.f32 %v2291, 0.3275911
      %v2324 = vmul.f32 %v2292, 0.3275911
      %v2325 = vmul.f32 %v2293, 0.3275911
      %v2326 = vmul.f32 %v2294, 0.3275911
      %v2327 = vmul.f32 %v2295, 0.3275911
      %v2328 = vmul.f32 %v2296, 0.3275911
      %v2329 = vmul.f32 %v2297, 0.3275911
      %v2330 = vmul.f32 %v2298, 0.3275911
      %v2331 = vmul.f32 %v2299, 0.3275911
      %v2332 = vmul.f32 %v2300, 0.3275911
      %v2333 = vadd.f32 %v2301, 1.0
      %v2334 = vadd.f32 %v2302, 1.0
      %v2335 = vadd.f32 %v2303, 1.0
      %v2336 = vadd.f32 %v2304, 1.0
      %v2337 = vadd.f32 %v2305, 1.0
      %v2338 = vadd.f32 %v2306, 1.0
      %v2339 = vadd.f32 %v2307, 1.0
      %v2340 = vadd.f32 %v2308, 1.0
      %v2341 = vadd.f32 %v2309, 1.0
      %v2342 = vadd.f32 %v2310, 1.0
      %v2343 = vadd.f32 %v2311, 1.0
      %v2344 = vadd.f32 %v2312, 1.0
      %v2345 = vadd.f32 %v2313, 1.0
      %v2346 = vadd.f32 %v2314, 1.0
      %v2347 = vadd.f32 %v2315, 1.0
      %v2348 = vadd.f32 %v2316, 1.0
      %v2349 = vadd.f32 %v2317, 1.0
      %v2350 = vadd.f32 %v2318, 1.0
      %v2351 = vadd.f32 %v2319, 1.0
      %v2352 = vadd.f32 %v2320, 1.0
      %v2353 = vadd.f32 %v2321, 1.0
      %v2354 = vadd.f32 %v2322, 1.0
      %v2355 = vadd.f32 %v2323, 1.0
      %v2356 = vadd.f32 %v2324, 1.0
      %v2357 = vadd.f32 %v2325, 1.0
      %v2358 = vadd.f32 %v2326, 1.0
      %v2359 = vadd.f32 %v2327, 1.0
      %v2360 = vadd.f32 %v2328, 1.0
      %v2361 = vadd.f32 %v2329, 1.0
      %v2362 = vadd.f32 %v2330, 1.0
      %v2363 = vadd.f32 %v2331, 1.0
      %v2364 = vadd.f32 %v2332, 1.0
      %v2365 = vrcp.pop %v2333
      %v2366 = vmul.f32 1.0, %v2365
      %v2367 = vrcp.pop %v2334
      %v2368 = vmul.f32 1.0, %v2367
      %v2369 = vrcp.pop %v2335
      %v2370 = vmul.f32 1.0, %v2369
      %v2371 = vrcp.pop %v2336
      %v2372 = vmul.f32 1.0, %v2371
      %v2373 = vrcp.pop %v2337
      %v2374 = vmul.f32 1.0, %v2373
      %v2375 = vrcp.pop %v2338
      %v2376 = vmul.f32 1.0, %v2375
      %v2377 = vrcp.pop %v2339
      %v2378 = vmul.f32 1.0, %v2377
      %v2379 = vrcp.pop %v2340
      %v2380 = vmul.f32 1.0, %v2379
      %v2381 = vrcp.pop %v2341
      %v2382 = vmul.f32 1.0, %v2381
      %v2383 = vrcp.pop %v2342
      %v2384 = vmul.f32 1.0, %v2383
      %v2385 = vrcp.pop %v2343
      %v2386 = vmul.f32 1.0, %v2385
      %v2387 = vrcp.pop %v2344
      %v2388 = vmul.f32 1.0, %v2387
      %v2389 = vrcp.pop %v2345
      %v2390 = vmul.f32 1.0, %v2389
      %v2391 = vrcp.pop %v2346
      %v2392 = vmul.f32 1.0, %v2391
      %v2393 = vrcp.pop %v2347
      %v2394 = vmul.f32 1.0, %v2393
      %v2395 = vrcp.pop %v2348
      %v2396 = vmul.f32 1.0, %v2395
      %v2397 = vrcp.pop %v2349
      %v2398 = vmul.f32 1.0, %v2397
      %v2399 = vrcp.pop %v2350
      %v2400 = vmul.f32 1.0, %v2399
      %v2401 = vrcp.pop %v2351
      %v2402 = vmul.f32 1.0, %v2401
      %v2403 = vrcp.pop %v2352
      %v2404 = vmul.f32 1.0, %v2403
      %v2405 = vrcp.pop %v2353
      %v2406 = vmul.f32 1.0, %v2405
      %v2407 = vrcp.pop %v2354
      %v2408 = vmul.f32 1.0, %v2407
      %v2409 = vrcp.pop %v2355
      %v2410 = vmul.f32 1.0, %v2409
      %v2411 = vrcp.pop %v2356
      %v2412 = vmul.f32 1.0, %v2411
      %v2413 = vrcp.pop %v2357
      %v2414 = vmul.f32 1.0, %v2413
      %v2415 = vrcp.pop %v2358
      %v2416 = vmul.f32 1.0, %v2415
      %v2417 = vrcp.pop %v2359
      %v2418 = vmul.f32 1.0, %v2417
      %v2419 = vrcp.pop %v2360
      %v2420 = vmul.f32 1.0, %v2419
      %v2421 = vrcp.pop %v2361
      %v2422 = vmul.f32 1.0, %v2421
      %v2423 = vrcp.pop %v2362
      %v2424 = vmul.f32 1.0, %v2423
      %v2425 = vrcp.pop %v2363
      %v2426 = vmul.f32 1.0, %v2425
      %v2427 = vrcp.pop %v2364
      %v2428 = vmul.f32 1.0, %v2427
      %v2429 = vmul.f32 %v2366, 1.0614054
      %v2430 = vmul.f32 %v2368, 1.0614054
      %v2431 = vmul.f32 %v2370, 1.0614054
      %v2432 = vmul.f32 %v2372, 1.0614054
      %v2433 = vmul.f32 %v2374, 1.0614054
      %v2434 = vmul.f32 %v2376, 1.0614054
      %v2435 = vmul.f32 %v2378, 1.0614054
      %v2436 = vmul.f32 %v2380, 1.0614054
      %v2437 = vmul.f32 %v2382, 1.0614054
      %v2438 = vmul.f32 %v2384, 1.0614054
      %v2439 = vmul.f32 %v2386, 1.0614054
      %v2440 = vmul.f32 %v2388, 1.0614054
      %v2441 = vmul.f32 %v2390, 1.0614054
      %v2442 = vmul.f32 %v2392, 1.0614054
      %v2443 = vmul.f32 %v2394, 1.0614054
      %v2444 = vmul.f32 %v2396, 1.0614054
      %v2445 = vmul.f32 %v2398, 1.0614054
      %v2446 = vmul.f32 %v2400, 1.0614054
      %v2447 = vmul.f32 %v2402, 1.0614054
      %v2448 = vmul.f32 %v2404, 1.0614054
      %v2449 = vmul.f32 %v2406, 1.0614054
      %v2450 = vmul.f32 %v2408, 1.0614054
      %v2451 = vmul.f32 %v2410, 1.0614054
      %v2452 = vmul.f32 %v2412, 1.0614054
      %v2453 = vmul.f32 %v2414, 1.0614054
      %v2454 = vmul.f32 %v2416, 1.0614054
      %v2455 = vmul.f32 %v2418, 1.0614054
      %v2456 = vmul.f32 %v2420, 1.0614054
      %v2457 = vmul.f32 %v2422, 1.0614054
      %v2458 = vmul.f32 %v2424, 1.0614054
      %v2459 = vmul.f32 %v2426, 1.0614054
      %v2460 = vmul.f32 %v2428, 1.0614054
      %v2461 = vadd.f32 %v2429, -1.4531521
      %v2462 = vadd.f32 %v2430, -1.4531521
      %v2463 = vadd.f32 %v2431, -1.4531521
      %v2464 = vadd.f32 %v2432, -1.4531521
      %v2465 = vadd.f32 %v2433, -1.4531521
      %v2466 = vadd.f32 %v2434, -1.4531521
      %v2467 = vadd.f32 %v2435, -1.4531521
      %v2468 = vadd.f32 %v2436, -1.4531521
      %v2469 = vadd.f32 %v2437, -1.4531521
      %v2470 = vadd.f32 %v2438, -1.4531521
      %v2471 = vadd.f32 %v2439, -1.4531521
      %v2472 = vadd.f32 %v2440, -1.4531521
      %v2473 = vadd.f32 %v2441, -1.4531521
      %v2474 = vadd.f32 %v2442, -1.4531521
      %v2475 = vadd.f32 %v2443, -1.4531521
      %v2476 = vadd.f32 %v2444, -1.4531521
      %v2477 = vadd.f32 %v2445, -1.4531521
      %v2478 = vadd.f32 %v2446, -1.4531521
      %v2479 = vadd.f32 %v2447, -1.4531521
      %v2480 = vadd.f32 %v2448, -1.4531521
      %v2481 = vadd.f32 %v2449, -1.4531521
      %v2482 = vadd.f32 %v2450, -1.4531521
      %v2483 = vadd.f32 %v2451, -1.4531521
      %v2484 = vadd.f32 %v2452, -1.4531521
      %v2485 = vadd.f32 %v2453, -1.4531521
      %v2486 = vadd.f32 %v2454, -1.4531521
      %v2487 = vadd.f32 %v2455, -1.4531521
      %v2488 = vadd.f32 %v2456, -1.4531521
      %v2489 = vadd.f32 %v2457, -1.4531521
      %v2490 = vadd.f32 %v2458, -1.4531521
      %v2491 = vadd.f32 %v2459, -1.4531521
      %v2492 = vadd.f32 %v2460, -1.4531521
      %v2493 = vmul.f32 %v2461, %v2366
      %v2494 = vmul.f32 %v2462, %v2368
      %v2495 = vmul.f32 %v2463, %v2370
      %v2496 = vmul.f32 %v2464, %v2372
      %v2497 = vmul.f32 %v2465, %v2374
      %v2498 = vmul.f32 %v2466, %v2376
      %v2499 = vmul.f32 %v2467, %v2378
      %v2500 = vmul.f32 %v2468, %v2380
      %v2501 = vmul.f32 %v2469, %v2382
      %v2502 = vmul.f32 %v2470, %v2384
      %v2503 = vmul.f32 %v2471, %v2386
      %v2504 = vmul.f32 %v2472, %v2388
      %v2505 = vmul.f32 %v2473, %v2390
      %v2506 = vmul.f32 %v2474, %v2392
      %v2507 = vmul.f32 %v2475, %v2394
      %v2508 = vmul.f32 %v2476, %v2396
      %v2509 = vmul.f32 %v2477, %v2398
      %v2510 = vmul.f32 %v2478, %v2400
      %v2511 = vmul.f32 %v2479, %v2402
      %v2512 = vmul.f32 %v2480, %v2404
      %v2513 = vmul.f32 %v2481, %v2406
      %v2514 = vmul.f32 %v2482, %v2408
      %v2515 = vmul.f32 %v2483, %v2410
      %v2516 = vmul.f32 %v2484, %v2412
      %v2517 = vmul.f32 %v2485, %v2414
      %v2518 = vmul.f32 %v2486, %v2416
      %v2519 = vmul.f32 %v2487, %v2418
      %v2520 = vmul.f32 %v2488, %v2420
      %v2521 = vmul.f32 %v2489, %v2422
      %v2522 = vmul.f32 %v2490, %v2424
      %v2523 = vmul.f32 %v2491, %v2426
      %v2524 = vmul.f32 %v2492, %v2428
      %v2525 = vadd.f32 %v2493, 1.4214138
      %v2526 = vadd.f32 %v2494, 1.4214138
      %v2527 = vadd.f32 %v2495, 1.4214138
      %v2528 = vadd.f32 %v2496, 1.4214138
      %v2529 = vadd.f32 %v2497, 1.4214138
      %v2530 = vadd.f32 %v2498, 1.4214138
      %v2531 = vadd.f32 %v2499, 1.4214138
      %v2532 = vadd.f32 %v2500, 1.4214138
      %v2533 = vadd.f32 %v2501, 1.4214138
      %v2534 = vadd.f32 %v2502, 1.4214138
      %v2535 = vadd.f32 %v2503, 1.4214138
      %v2536 = vadd.f32 %v2504, 1.4214138
      %v2537 = vadd.f32 %v2505, 1.4214138
      %v2538 = vadd.f32 %v2506, 1.4214138
      %v2539 = vadd.f32 %v2507, 1.4214138
      %v2540 = vadd.f32 %v2508, 1.4214138
      %v2541 = vadd.f32 %v2509, 1.4214138
      %v2542 = vadd.f32 %v2510, 1.4214138
      %v2543 = vadd.f32 %v2511, 1.4214138
      %v2544 = vadd.f32 %v2512, 1.4214138
      %v2545 = vadd.f32 %v2513, 1.4214138
      %v2546 = vadd.f32 %v2514, 1.4214138
      %v2547 = vadd.f32 %v2515, 1.4214138
      %v2548 = vadd.f32 %v2516, 1.4214138
      %v2549 = vadd.f32 %v2517, 1.4214138
      %v2550 = vadd.f32 %v2518, 1.4214138
      %v2551 = vadd.f32 %v2519, 1.4214138
      %v2552 = vadd.f32 %v2520, 1.4214138
      %v2553 = vadd.f32 %v2521, 1.4214138
      %v2554 = vadd.f32 %v2522, 1.4214138
      %v2555 = vadd.f32 %v2523, 1.4214138
      %v2556 = vadd.f32 %v2524, 1.4214138
      %v2557 = vmul.f32 %v2525, %v2366
      %v2558 = vmul.f32 %v2526, %v2368
      %v2559 = vmul.f32 %v2527, %v2370
      %v2560 = vmul.f32 %v2528, %v2372
      %v2561 = vmul.f32 %v2529, %v2374
      %v2562 = vmul.f32 %v2530, %v2376
      %v2563 = vmul.f32 %v2531, %v2378
      %v2564 = vmul.f32 %v2532, %v2380
      %v2565 = vmul.f32 %v2533, %v2382
      %v2566 = vmul.f32 %v2534, %v2384
      %v2567 = vmul.f32 %v2535, %v2386
      %v2568 = vmul.f32 %v2536, %v2388
      %v2569 = vmul.f32 %v2537, %v2390
      %v2570 = vmul.f32 %v2538, %v2392
      %v2571 = vmul.f32 %v2539, %v2394
      %v2572 = vmul.f32 %v2540, %v2396
      %v2573 = vmul.f32 %v2541, %v2398
      %v2574 = vmul.f32 %v2542, %v2400
      %v2575 = vmul.f32 %v2543, %v2402
      %v2576 = vmul.f32 %v2544, %v2404
      %v2577 = vmul.f32 %v2545, %v2406
      %v2578 = vmul.f32 %v2546, %v2408
      %v2579 = vmul.f32 %v2547, %v2410
      %v2580 = vmul.f32 %v2548, %v2412
      %v2581 = vmul.f32 %v2549, %v2414
      %v2582 = vmul.f32 %v2550, %v2416
      %v2583 = vmul.f32 %v2551, %v2418
      %v2584 = vmul.f32 %v2552, %v2420
      %v2585 = vmul.f32 %v2553, %v2422
      %v2586 = vmul.f32 %v2554, %v2424
      %v2587 = vmul.f32 %v2555, %v2426
      %v2588 = vmul.f32 %v2556, %v2428
      %v2589 = vadd.f32 %v2557, -0.28449672
      %v2590 = vadd.f32 %v2558, -0.28449672
      %v2591 = vadd.f32 %v2559, -0.28449672
      %v2592 = vadd.f32 %v2560, -0.28449672
      %v2593 = vadd.f32 %v2561, -0.28449672
      %v2594 = vadd.f32 %v2562, -0.28449672
      %v2595 = vadd.f32 %v2563, -0.28449672
      %v2596 = vadd.f32 %v2564, -0.28449672
      %v2597 = vadd.f32 %v2565, -0.28449672
      %v2598 = vadd.f32 %v2566, -0.28449672
      %v2599 = vadd.f32 %v2567, -0.28449672
      %v2600 = vadd.f32 %v2568, -0.28449672
      %v2601 = vadd.f32 %v2569, -0.28449672
      %v2602 = vadd.f32 %v2570, -0.28449672
      %v2603 = vadd.f32 %v2571, -0.28449672
      %v2604 = vadd.f32 %v2572, -0.28449672
      %v2605 = vadd.f32 %v2573, -0.28449672
      %v2606 = vadd.f32 %v2574, -0.28449672
      %v2607 = vadd.f32 %v2575, -0.28449672
      %v2608 = vadd.f32 %v2576, -0.28449672
      %v2609 = vadd.f32 %v2577, -0.28449672
      %v2610 = vadd.f32 %v2578, -0.28449672
      %v2611 = vadd.f32 %v2579, -0.28449672
      %v2612 = vadd.f32 %v2580, -0.28449672
      %v2613 = vadd.f32 %v2581, -0.28449672
      %v2614 = vadd.f32 %v2582, -0.28449672
      %v2615 = vadd.f32 %v2583, -0.28449672
      %v2616 = vadd.f32 %v2584, -0.28449672
      %v2617 = vadd.f32 %v2585, -0.28449672
      %v2618 = vadd.f32 %v2586, -0.28449672
      %v2619 = vadd.f32 %v2587, -0.28449672
      %v2620 = vadd.f32 %v2588, -0.28449672
      %v2621 = vmul.f32 %v2589, %v2366
      %v2622 = vmul.f32 %v2590, %v2368
      %v2623 = vmul.f32 %v2591, %v2370
      %v2624 = vmul.f32 %v2592, %v2372
      %v2625 = vmul.f32 %v2593, %v2374
      %v2626 = vmul.f32 %v2594, %v2376
      %v2627 = vmul.f32 %v2595, %v2378
      %v2628 = vmul.f32 %v2596, %v2380
      %v2629 = vmul.f32 %v2597, %v2382
      %v2630 = vmul.f32 %v2598, %v2384
      %v2631 = vmul.f32 %v2599, %v2386
      %v2632 = vmul.f32 %v2600, %v2388
      %v2633 = vmul.f32 %v2601, %v2390
      %v2634 = vmul.f32 %v2602, %v2392
      %v2635 = vmul.f32 %v2603, %v2394
      %v2636 = vmul.f32 %v2604, %v2396
      %v2637 = vmul.f32 %v2605, %v2398
      %v2638 = vmul.f32 %v2606, %v2400
      %v2639 = vmul.f32 %v2607, %v2402
      %v2640 = vmul.f32 %v2608, %v2404
      %v2641 = vmul.f32 %v2609, %v2406
      %v2642 = vmul.f32 %v2610, %v2408
      %v2643 = vmul.f32 %v2611, %v2410
      %v2644 = vmul.f32 %v2612, %v2412
      %v2645 = vmul.f32 %v2613, %v2414
      %v2646 = vmul.f32 %v2614, %v2416
      %v2647 = vmul.f32 %v2615, %v2418
      %v2648 = vmul.f32 %v2616, %v2420
      %v2649 = vmul.f32 %v2617, %v2422
      %v2650 = vmul.f32 %v2618, %v2424
      %v2651 = vmul.f32 %v2619, %v2426
      %v2652 = vmul.f32 %v2620, %v2428
      %v2653 = vadd.f32 %v2621, 0.2548296
      %v2654 = vadd.f32 %v2622, 0.2548296
      %v2655 = vadd.f32 %v2623, 0.2548296
      %v2656 = vadd.f32 %v2624, 0.2548296
      %v2657 = vadd.f32 %v2625, 0.2548296
      %v2658 = vadd.f32 %v2626, 0.2548296
      %v2659 = vadd.f32 %v2627, 0.2548296
      %v2660 = vadd.f32 %v2628, 0.2548296
      %v2661 = vadd.f32 %v2629, 0.2548296
      %v2662 = vadd.f32 %v2630, 0.2548296
      %v2663 = vadd.f32 %v2631, 0.2548296
      %v2664 = vadd.f32 %v2632, 0.2548296
      %v2665 = vadd.f32 %v2633, 0.2548296
      %v2666 = vadd.f32 %v2634, 0.2548296
      %v2667 = vadd.f32 %v2635, 0.2548296
      %v2668 = vadd.f32 %v2636, 0.2548296
      %v2669 = vadd.f32 %v2637, 0.2548296
      %v2670 = vadd.f32 %v2638, 0.2548296
      %v2671 = vadd.f32 %v2639, 0.2548296
      %v2672 = vadd.f32 %v2640, 0.2548296
      %v2673 = vadd.f32 %v2641, 0.2548296
      %v2674 = vadd.f32 %v2642, 0.2548296
      %v2675 = vadd.f32 %v2643, 0.2548296
      %v2676 = vadd.f32 %v2644, 0.2548296
      %v2677 = vadd.f32 %v2645, 0.2548296
      %v2678 = vadd.f32 %v2646, 0.2548296
      %v2679 = vadd.f32 %v2647, 0.2548296
      %v2680 = vadd.f32 %v2648, 0.2548296
      %v2681 = vadd.f32 %v2649, 0.2548296
      %v2682 = vadd.f32 %v2650, 0.2548296
      %v2683 = vadd.f32 %v2651, 0.2548296
      %v2684 = vadd.f32 %v2652, 0.2548296
      %v2685 = vmul.f32 %v2653, %v2366
      %v2686 = vmul.f32 %v2654, %v2368
      %v2687 = vmul.f32 %v2655, %v2370
      %v2688 = vmul.f32 %v2656, %v2372
      %v2689 = vmul.f32 %v2657, %v2374
      %v2690 = vmul.f32 %v2658, %v2376
      %v2691 = vmul.f32 %v2659, %v2378
      %v2692 = vmul.f32 %v2660, %v2380
      %v2693 = vmul.f32 %v2661, %v2382
      %v2694 = vmul.f32 %v2662, %v2384
      %v2695 = vmul.f32 %v2663, %v2386
      %v2696 = vmul.f32 %v2664, %v2388
      %v2697 = vmul.f32 %v2665, %v2390
      %v2698 = vmul.f32 %v2666, %v2392
      %v2699 = vmul.f32 %v2667, %v2394
      %v2700 = vmul.f32 %v2668, %v2396
      %v2701 = vmul.f32 %v2669, %v2398
      %v2702 = vmul.f32 %v2670, %v2400
      %v2703 = vmul.f32 %v2671, %v2402
      %v2704 = vmul.f32 %v2672, %v2404
      %v2705 = vmul.f32 %v2673, %v2406
      %v2706 = vmul.f32 %v2674, %v2408
      %v2707 = vmul.f32 %v2675, %v2410
      %v2708 = vmul.f32 %v2676, %v2412
      %v2709 = vmul.f32 %v2677, %v2414
      %v2710 = vmul.f32 %v2678, %v2416
      %v2711 = vmul.f32 %v2679, %v2418
      %v2712 = vmul.f32 %v2680, %v2420
      %v2713 = vmul.f32 %v2681, %v2422
      %v2714 = vmul.f32 %v2682, %v2424
      %v2715 = vmul.f32 %v2683, %v2426
      %v2716 = vmul.f32 %v2684, %v2428
      %v2717 = vsub.f32 0.0, %v2269
      %v2718 = vsub.f32 0.0, %v2270
      %v2719 = vsub.f32 0.0, %v2271
      %v2720 = vsub.f32 0.0, %v2272
      %v2721 = vsub.f32 0.0, %v2273
      %v2722 = vsub.f32 0.0, %v2274
      %v2723 = vsub.f32 0.0, %v2275
      %v2724 = vsub.f32 0.0, %v2276
      %v2725 = vsub.f32 0.0, %v2277
      %v2726 = vsub.f32 0.0, %v2278
      %v2727 = vsub.f32 0.0, %v2279
      %v2728 = vsub.f32 0.0, %v2280
      %v2729 = vsub.f32 0.0, %v2281
      %v2730 = vsub.f32 0.0, %v2282
      %v2731 = vsub.f32 0.0, %v2283
      %v2732 = vsub.f32 0.0, %v2284
      %v2733 = vsub.f32 0.0, %v2285
      %v2734 = vsub.f32 0.0, %v2286
      %v2735 = vsub.f32 0.0, %v2287
      %v2736 = vsub.f32 0.0, %v2288
      %v2737 = vsub.f32 0.0, %v2289
      %v2738 = vsub.f32 0.0, %v2290
      %v2739 = vsub.f32 0.0, %v2291
      %v2740 = vsub.f32 0.0, %v2292
      %v2741 = vsub.f32 0.0, %v2293
      %v2742 = vsub.f32 0.0, %v2294
      %v2743 = vsub.f32 0.0, %v2295
      %v2744 = vsub.f32 0.0, %v2296
      %v2745 = vsub.f32 0.0, %v2297
      %v2746 = vsub.f32 0.0, %v2298
      %v2747 = vsub.f32 0.0, %v2299
      %v2748 = vsub.f32 0.0, %v2300
      %v2749 = vmul.f32 %v2717, %v2269
      %v2750 = vmul.f32 %v2718, %v2270
      %v2751 = vmul.f32 %v2719, %v2271
      %v2752 = vmul.f32 %v2720, %v2272
      %v2753 = vmul.f32 %v2721, %v2273
      %v2754 = vmul.f32 %v2722, %v2274
      %v2755 = vmul.f32 %v2723, %v2275
      %v2756 = vmul.f32 %v2724, %v2276
      %v2757 = vmul.f32 %v2725, %v2277
      %v2758 = vmul.f32 %v2726, %v2278
      %v2759 = vmul.f32 %v2727, %v2279
      %v2760 = vmul.f32 %v2728, %v2280
      %v2761 = vmul.f32 %v2729, %v2281
      %v2762 = vmul.f32 %v2730, %v2282
      %v2763 = vmul.f32 %v2731, %v2283
      %v2764 = vmul.f32 %v2732, %v2284
      %v2765 = vmul.f32 %v2733, %v2285
      %v2766 = vmul.f32 %v2734, %v2286
      %v2767 = vmul.f32 %v2735, %v2287
      %v2768 = vmul.f32 %v2736, %v2288
      %v2769 = vmul.f32 %v2737, %v2289
      %v2770 = vmul.f32 %v2738, %v2290
      %v2771 = vmul.f32 %v2739, %v2291
      %v2772 = vmul.f32 %v2740, %v2292
      %v2773 = vmul.f32 %v2741, %v2293
      %v2774 = vmul.f32 %v2742, %v2294
      %v2775 = vmul.f32 %v2743, %v2295
      %v2776 = vmul.f32 %v2744, %v2296
      %v2777 = vmul.f32 %v2745, %v2297
      %v2778 = vmul.f32 %v2746, %v2298
      %v2779 = vmul.f32 %v2747, %v2299
      %v2780 = vmul.f32 %v2748, %v2300
      %v2781 = vmul.f32 %v2749, 1.442695
      %v2782 = vpow.pop %v2781
      %v2783 = vmul.f32 %v2750, 1.442695
      %v2784 = vpow.pop %v2783
      %v2785 = vmul.f32 %v2751, 1.442695
      %v2786 = vpow.pop %v2785
      %v2787 = vmul.f32 %v2752, 1.442695
      %v2788 = vpow.pop %v2787
      %v2789 = vmul.f32 %v2753, 1.442695
      %v2790 = vpow.pop %v2789
      %v2791 = vmul.f32 %v2754, 1.442695
      %v2792 = vpow.pop %v2791
      %v2793 = vmul.f32 %v2755, 1.442695
      %v2794 = vpow.pop %v2793
      %v2795 = vmul.f32 %v2756, 1.442695
      %v2796 = vpow.pop %v2795
      %v2797 = vmul.f32 %v2757, 1.442695
      %v2798 = vpow.pop %v2797
      %v2799 = vmul.f32 %v2758, 1.442695
      %v2800 = vpow.pop %v2799
      %v2801 = vmul.f32 %v2759, 1.442695
      %v2802 = vpow.pop %v2801
      %v2803 = vmul.f32 %v2760, 1.442695
      %v2804 = vpow.pop %v2803
      %v2805 = vmul.f32 %v2761, 1.442695
      %v2806 = vpow.pop %v2805
      %v2807 = vmul.f32 %v2762, 1.442695
      %v2808 = vpow.pop %v2807
      %v2809 = vmul.f32 %v2763, 1.442695
      %v2810 = vpow.pop %v2809
      %v2811 = vmul.f32 %v2764, 1.442695
      %v2812 = vpow.pop %v2811
      %v2813 = vmul.f32 %v2765, 1.442695
      %v2814 = vpow.pop %v2813
      %v2815 = vmul.f32 %v2766, 1.442695
      %v2816 = vpow.pop %v2815
      %v2817 = vmul.f32 %v2767, 1.442695
      %v2818 = vpow.pop %v2817
      %v2819 = vmul.f32 %v2768, 1.442695
      %v2820 = vpow.pop %v2819
      %v2821 = vmul.f32 %v2769, 1.442695
      %v2822 = vpow.pop %v2821
      %v2823 = vmul.f32 %v2770, 1.442695
      %v2824 = vpow.pop %v2823
      %v2825 = vmul.f32 %v2771, 1.442695
      %v2826 = vpow.pop %v2825
      %v2827 = vmul.f32 %v2772, 1.442695
      %v2828 = vpow.pop %v2827
      %v2829 = vmul.f32 %v2773, 1.442695
      %v2830 = vpow.pop %v2829
      %v2831 = vmul.f32 %v2774, 1.442695
      %v2832 = vpow.pop %v2831
      %v2833 = vmul.f32 %v2775, 1.442695
      %v2834 = vpow.pop %v2833
      %v2835 = vmul.f32 %v2776, 1.442695
      %v2836 = vpow.pop %v2835
      %v2837 = vmul.f32 %v2777, 1.442695
      %v2838 = vpow.pop %v2837
      %v2839 = vmul.f32 %v2778, 1.442695
      %v2840 = vpow.pop %v2839
      %v2841 = vmul.f32 %v2779, 1.442695
      %v2842 = vpow.pop %v2841
      %v2843 = vmul.f32 %v2780, 1.442695
      %v2844 = vpow.pop %v2843
      %v2845 = vmul.f32 %v2685, %v2782
      %v2846 = vmul.f32 %v2686, %v2784
      %v2847 = vmul.f32 %v2687, %v2786
      %v2848 = vmul.f32 %v2688, %v2788
      %v2849 = vmul.f32 %v2689, %v2790
      %v2850 = vmul.f32 %v2690, %v2792
      %v2851 = vmul.f32 %v2691, %v2794
      %v2852 = vmul.f32 %v2692, %v2796
      %v2853 = vmul.f32 %v2693, %v2798
      %v2854 = vmul.f32 %v2694, %v2800
      %v2855 = vmul.f32 %v2695, %v2802
      %v2856 = vmul.f32 %v2696, %v2804
      %v2857 = vmul.f32 %v2697, %v2806
      %v2858 = vmul.f32 %v2698, %v2808
      %v2859 = vmul.f32 %v2699, %v2810
      %v2860 = vmul.f32 %v2700, %v2812
      %v2861 = vmul.f32 %v2701, %v2814
      %v2862 = vmul.f32 %v2702, %v2816
      %v2863 = vmul.f32 %v2703, %v2818
      %v2864 = vmul.f32 %v2704, %v2820
      %v2865 = vmul.f32 %v2705, %v2822
      %v2866 = vmul.f32 %v2706, %v2824
      %v2867 = vmul.f32 %v2707, %v2826
      %v2868 = vmul.f32 %v2708, %v2828
      %v2869 = vmul.f32 %v2709, %v2830
      %v2870 = vmul.f32 %v2710, %v2832
      %v2871 = vmul.f32 %v2711, %v2834
      %v2872 = vmul.f32 %v2712, %v2836
      %v2873 = vmul.f32 %v2713, %v2838
      %v2874 = vmul.f32 %v2714, %v2840
      %v2875 = vmul.f32 %v2715, %v2842
      %v2876 = vmul.f32 %v2716, %v2844
      %v2877 = vsub.f32 1.0, %v2845
      %v2878 = vsub.f32 1.0, %v2846
      %v2879 = vsub.f32 1.0, %v2847
      %v2880 = vsub.f32 1.0, %v2848
      %v2881 = vsub.f32 1.0, %v2849
      %v2882 = vsub.f32 1.0, %v2850
      %v2883 = vsub.f32 1.0, %v2851
      %v2884 = vsub.f32 1.0, %v2852
      %v2885 = vsub.f32 1.0, %v2853
      %v2886 = vsub.f32 1.0, %v2854
      %v2887 = vsub.f32 1.0, %v2855
      %v2888 = vsub.f32 1.0, %v2856
      %v2889 = vsub.f32 1.0, %v2857
      %v2890 = vsub.f32 1.0, %v2858
      %v2891 = vsub.f32 1.0, %v2859
      %v2892 = vsub.f32 1.0, %v2860
      %v2893 = vsub.f32 1.0, %v2861
      %v2894 = vsub.f32 1.0, %v2862
      %v2895 = vsub.f32 1.0, %v2863
      %v2896 = vsub.f32 1.0, %v2864
      %v2897 = vsub.f32 1.0, %v2865
      %v2898 = vsub.f32 1.0, %v2866
      %v2899 = vsub.f32 1.0, %v2867
      %v2900 = vsub.f32 1.0, %v2868
      %v2901 = vsub.f32 1.0, %v2869
      %v2902 = vsub.f32 1.0, %v2870
      %v2903 = vsub.f32 1.0, %v2871
      %v2904 = vsub.f32 1.0, %v2872
      %v2905 = vsub.f32 1.0, %v2873
      %v2906 = vsub.f32 1.0, %v2874
      %v2907 = vsub.f32 1.0, %v2875
      %v2908 = vsub.f32 1.0, %v2876
      %v2909 = vmul.f32 %v2237, %v2877
      %v2910 = vmul.f32 %v2238, %v2878
      %v2911 = vmul.f32 %v2239, %v2879
      %v2912 = vmul.f32 %v2240, %v2880
      %v2913 = vmul.f32 %v2241, %v2881
      %v2914 = vmul.f32 %v2242, %v2882
      %v2915 = vmul.f32 %v2243, %v2883
      %v2916 = vmul.f32 %v2244, %v2884
      %v2917 = vmul.f32 %v2245, %v2885
      %v2918 = vmul.f32 %v2246, %v2886
      %v2919 = vmul.f32 %v2247, %v2887
      %v2920 = vmul.f32 %v2248, %v2888
      %v2921 = vmul.f32 %v2249, %v2889
      %v2922 = vmul.f32 %v2250, %v2890
      %v2923 = vmul.f32 %v2251, %v2891
      %v2924 = vmul.f32 %v2252, %v2892
      %v2925 = vmul.f32 %v2253, %v2893
      %v2926 = vmul.f32 %v2254, %v2894
      %v2927 = vmul.f32 %v2255, %v2895
      %v2928 = vmul.f32 %v2256, %v2896
      %v2929 = vmul.f32 %v2257, %v2897
      %v2930 = vmul.f32 %v2258, %v2898
      %v2931 = vmul.f32 %v2259, %v2899
      %v2932 = vmul.f32 %v2260, %v2900
      %v2933 = vmul.f32 %v2261, %v2901
      %v2934 = vmul.f32 %v2262, %v2902
      %v2935 = vmul.f32 %v2263, %v2903
      %v2936 = vmul.f32 %v2264, %v2904
      %v2937 = vmul.f32 %v2265, %v2905
      %v2938 = vmul.f32 %v2266, %v2906
      %v2939 = vmul.f32 %v2267, %v2907
      %v2940 = vmul.f32 %v2268, %v2908
      %v2941 = vadd.f32 %v2909, 1.0
      %v2942 = vadd.f32 %v2910, 1.0
      %v2943 = vadd.f32 %v2911, 1.0
      %v2944 = vadd.f32 %v2912, 1.0
      %v2945 = vadd.f32 %v2913, 1.0
      %v2946 = vadd.f32 %v2914, 1.0
      %v2947 = vadd.f32 %v2915, 1.0
      %v2948 = vadd.f32 %v2916, 1.0
      %v2949 = vadd.f32 %v2917, 1.0
      %v2950 = vadd.f32 %v2918, 1.0
      %v2951 = vadd.f32 %v2919, 1.0
      %v2952 = vadd.f32 %v2920, 1.0
      %v2953 = vadd.f32 %v2921, 1.0
      %v2954 = vadd.f32 %v2922, 1.0
      %v2955 = vadd.f32 %v2923, 1.0
      %v2956 = vadd.f32 %v2924, 1.0
      %v2957 = vadd.f32 %v2925, 1.0
      %v2958 = vadd.f32 %v2926, 1.0
      %v2959 = vadd.f32 %v2927, 1.0
      %v2960 = vadd.f32 %v2928, 1.0
      %v2961 = vadd.f32 %v2929, 1.0
      %v2962 = vadd.f32 %v2930, 1.0
      %v2963 = vadd.f32 %v2931, 1.0
      %v2964 = vadd.f32 %v2932, 1.0
      %v2965 = vadd.f32 %v2933, 1.0
      %v2966 = vadd.f32 %v2934, 1.0
      %v2967 = vadd.f32 %v2935, 1.0
      %v2968 = vadd.f32 %v2936, 1.0
      %v2969 = vadd.f32 %v2937, 1.0
      %v2970 = vadd.f32 %v2938, 1.0
      %v2971 = vadd.f32 %v2939, 1.0
      %v2972 = vadd.f32 %v2940, 1.0
      %v2973 = vmul.f32 %v2141, %v2941
      %v2974 = vmul.f32 %v2142, %v2942
      %v2975 = vmul.f32 %v2143, %v2943
      %v2976 = vmul.f32 %v2144, %v2944
      %v2977 = vmul.f32 %v2145, %v2945
      %v2978 = vmul.f32 %v2146, %v2946
      %v2979 = vmul.f32 %v2147, %v2947
      %v2980 = vmul.f32 %v2148, %v2948
      %v2981 = vmul.f32 %v2149, %v2949
      %v2982 = vmul.f32 %v2150, %v2950
      %v2983 = vmul.f32 %v2151, %v2951
      %v2984 = vmul.f32 %v2152, %v2952
      %v2985 = vmul.f32 %v2153, %v2953
      %v2986 = vmul.f32 %v2154, %v2954
      %v2987 = vmul.f32 %v2155, %v2955
      %v2988 = vmul.f32 %v2156, %v2956
      %v2989 = vmul.f32 %v2157, %v2957
      %v2990 = vmul.f32 %v2158, %v2958
      %v2991 = vmul.f32 %v2159, %v2959
      %v2992 = vmul.f32 %v2160, %v2960
      %v2993 = vmul.f32 %v2161, %v2961
      %v2994 = vmul.f32 %v2162, %v2962
      %v2995 = vmul.f32 %v2163, %v2963
      %v2996 = vmul.f32 %v2164, %v2964
      %v2997 = vmul.f32 %v2165, %v2965
      %v2998 = vmul.f32 %v2166, %v2966
      %v2999 = vmul.f32 %v2167, %v2967
      %v3000 = vmul.f32 %v2168, %v2968
      %v3001 = vmul.f32 %v2169, %v2969
      %v3002 = vmul.f32 %v2170, %v2970
      %v3003 = vmul.f32 %v2171, %v2971
      %v3004 = vmul.f32 %v2172, %v2972
      %3005 = vst.msk [vmem:[#allocation2] sm:$0xff] %vm1539, 0.0
      %3006 = vst.msk [vmem:[#allocation2 + $0x8] sm:$0xff] %vm1539, 0.0
      %vm3007 = vcmask 58368
      %3008 = vst.msk [vmem:[#allocation2 + $0x10] sm:$0x3] %vm3007, 0.0
      %3009 = vst.msk [vmem:[#allocation2 + $0x18] sm:$0xff] %vm1539, 0.0
      %3010 = vst.msk [vmem:[#allocation2 + $0x20] sm:$0xff] %vm1539, 0.0
      %3011 = vst.msk [vmem:[#allocation2 + $0x28] sm:$0x3] %vm3007, 0.0
      %3012 = vst.msk [vmem:[#allocation2 + $0x30] sm:$0xff] %vm1539, 0.0
      %3013 = vst.msk [vmem:[#allocation2 + $0x38] sm:$0xff] %vm1539, 0.0
      %3014 = vst.msk [vmem:[#allocation2 + $0x40] sm:$0x3] %vm3007, 0.0
      %3015 = vst.msk [vmem:[#allocation2 + $0x48] sm:$0xff] %vm1539, 0.0
      %3016 = vst.msk [vmem:[#allocation2 + $0x50] sm:$0xff] %vm1539, 0.0
      %3017 = vst.msk [vmem:[#allocation2 + $0x58] sm:$0x3] %vm3007, 0.0
      %3018 = vst.msk [vmem:[#allocation2 + $0x60] sm:$0xff] %vm1539, 0.0
      %3019 = vst.msk [vmem:[#allocation2 + $0x68] sm:$0xff] %vm1539, 0.0
      %3020 = vst.msk [vmem:[#allocation2 + $0x70] sm:$0x3] %vm3007, 0.0
      %3021 = vst.msk [vmem:[#allocation2 + $0x78] sm:$0xff] %vm1539, 0.0
      %3022 = vst.msk [vmem:[#allocation2 + $0x80] sm:$0xff] %vm1539, 0.0
      %3023 = vst.msk [vmem:[#allocation2 + $0x88] sm:$0x3] %vm3007, 0.0
      %3024 = vst.msk [vmem:[#allocation2 + $0x90] sm:$0xff] %vm1539, 0.0
      %3025 = vst.msk [vmem:[#allocation2 + $0x98] sm:$0xff] %vm1539, 0.0
      %3026 = vst.msk [vmem:[#allocation2 + $0xa0] sm:$0x3] %vm3007, 0.0
      %3027 = vst.msk [vmem:[#allocation2 + $0xa8] sm:$0xff] %vm1539, 0.0
      %3028 = vst.msk [vmem:[#allocation2 + $0xb0] sm:$0xff] %vm1539, 0.0
      %3029 = vst.msk [vmem:[#allocation2 + $0xb8] sm:$0x3] %vm3007, 0.0
      %3030 = vst.msk [vmem:[#allocation2 + $0xc0] sm:$0xff] %vm1539, 0.0
      %3031 = vst.msk [vmem:[#allocation2 + $0xc8] sm:$0xff] %vm1539, 0.0
      %3032 = vst.msk [vmem:[#allocation2 + $0xd0] sm:$0x3] %vm3007, 0.0
      %3033 = vst.msk [vmem:[#allocation2 + $0xd8] sm:$0xff] %vm1539, 0.0
      %3034 = vst.msk [vmem:[#allocation2 + $0xe0] sm:$0xff] %vm1539, 0.0
      %3035 = vst.msk [vmem:[#allocation2 + $0xe8] sm:$0x3] %vm3007, 0.0
      %3036 = vst.msk [vmem:[#allocation2 + $0xf0] sm:$0xff] %vm1539, 0.0
      %3037 = vst.msk [vmem:[#allocation2 + $0xf8] sm:$0xff] %vm1539, 0.0
      %3038 = vst.msk [vmem:[#allocation2 + $0x100] sm:$0x3] %vm3007, 0.0
      %3039 = vst.msk [vmem:[#allocation2 + $0x108] sm:$0xff] %vm1539, 0.0
      %3040 = vst.msk [vmem:[#allocation2 + $0x110] sm:$0xff] %vm1539, 0.0
      %3041 = vst.msk [vmem:[#allocation2 + $0x118] sm:$0x3] %vm3007, 0.0
      %3042 = vst.msk [vmem:[#allocation2 + $0x120] sm:$0xff] %vm1539, 0.0
      %3043 = vst.msk [vmem:[#allocation2 + $0x128] sm:$0xff] %vm1539, 0.0
      %3044 = vst.msk [vmem:[#allocation2 + $0x130] sm:$0x3] %vm3007, 0.0
      %3045 = vst.msk [vmem:[#allocation2 + $0x138] sm:$0xff] %vm1539, 0.0
      %3046 = vst.msk [vmem:[#allocation2 + $0x140] sm:$0xff] %vm1539, 0.0
      %3047 = vst.msk [vmem:[#allocation2 + $0x148] sm:$0x3] %vm3007, 0.0
      %3048 = vst.msk [vmem:[#allocation2 + $0x150] sm:$0xff] %vm1539, 0.0
      %3049 = vst.msk [vmem:[#allocation2 + $0x158] sm:$0xff] %vm1539, 0.0
      %3050 = vst.msk [vmem:[#allocation2 + $0x160] sm:$0x3] %vm3007, 0.0
      %3051 = vst.msk [vmem:[#allocation2 + $0x168] sm:$0xff] %vm1539, 0.0
      %3052 = vst.msk [vmem:[#allocation2 + $0x170] sm:$0xff] %vm1539, 0.0
      %3053 = vst.msk [vmem:[#allocation2 + $0x178] sm:$0x3] %vm3007, 0.0
      %3054 = vst.msk [vmem:[#allocation2 + $0x180] sm:$0xff] %vm1539, 0.0
      %3055 = vst.msk [vmem:[#allocation2 + $0x188] sm:$0xff] %vm1539, 0.0
      %3056 = vst.msk [vmem:[#allocation2 + $0x190] sm:$0x3] %vm3007, 0.0
      %3057 = vst.msk [vmem:[#allocation2 + $0x198] sm:$0xff] %vm1539, 0.0
      %3058 = vst.msk [vmem:[#allocation2 + $0x1a0] sm:$0xff] %vm1539, 0.0
      %3059 = vst.msk [vmem:[#allocation2 + $0x1a8] sm:$0x3] %vm3007, 0.0
      %s3060 = scalar_lea.vmem [#allocation2], 24
      %3061 = vst.msk [vmem:[%s3060 + $0x1] sm:$0xff] %vm1539, %v2973
      %3062 = vst.msk [vmem:[%s3060 + $0x9] sm:$0xff] %vm1539, %v2974
      %3063 = vst.msk [vmem:[%s3060 + $0x19] sm:$0xff] %vm1539, %v2975
      %3064 = vst.msk [vmem:[%s3060 + $0x21] sm:$0xff] %vm1539, %v2976
      %3065 = vst.msk [vmem:[%s3060 + $0x31] sm:$0xff] %vm1539, %v2977
      %3066 = vst.msk [vmem:[%s3060 + $0x39] sm:$0xff] %vm1539, %v2978
      %3067 = vst.msk [vmem:[%s3060 + $0x49] sm:$0xff] %vm1539, %v2979
      %3068 = vst.msk [vmem:[%s3060 + $0x51] sm:$0xff] %vm1539, %v2980
      %3069 = vst.msk [vmem:[%s3060 + $0x61] sm:$0xff] %vm1539, %v2981
      %3070 = vst.msk [vmem:[%s3060 + $0x69] sm:$0xff] %vm1539, %v2982
      %3071 = vst.msk [vmem:[%s3060 + $0x79] sm:$0xff] %vm1539, %v2983
      %3072 = vst.msk [vmem:[%s3060 + $0x81] sm:$0xff] %vm1539, %v2984
      %3073 = vst.msk [vmem:[%s3060 + $0x91] sm:$0xff] %vm1539, %v2985
      %3074 = vst.msk [vmem:[%s3060 + $0x99] sm:$0xff] %vm1539, %v2986
      %3075 = vst.msk [vmem:[%s3060 + $0xa9] sm:$0xff] %vm1539, %v2987
      %3076 = vst.msk [vmem:[%s3060 + $0xb1] sm:$0xff] %vm1539, %v2988
      %3077 = vst.msk [vmem:[%s3060 + $0xc1] sm:$0xff] %vm1539, %v2989
      %3078 = vst.msk [vmem:[%s3060 + $0xc9] sm:$0xff] %vm1539, %v2990
      %3079 = vst.msk [vmem:[%s3060 + $0xd9] sm:$0xff] %vm1539, %v2991
      %3080 = vst.msk [vmem:[%s3060 + $0xe1] sm:$0xff] %vm1539, %v2992
      %3081 = vst.msk [vmem:[%s3060 + $0xf1] sm:$0xff] %vm1539, %v2993
      %3082 = vst.msk [vmem:[%s3060 + $0xf9] sm:$0xff] %vm1539, %v2994
      %3083 = vst.msk [vmem:[%s3060 + $0x109] sm:$0xff] %vm1539, %v2995
      %3084 = vst.msk [vmem:[%s3060 + $0x111] sm:$0xff] %vm1539, %v2996
      %3085 = vst.msk [vmem:[%s3060 + $0x121] sm:$0xff] %vm1539, %v2997
      %3086 = vst.msk [vmem:[%s3060 + $0x129] sm:$0xff] %vm1539, %v2998
      %3087 = vst.msk [vmem:[%s3060 + $0x139] sm:$0xff] %vm1539, %v2999
      %3088 = vst.msk [vmem:[%s3060 + $0x141] sm:$0xff] %vm1539, %v3000
      %3089 = vst.msk [vmem:[%s3060 + $0x151] sm:$0xff] %vm1539, %v3001
      %3090 = vst.msk [vmem:[%s3060 + $0x159] sm:$0xff] %vm1539, %v3002
      %3091 = vst.msk [vmem:[%s3060 + $0x169] sm:$0xff] %vm1539, %v3003
      %3092 = vst.msk [vmem:[%s3060 + $0x171] sm:$0xff] %vm1539, %v3004
      %v3093 = vld [vmem:[#allocation2] sm:$0xff]
      %v3094 = vld [vmem:[#allocation2 + $0x8] sm:$0xff]
      %v3095 = vld [vmem:[#allocation2 + $0x18] sm:$0xff]
      %v3096 = vld [vmem:[#allocation2 + $0x20] sm:$0xff]
      %v3097 = vld [vmem:[#allocation2 + $0x30] sm:$0xff]
      %v3098 = vld [vmem:[#allocation2 + $0x38] sm:$0xff]
      %v3099 = vld [vmem:[#allocation2 + $0x48] sm:$0xff]
      %v3100 = vld [vmem:[#allocation2 + $0x50] sm:$0xff]
      %v3101 = vld [vmem:[#allocation2 + $0x60] sm:$0xff]
      %v3102 = vld [vmem:[#allocation2 + $0x68] sm:$0xff]
      %v3103 = vld [vmem:[#allocation2 + $0x78] sm:$0xff]
      %v3104 = vld [vmem:[#allocation2 + $0x80] sm:$0xff]
      %v3105 = vld [vmem:[#allocation2 + $0x90] sm:$0xff]
      %v3106 = vld [vmem:[#allocation2 + $0x98] sm:$0xff]
      %v3107 = vld [vmem:[#allocation2 + $0xa8] sm:$0xff]
      %v3108 = vld [vmem:[#allocation2 + $0xb0] sm:$0xff]
      %v3109 = vld [vmem:[#allocation2 + $0xc0] sm:$0xff]
      %v3110 = vld [vmem:[#allocation2 + $0xc8] sm:$0xff]
      %v3111 = vld [vmem:[#allocation2 + $0xd8] sm:$0xff]
      %v3112 = vld [vmem:[#allocation2 + $0xe0] sm:$0xff]
      %v3113 = vld [vmem:[#allocation2 + $0xf0] sm:$0xff]
      %v3114 = vld [vmem:[#allocation2 + $0xf8] sm:$0xff]
      %v3115 = vld [vmem:[#allocation2 + $0x108] sm:$0xff]
      %v3116 = vld [vmem:[#allocation2 + $0x110] sm:$0xff]
      %v3117 = vld [vmem:[#allocation2 + $0x120] sm:$0xff]
      %v3118 = vld [vmem:[#allocation2 + $0x128] sm:$0xff]
      %v3119 = vld [vmem:[#allocation2 + $0x138] sm:$0xff]
      %v3120 = vld [vmem:[#allocation2 + $0x140] sm:$0xff]
      %v3121 = vld [vmem:[#allocation2 + $0x150] sm:$0xff]
      %v3122 = vld [vmem:[#allocation2 + $0x158] sm:$0xff]
      %v3123 = vld [vmem:[#allocation2 + $0x168] sm:$0xff]
      %v3124 = vld [vmem:[#allocation2 + $0x170] sm:$0xff]
      %v3125 = vld [vmem:[#allocation2 + $0x1] sm:$0xff]
      %v3126 = vld [vmem:[#allocation2 + $0x9] sm:$0xff]
      %v3127 = vld [vmem:[#allocation2 + $0x19] sm:$0xff]
      %v3128 = vld [vmem:[#allocation2 + $0x21] sm:$0xff]
      %v3129 = vld [vmem:[#allocation2 + $0x31] sm:$0xff]
      %v3130 = vld [vmem:[#allocation2 + $0x39] sm:$0xff]
      %v3131 = vld [vmem:[#allocation2 + $0x49] sm:$0xff]
      %v3132 = vld [vmem:[#allocation2 + $0x51] sm:$0xff]
      %v3133 = vld [vmem:[#allocation2 + $0x61] sm:$0xff]
      %v3134 = vld [vmem:[#allocation2 + $0x69] sm:$0xff]
      %v3135 = vld [vmem:[#allocation2 + $0x79] sm:$0xff]
      %v3136 = vld [vmem:[#allocation2 + $0x81] sm:$0xff]
      %v3137 = vld [vmem:[#allocation2 + $0x91] sm:$0xff]
      %v3138 = vld [vmem:[#allocation2 + $0x99] sm:$0xff]
      %v3139 = vld [vmem:[#allocation2 + $0xa9] sm:$0xff]
      %v3140 = vld [vmem:[#allocation2 + $0xb1] sm:$0xff]
      %v3141 = vld [vmem:[#allocation2 + $0xc1] sm:$0xff]
      %v3142 = vld [vmem:[#allocation2 + $0xc9] sm:$0xff]
      %v3143 = vld [vmem:[#allocation2 + $0xd9] sm:$0xff]
      %v3144 = vld [vmem:[#allocation2 + $0xe1] sm:$0xff]
      %v3145 = vld [vmem:[#allocation2 + $0xf1] sm:$0xff]
      %v3146 = vld [vmem:[#allocation2 + $0xf9] sm:$0xff]
      %v3147 = vld [vmem:[#allocation2 + $0x109] sm:$0xff]
      %v3148 = vld [vmem:[#allocation2 + $0x111] sm:$0xff]
      %v3149 = vld [vmem:[#allocation2 + $0x121] sm:$0xff]
      %v3150 = vld [vmem:[#allocation2 + $0x129] sm:$0xff]
      %v3151 = vld [vmem:[#allocation2 + $0x139] sm:$0xff]
      %v3152 = vld [vmem:[#allocation2 + $0x141] sm:$0xff]
      %v3153 = vld [vmem:[#allocation2 + $0x151] sm:$0xff]
      %v3154 = vld [vmem:[#allocation2 + $0x159] sm:$0xff]
      %v3155 = vld [vmem:[#allocation2 + $0x169] sm:$0xff]
      %v3156 = vld [vmem:[#allocation2 + $0x171] sm:$0xff]
      %v3157 = vld [vmem:[#allocation2 + $0x2] sm:$0xff]
      %v3158 = vld [vmem:[#allocation2 + $0xa] sm:$0xff]
      %v3159 = vld [vmem:[#allocation2 + $0x1a] sm:$0xff]
      %v3160 = vld [vmem:[#allocation2 + $0x22] sm:$0xff]
      %v3161 = vld [vmem:[#allocation2 + $0x32] sm:$0xff]
      %v3162 = vld [vmem:[#allocation2 + $0x3a] sm:$0xff]
      %v3163 = vld [vmem:[#allocation2 + $0x4a] sm:$0xff]
      %v3164 = vld [vmem:[#allocation2 + $0x52] sm:$0xff]
      %v3165 = vld [vmem:[#allocation2 + $0x62] sm:$0xff]
      %v3166 = vld [vmem:[#allocation2 + $0x6a] sm:$0xff]
      %v3167 = vld [vmem:[#allocation2 + $0x7a] sm:$0xff]
      %v3168 = vld [vmem:[#allocation2 + $0x82] sm:$0xff]
      %v3169 = vld [vmem:[#allocation2 + $0x92] sm:$0xff]
      %v3170 = vld [vmem:[#allocation2 + $0x9a] sm:$0xff]
      %v3171 = vld [vmem:[#allocation2 + $0xaa] sm:$0xff]
      %v3172 = vld [vmem:[#allocation2 + $0xb2] sm:$0xff]
      %v3173 = vld [vmem:[#allocation2 + $0xc2] sm:$0xff]
      %v3174 = vld [vmem:[#allocation2 + $0xca] sm:$0xff]
      %v3175 = vld [vmem:[#allocation2 + $0xda] sm:$0xff]
      %v3176 = vld [vmem:[#allocation2 + $0xe2] sm:$0xff]
      %v3177 = vld [vmem:[#allocation2 + $0xf2] sm:$0xff]
      %v3178 = vld [vmem:[#allocation2 + $0xfa] sm:$0xff]
      %v3179 = vld [vmem:[#allocation2 + $0x10a] sm:$0xff]
      %v3180 = vld [vmem:[#allocation2 + $0x112] sm:$0xff]
      %v3181 = vld [vmem:[#allocation2 + $0x122] sm:$0xff]
      %v3182 = vld [vmem:[#allocation2 + $0x12a] sm:$0xff]
      %v3183 = vld [vmem:[#allocation2 + $0x13a] sm:$0xff]
      %v3184 = vld [vmem:[#allocation2 + $0x142] sm:$0xff]
      %v3185 = vld [vmem:[#allocation2 + $0x152] sm:$0xff]
      %v3186 = vld [vmem:[#allocation2 + $0x15a] sm:$0xff]
      %v3187 = vld [vmem:[#allocation2 + $0x16a] sm:$0xff]
      %v3188 = vld [vmem:[#allocation2 + $0x172] sm:$0xff]
      %v3189 = vld [vmem:[%s3060] sm:$0xff]
      %v3190 = vld [vmem:[%s3060 + $0x8] sm:$0xff]
      %v3191 = vld [vmem:[%s3060 + $0x18] sm:$0xff]
      %v3192 = vld [vmem:[%s3060 + $0x20] sm:$0xff]
      %v3193 = vld [vmem:[%s3060 + $0x30] sm:$0xff]
      %v3194 = vld [vmem:[%s3060 + $0x38] sm:$0xff]
      %v3195 = vld [vmem:[%s3060 + $0x48] sm:$0xff]
      %v3196 = vld [vmem:[%s3060 + $0x50] sm:$0xff]
      %v3197 = vld [vmem:[%s3060 + $0x60] sm:$0xff]
      %v3198 = vld [vmem:[%s3060 + $0x68] sm:$0xff]
      %v3199 = vld [vmem:[%s3060 + $0x78] sm:$0xff]
      %v3200 = vld [vmem:[%s3060 + $0x80] sm:$0xff]
      %v3201 = vld [vmem:[%s3060 + $0x90] sm:$0xff]
      %v3202 = vld [vmem:[%s3060 + $0x98] sm:$0xff]
      %v3203 = vld [vmem:[%s3060 + $0xa8] sm:$0xff]
      %v3204 = vld [vmem:[%s3060 + $0xb0] sm:$0xff]
      %v3205 = vld [vmem:[%s3060 + $0xc0] sm:$0xff]
      %v3206 = vld [vmem:[%s3060 + $0xc8] sm:$0xff]
      %v3207 = vld [vmem:[%s3060 + $0xd8] sm:$0xff]
      %v3208 = vld [vmem:[%s3060 + $0xe0] sm:$0xff]
      %v3209 = vld [vmem:[%s3060 + $0xf0] sm:$0xff]
      %v3210 = vld [vmem:[%s3060 + $0xf8] sm:$0xff]
      %v3211 = vld [vmem:[%s3060 + $0x108] sm:$0xff]
      %v3212 = vld [vmem:[%s3060 + $0x110] sm:$0xff]
      %v3213 = vld [vmem:[%s3060 + $0x120] sm:$0xff]
      %v3214 = vld [vmem:[%s3060 + $0x128] sm:$0xff]
      %v3215 = vld [vmem:[%s3060 + $0x138] sm:$0xff]
      %v3216 = vld [vmem:[%s3060 + $0x140] sm:$0xff]
      %v3217 = vld [vmem:[%s3060 + $0x150] sm:$0xff]
      %v3218 = vld [vmem:[%s3060 + $0x158] sm:$0xff]
      %v3219 = vld [vmem:[%s3060 + $0x168] sm:$0xff]
      %v3220 = vld [vmem:[%s3060 + $0x170] sm:$0xff]
      %v3221 = vld [vmem:[%s3060 + $0x1] sm:$0xff]
      %v3222 = vld [vmem:[%s3060 + $0x9] sm:$0xff]
      %v3223 = vld [vmem:[%s3060 + $0x19] sm:$0xff]
      %v3224 = vld [vmem:[%s3060 + $0x21] sm:$0xff]
      %v3225 = vld [vmem:[%s3060 + $0x31] sm:$0xff]
      %v3226 = vld [vmem:[%s3060 + $0x39] sm:$0xff]
      %v3227 = vld [vmem:[%s3060 + $0x49] sm:$0xff]
      %v3228 = vld [vmem:[%s3060 + $0x51] sm:$0xff]
      %v3229 = vld [vmem:[%s3060 + $0x61] sm:$0xff]
      %v3230 = vld [vmem:[%s3060 + $0x69] sm:$0xff]
      %v3231 = vld [vmem:[%s3060 + $0x79] sm:$0xff]
      %v3232 = vld [vmem:[%s3060 + $0x81] sm:$0xff]
      %v3233 = vld [vmem:[%s3060 + $0x91] sm:$0xff]
      %v3234 = vld [vmem:[%s3060 + $0x99] sm:$0xff]
      %v3235 = vld [vmem:[%s3060 + $0xa9] sm:$0xff]
      %v3236 = vld [vmem:[%s3060 + $0xb1] sm:$0xff]
      %v3237 = vld [vmem:[%s3060 + $0xc1] sm:$0xff]
      %v3238 = vld [vmem:[%s3060 + $0xc9] sm:$0xff]
      %v3239 = vld [vmem:[%s3060 + $0xd9] sm:$0xff]
      %v3240 = vld [vmem:[%s3060 + $0xe1] sm:$0xff]
      %v3241 = vld [vmem:[%s3060 + $0xf1] sm:$0xff]
      %v3242 = vld [vmem:[%s3060 + $0xf9] sm:$0xff]
      %v3243 = vld [vmem:[%s3060 + $0x109] sm:$0xff]
      %v3244 = vld [vmem:[%s3060 + $0x111] sm:$0xff]
      %v3245 = vld [vmem:[%s3060 + $0x121] sm:$0xff]
      %v3246 = vld [vmem:[%s3060 + $0x129] sm:$0xff]
      %v3247 = vld [vmem:[%s3060 + $0x139] sm:$0xff]
      %v3248 = vld [vmem:[%s3060 + $0x141] sm:$0xff]
      %v3249 = vld [vmem:[%s3060 + $0x151] sm:$0xff]
      %v3250 = vld [vmem:[%s3060 + $0x159] sm:$0xff]
      %v3251 = vld [vmem:[%s3060 + $0x169] sm:$0xff]
      %v3252 = vld [vmem:[%s3060 + $0x171] sm:$0xff]
      %v3253 = vld [vmem:[%s3060 + $0x2] sm:$0xff]
      %v3254 = vld [vmem:[%s3060 + $0xa] sm:$0xff]
      %v3255 = vld [vmem:[%s3060 + $0x1a] sm:$0xff]
      %v3256 = vld [vmem:[%s3060 + $0x22] sm:$0xff]
      %v3257 = vld [vmem:[%s3060 + $0x32] sm:$0xff]
      %v3258 = vld [vmem:[%s3060 + $0x3a] sm:$0xff]
      %v3259 = vld [vmem:[%s3060 + $0x4a] sm:$0xff]
      %v3260 = vld [vmem:[%s3060 + $0x52] sm:$0xff]
      %v3261 = vld [vmem:[%s3060 + $0x62] sm:$0xff]
      %v3262 = vld [vmem:[%s3060 + $0x6a] sm:$0xff]
      %v3263 = vld [vmem:[%s3060 + $0x7a] sm:$0xff]
      %v3264 = vld [vmem:[%s3060 + $0x82] sm:$0xff]
      %v3265 = vld [vmem:[%s3060 + $0x92] sm:$0xff]
      %v3266 = vld [vmem:[%s3060 + $0x9a] sm:$0xff]
      %v3267 = vld [vmem:[%s3060 + $0xaa] sm:$0xff]
      %v3268 = vld [vmem:[%s3060 + $0xb2] sm:$0xff]
      %v3269 = vld [vmem:[%s3060 + $0xc2] sm:$0xff]
      %v3270 = vld [vmem:[%s3060 + $0xca] sm:$0xff]
      %v3271 = vld [vmem:[%s3060 + $0xda] sm:$0xff]
      %v3272 = vld [vmem:[%s3060 + $0xe2] sm:$0xff]
      %v3273 = vld [vmem:[%s3060 + $0xf2] sm:$0xff]
      %v3274 = vld [vmem:[%s3060 + $0xfa] sm:$0xff]
      %v3275 = vld [vmem:[%s3060 + $0x10a] sm:$0xff]
      %v3276 = vld [vmem:[%s3060 + $0x112] sm:$0xff]
      %v3277 = vld [vmem:[%s3060 + $0x122] sm:$0xff]
      %v3278 = vld [vmem:[%s3060 + $0x12a] sm:$0xff]
      %v3279 = vld [vmem:[%s3060 + $0x13a] sm:$0xff]
      %v3280 = vld [vmem:[%s3060 + $0x142] sm:$0xff]
      %v3281 = vld [vmem:[%s3060 + $0x152] sm:$0xff]
      %v3282 = vld [vmem:[%s3060 + $0x15a] sm:$0xff]
      %v3283 = vld [vmem:[%s3060 + $0x16a] sm:$0xff]
      %v3284 = vld [vmem:[%s3060 + $0x172] sm:$0xff]
      %s3285 = scalar_lea.vmem [#allocation2], 48
      %v3286 = vld [vmem:[%s3285] sm:$0xff]
      %v3287 = vld [vmem:[%s3285 + $0x8] sm:$0xff]
      %v3288 = vld [vmem:[%s3285 + $0x18] sm:$0xff]
      %v3289 = vld [vmem:[%s3285 + $0x20] sm:$0xff]
      %v3290 = vld [vmem:[%s3285 + $0x30] sm:$0xff]
      %v3291 = vld [vmem:[%s3285 + $0x38] sm:$0xff]
      %v3292 = vld [vmem:[%s3285 + $0x48] sm:$0xff]
      %v3293 = vld [vmem:[%s3285 + $0x50] sm:$0xff]
      %v3294 = vld [vmem:[%s3285 + $0x60] sm:$0xff]
      %v3295 = vld [vmem:[%s3285 + $0x68] sm:$0xff]
      %v3296 = vld [vmem:[%s3285 + $0x78] sm:$0xff]
      %v3297 = vld [vmem:[%s3285 + $0x80] sm:$0xff]
      %v3298 = vld [vmem:[%s3285 + $0x90] sm:$0xff]
      %v3299 = vld [vmem:[%s3285 + $0x98] sm:$0xff]
      %v3300 = vld [vmem:[%s3285 + $0xa8] sm:$0xff]
      %v3301 = vld [vmem:[%s3285 + $0xb0] sm:$0xff]
      %v3302 = vld [vmem:[%s3285 + $0xc0] sm:$0xff]
      %v3303 = vld [vmem:[%s3285 + $0xc8] sm:$0xff]
      %v3304 = vld [vmem:[%s3285 + $0xd8] sm:$0xff]
      %v3305 = vld [vmem:[%s3285 + $0xe0] sm:$0xff]
      %v3306 = vld [vmem:[%s3285 + $0xf0] sm:$0xff]
      %v3307 = vld [vmem:[%s3285 + $0xf8] sm:$0xff]
      %v3308 = vld [vmem:[%s3285 + $0x108] sm:$0xff]
      %v3309 = vld [vmem:[%s3285 + $0x110] sm:$0xff]
      %v3310 = vld [vmem:[%s3285 + $0x120] sm:$0xff]
      %v3311 = vld [vmem:[%s3285 + $0x128] sm:$0xff]
      %v3312 = vld [vmem:[%s3285 + $0x138] sm:$0xff]
      %v3313 = vld [vmem:[%s3285 + $0x140] sm:$0xff]
      %v3314 = vld [vmem:[%s3285 + $0x150] sm:$0xff]
      %v3315 = vld [vmem:[%s3285 + $0x158] sm:$0xff]
      %v3316 = vld [vmem:[%s3285 + $0x168] sm:$0xff]
      %v3317 = vld [vmem:[%s3285 + $0x170] sm:$0xff]
      %v3318 = vld [vmem:[%s3285 + $0x1] sm:$0xff]
      %v3319 = vld [vmem:[%s3285 + $0x9] sm:$0xff]
      %v3320 = vld [vmem:[%s3285 + $0x19] sm:$0xff]
      %v3321 = vld [vmem:[%s3285 + $0x21] sm:$0xff]
      %v3322 = vld [vmem:[%s3285 + $0x31] sm:$0xff]
      %v3323 = vld [vmem:[%s3285 + $0x39] sm:$0xff]
      %v3324 = vld [vmem:[%s3285 + $0x49] sm:$0xff]
      %v3325 = vld [vmem:[%s3285 + $0x51] sm:$0xff]
      %v3326 = vld [vmem:[%s3285 + $0x61] sm:$0xff]
      %v3327 = vld [vmem:[%s3285 + $0x69] sm:$0xff]
      %v3328 = vld [vmem:[%s3285 + $0x79] sm:$0xff]
      %v3329 = vld [vmem:[%s3285 + $0x81] sm:$0xff]
      %v3330 = vld [vmem:[%s3285 + $0x91] sm:$0xff]
      %v3331 = vld [vmem:[%s3285 + $0x99] sm:$0xff]
      %v3332 = vld [vmem:[%s3285 + $0xa9] sm:$0xff]
      %v3333 = vld [vmem:[%s3285 + $0xb1] sm:$0xff]
      %v3334 = vld [vmem:[%s3285 + $0xc1] sm:$0xff]
      %v3335 = vld [vmem:[%s3285 + $0xc9] sm:$0xff]
      %v3336 = vld [vmem:[%s3285 + $0xd9] sm:$0xff]
      %v3337 = vld [vmem:[%s3285 + $0xe1] sm:$0xff]
      %v3338 = vld [vmem:[%s3285 + $0xf1] sm:$0xff]
      %v3339 = vld [vmem:[%s3285 + $0xf9] sm:$0xff]
      %v3340 = vld [vmem:[%s3285 + $0x109] sm:$0xff]
      %v3341 = vld [vmem:[%s3285 + $0x111] sm:$0xff]
      %v3342 = vld [vmem:[%s3285 + $0x121] sm:$0xff]
      %v3343 = vld [vmem:[%s3285 + $0x129] sm:$0xff]
      %v3344 = vld [vmem:[%s3285 + $0x139] sm:$0xff]
      %v3345 = vld [vmem:[%s3285 + $0x141] sm:$0xff]
      %v3346 = vld [vmem:[%s3285 + $0x151] sm:$0xff]
      %v3347 = vld [vmem:[%s3285 + $0x159] sm:$0xff]
      %v3348 = vld [vmem:[%s3285 + $0x169] sm:$0xff]
      %v3349 = vld [vmem:[%s3285 + $0x171] sm:$0xff]
      %v3350 = vld [vmem:[%s3285 + $0x2] sm:$0xff]
      %v3351 = vld [vmem:[%s3285 + $0xa] sm:$0xff]
      %v3352 = vld [vmem:[%s3285 + $0x1a] sm:$0xff]
      %v3353 = vld [vmem:[%s3285 + $0x22] sm:$0xff]
      %v3354 = vld [vmem:[%s3285 + $0x32] sm:$0xff]
      %v3355 = vld [vmem:[%s3285 + $0x3a] sm:$0xff]
      %v3356 = vld [vmem:[%s3285 + $0x4a] sm:$0xff]
      %v3357 = vld [vmem:[%s3285 + $0x52] sm:$0xff]
      %v3358 = vld [vmem:[%s3285 + $0x62] sm:$0xff]
      %v3359 = vld [vmem:[%s3285 + $0x6a] sm:$0xff]
      %v3360 = vld [vmem:[%s3285 + $0x7a] sm:$0xff]
      %v3361 = vld [vmem:[%s3285 + $0x82] sm:$0xff]
      %v3362 = vld [vmem:[%s3285 + $0x92] sm:$0xff]
      %v3363 = vld [vmem:[%s3285 + $0x9a] sm:$0xff]
      %v3364 = vld [vmem:[%s3285 + $0xaa] sm:$0xff]
      %v3365 = vld [vmem:[%s3285 + $0xb2] sm:$0xff]
      %v3366 = vld [vmem:[%s3285 + $0xc2] sm:$0xff]
      %v3367 = vld [vmem:[%s3285 + $0xca] sm:$0xff]
      %v3368 = vld [vmem:[%s3285 + $0xda] sm:$0xff]
      %v3369 = vld [vmem:[%s3285 + $0xe2] sm:$0xff]
      %v3370 = vld [vmem:[%s3285 + $0xf2] sm:$0xff]
      %v3371 = vld [vmem:[%s3285 + $0xfa] sm:$0xff]
      %v3372 = vld [vmem:[%s3285 + $0x10a] sm:$0xff]
      %v3373 = vld [vmem:[%s3285 + $0x112] sm:$0xff]
      %v3374 = vld [vmem:[%s3285 + $0x122] sm:$0xff]
      %v3375 = vld [vmem:[%s3285 + $0x12a] sm:$0xff]
      %v3376 = vld [vmem:[%s3285 + $0x13a] sm:$0xff]
      %v3377 = vld [vmem:[%s3285 + $0x142] sm:$0xff]
      %v3378 = vld [vmem:[%s3285 + $0x152] sm:$0xff]
      %v3379 = vld [vmem:[%s3285 + $0x15a] sm:$0xff]
      %v3380 = vld [vmem:[%s3285 + $0x16a] sm:$0xff]
      %v3381 = vld [vmem:[%s3285 + $0x172] sm:$0xff]
      %3414 = vrot.lane.b32.xlu0 %v3125, 8
      %v3415 = vpop.permute.xlu0 %3414
      %3416 = vrot.lane.b32.xlu0 %v3126, 8
      %v3417 = vpop.permute.xlu0 %3416
      %3418 = vrot.lane.b32.xlu0 %v3127, 8
      %v3419 = vpop.permute.xlu0 %3418
      %3420 = vrot.lane.b32.xlu0 %v3128, 8
      %v3421 = vpop.permute.xlu0 %3420
      %3422 = vrot.lane.b32.xlu0 %v3129, 8
      %v3423 = vpop.permute.xlu0 %3422
      %3424 = vrot.lane.b32.xlu0 %v3130, 8
      %v3425 = vpop.permute.xlu0 %3424
      %3426 = vrot.lane.b32.xlu0 %v3131, 8
      %v3427 = vpop.permute.xlu0 %3426
      %3428 = vrot.lane.b32.xlu0 %v3132, 8
      %v3429 = vpop.permute.xlu0 %3428
      %3430 = vrot.lane.b32.xlu0 %v3133, 8
      %v3431 = vpop.permute.xlu0 %3430
      %3432 = vrot.lane.b32.xlu0 %v3134, 8
      %v3433 = vpop.permute.xlu0 %3432
      %3434 = vrot.lane.b32.xlu0 %v3135, 8
      %v3435 = vpop.permute.xlu0 %3434
      %3436 = vrot.lane.b32.xlu0 %v3136, 8
      %v3437 = vpop.permute.xlu0 %3436
      %3438 = vrot.lane.b32.xlu0 %v3137, 8
      %v3439 = vpop.permute.xlu0 %3438
      %3440 = vrot.lane.b32.xlu0 %v3138, 8
      %v3441 = vpop.permute.xlu0 %3440
      %3442 = vrot.lane.b32.xlu0 %v3139, 8
      %v3443 = vpop.permute.xlu0 %3442
      %3444 = vrot.lane.b32.xlu0 %v3140, 8
      %v3445 = vpop.permute.xlu0 %3444
      %3446 = vrot.lane.b32.xlu0 %v3141, 8
      %v3447 = vpop.permute.xlu0 %3446
      %3448 = vrot.lane.b32.xlu0 %v3142, 8
      %v3449 = vpop.permute.xlu0 %3448
      %3450 = vrot.lane.b32.xlu0 %v3143, 8
      %v3451 = vpop.permute.xlu0 %3450
      %3452 = vrot.lane.b32.xlu0 %v3144, 8
      %v3453 = vpop.permute.xlu0 %3452
      %3454 = vrot.lane.b32.xlu0 %v3145, 8
      %v3455 = vpop.permute.xlu0 %3454
      %3456 = vrot.lane.b32.xlu0 %v3146, 8
      %v3457 = vpop.permute.xlu0 %3456
      %3458 = vrot.lane.b32.xlu0 %v3147, 8
      %v3459 = vpop.permute.xlu0 %3458
      %3460 = vrot.lane.b32.xlu0 %v3148, 8
      %v3461 = vpop.permute.xlu0 %3460
      %3462 = vrot.lane.b32.xlu0 %v3149, 8
      %v3463 = vpop.permute.xlu0 %3462
      %3464 = vrot.lane.b32.xlu0 %v3150, 8
      %v3465 = vpop.permute.xlu0 %3464
      %3466 = vrot.lane.b32.xlu0 %v3151, 8
      %v3467 = vpop.permute.xlu0 %3466
      %3468 = vrot.lane.b32.xlu0 %v3152, 8
      %v3469 = vpop.permute.xlu0 %3468
      %3470 = vrot.lane.b32.xlu0 %v3153, 8
      %v3471 = vpop.permute.xlu0 %3470
      %3472 = vrot.lane.b32.xlu0 %v3154, 8
      %v3473 = vpop.permute.xlu0 %3472
      %3474 = vrot.lane.b32.xlu0 %v3155, 8
      %v3475 = vpop.permute.xlu0 %3474
      %3476 = vrot.lane.b32.xlu0 %v3156, 8
      %v3477 = vpop.permute.xlu0 %3476
      %3542 = vrot.lane.b32.xlu0 %v3157, 16
      %v3543 = vpop.permute.xlu0 %3542
      %3544 = vrot.lane.b32.xlu0 %v3158, 16
      %v3545 = vpop.permute.xlu0 %3544
      %3546 = vrot.lane.b32.xlu0 %v3159, 16
      %v3547 = vpop.permute.xlu0 %3546
      %3548 = vrot.lane.b32.xlu0 %v3160, 16
      %v3549 = vpop.permute.xlu0 %3548
      %3550 = vrot.lane.b32.xlu0 %v3161, 16
      %v3551 = vpop.permute.xlu0 %3550
      %3552 = vrot.lane.b32.xlu0 %v3162, 16
      %v3553 = vpop.permute.xlu0 %3552
      %3554 = vrot.lane.b32.xlu0 %v3163, 16
      %v3555 = vpop.permute.xlu0 %3554
      %3556 = vrot.lane.b32.xlu0 %v3164, 16
      %v3557 = vpop.permute.xlu0 %3556
      %3558 = vrot.lane.b32.xlu0 %v3165, 16
      %v3559 = vpop.permute.xlu0 %3558
      %3560 = vrot.lane.b32.xlu0 %v3166, 16
      %v3561 = vpop.permute.xlu0 %3560
      %3562 = vrot.lane.b32.xlu0 %v3167, 16
      %v3563 = vpop.permute.xlu0 %3562
      %3564 = vrot.lane.b32.xlu0 %v3168, 16
      %v3565 = vpop.permute.xlu0 %3564
      %3566 = vrot.lane.b32.xlu0 %v3169, 16
      %v3567 = vpop.permute.xlu0 %3566
      %3568 = vrot.lane.b32.xlu0 %v3170, 16
      %v3569 = vpop.permute.xlu0 %3568
      %3570 = vrot.lane.b32.xlu0 %v3171, 16
      %v3571 = vpop.permute.xlu0 %3570
      %3572 = vrot.lane.b32.xlu0 %v3172, 16
      %v3573 = vpop.permute.xlu0 %3572
      %3574 = vrot.lane.b32.xlu0 %v3173, 16
      %v3575 = vpop.permute.xlu0 %3574
      %3576 = vrot.lane.b32.xlu0 %v3174, 16
      %v3577 = vpop.permute.xlu0 %3576
      %3578 = vrot.lane.b32.xlu0 %v3175, 16
      %v3579 = vpop.permute.xlu0 %3578
      %3580 = vrot.lane.b32.xlu0 %v3176, 16
      %v3581 = vpop.permute.xlu0 %3580
      %3582 = vrot.lane.b32.xlu0 %v3177, 16
      %v3583 = vpop.permute.xlu0 %3582
      %3584 = vrot.lane.b32.xlu0 %v3178, 16
      %v3585 = vpop.permute.xlu0 %3584
      %3586 = vrot.lane.b32.xlu0 %v3179, 16
      %v3587 = vpop.permute.xlu0 %3586
      %3588 = vrot.lane.b32.xlu0 %v3180, 16
      %v3589 = vpop.permute.xlu0 %3588
      %3590 = vrot.lane.b32.xlu0 %v3181, 16
      %v3591 = vpop.permute.xlu0 %3590
      %3592 = vrot.lane.b32.xlu0 %v3182, 16
      %v3593 = vpop.permute.xlu0 %3592
      %3594 = vrot.lane.b32.xlu0 %v3183, 16
      %v3595 = vpop.permute.xlu0 %3594
      %3596 = vrot.lane.b32.xlu0 %v3184, 16
      %v3597 = vpop.permute.xlu0 %3596
      %3598 = vrot.lane.b32.xlu0 %v3185, 16
      %v3599 = vpop.permute.xlu0 %3598
      %3600 = vrot.lane.b32.xlu0 %v3186, 16
      %v3601 = vpop.permute.xlu0 %3600
      %3602 = vrot.lane.b32.xlu0 %v3187, 16
      %v3603 = vpop.permute.xlu0 %3602
      %3604 = vrot.lane.b32.xlu0 %v3188, 16
      %v3605 = vpop.permute.xlu0 %3604
      %3670 = vrot.lane.b32.xlu0 %v3189, 24
      %v3671 = vpop.permute.xlu0 %3670
      %3672 = vrot.lane.b32.xlu0 %v3190, 24
      %v3673 = vpop.permute.xlu0 %3672
      %3674 = vrot.lane.b32.xlu0 %v3191, 24
      %v3675 = vpop.permute.xlu0 %3674
      %3676 = vrot.lane.b32.xlu0 %v3192, 24
      %v3677 = vpop.permute.xlu0 %3676
      %3678 = vrot.lane.b32.xlu0 %v3193, 24
      %v3679 = vpop.permute.xlu0 %3678
      %3680 = vrot.lane.b32.xlu0 %v3194, 24
      %v3681 = vpop.permute.xlu0 %3680
      %3682 = vrot.lane.b32.xlu0 %v3195, 24
      %v3683 = vpop.permute.xlu0 %3682
      %3684 = vrot.lane.b32.xlu0 %v3196, 24
      %v3685 = vpop.permute.xlu0 %3684
      %3686 = vrot.lane.b32.xlu0 %v3197, 24
      %v3687 = vpop.permute.xlu0 %3686
      %3688 = vrot.lane.b32.xlu0 %v3198, 24
      %v3689 = vpop.permute.xlu0 %3688
      %3690 = vrot.lane.b32.xlu0 %v3199, 24
      %v3691 = vpop.permute.xlu0 %3690
      %3692 = vrot.lane.b32.xlu0 %v3200, 24
      %v3693 = vpop.permute.xlu0 %3692
      %3694 = vrot.lane.b32.xlu0 %v3201, 24
      %v3695 = vpop.permute.xlu0 %3694
      %3696 = vrot.lane.b32.xlu0 %v3202, 24
      %v3697 = vpop.permute.xlu0 %3696
      %3698 = vrot.lane.b32.xlu0 %v3203, 24
      %v3699 = vpop.permute.xlu0 %3698
      %3700 = vrot.lane.b32.xlu0 %v3204, 24
      %v3701 = vpop.permute.xlu0 %3700
      %3702 = vrot.lane.b32.xlu0 %v3205, 24
      %v3703 = vpop.permute.xlu0 %3702
      %3704 = vrot.lane.b32.xlu0 %v3206, 24
      %v3705 = vpop.permute.xlu0 %3704
      %3706 = vrot.lane.b32.xlu0 %v3207, 24
      %v3707 = vpop.permute.xlu0 %3706
      %3708 = vrot.lane.b32.xlu0 %v3208, 24
      %v3709 = vpop.permute.xlu0 %3708
      %3710 = vrot.lane.b32.xlu0 %v3209, 24
      %v3711 = vpop.permute.xlu0 %3710
      %3712 = vrot.lane.b32.xlu0 %v3210, 24
      %v3713 = vpop.permute.xlu0 %3712
      %3714 = vrot.lane.b32.xlu0 %v3211, 24
      %v3715 = vpop.permute.xlu0 %3714
      %3716 = vrot.lane.b32.xlu0 %v3212, 24
      %v3717 = vpop.permute.xlu0 %3716
      %3718 = vrot.lane.b32.xlu0 %v3213, 24
      %v3719 = vpop.permute.xlu0 %3718
      %3720 = vrot.lane.b32.xlu0 %v3214, 24
      %v3721 = vpop.permute.xlu0 %3720
      %3722 = vrot.lane.b32.xlu0 %v3215, 24
      %v3723 = vpop.permute.xlu0 %3722
      %3724 = vrot.lane.b32.xlu0 %v3216, 24
      %v3725 = vpop.permute.xlu0 %3724
      %3726 = vrot.lane.b32.xlu0 %v3217, 24
      %v3727 = vpop.permute.xlu0 %3726
      %3728 = vrot.lane.b32.xlu0 %v3218, 24
      %v3729 = vpop.permute.xlu0 %3728
      %3730 = vrot.lane.b32.xlu0 %v3219, 24
      %v3731 = vpop.permute.xlu0 %3730
      %3732 = vrot.lane.b32.xlu0 %v3220, 24
      %v3733 = vpop.permute.xlu0 %3732
      %3798 = vrot.lane.b32.xlu0 %v3221, 32
      %v3799 = vpop.permute.xlu0 %3798
      %3800 = vrot.lane.b32.xlu0 %v3222, 32
      %v3801 = vpop.permute.xlu0 %3800
      %3802 = vrot.lane.b32.xlu0 %v3223, 32
      %v3803 = vpop.permute.xlu0 %3802
      %3804 = vrot.lane.b32.xlu0 %v3224, 32
      %v3805 = vpop.permute.xlu0 %3804
      %3806 = vrot.lane.b32.xlu0 %v3225, 32
      %v3807 = vpop.permute.xlu0 %3806
      %3808 = vrot.lane.b32.xlu0 %v3226, 32
      %v3809 = vpop.permute.xlu0 %3808
      %3810 = vrot.lane.b32.xlu0 %v3227, 32
      %v3811 = vpop.permute.xlu0 %3810
      %3812 = vrot.lane.b32.xlu0 %v3228, 32
      %v3813 = vpop.permute.xlu0 %3812
      %3814 = vrot.lane.b32.xlu0 %v3229, 32
      %v3815 = vpop.permute.xlu0 %3814
      %3816 = vrot.lane.b32.xlu0 %v3230, 32
      %v3817 = vpop.permute.xlu0 %3816
      %3818 = vrot.lane.b32.xlu0 %v3231, 32
      %v3819 = vpop.permute.xlu0 %3818
      %3820 = vrot.lane.b32.xlu0 %v3232, 32
      %v3821 = vpop.permute.xlu0 %3820
      %3822 = vrot.lane.b32.xlu0 %v3233, 32
      %v3823 = vpop.permute.xlu0 %3822
      %3824 = vrot.lane.b32.xlu0 %v3234, 32
      %v3825 = vpop.permute.xlu0 %3824
      %3826 = vrot.lane.b32.xlu0 %v3235, 32
      %v3827 = vpop.permute.xlu0 %3826
      %3828 = vrot.lane.b32.xlu0 %v3236, 32
      %v3829 = vpop.permute.xlu0 %3828
      %3830 = vrot.lane.b32.xlu0 %v3237, 32
      %v3831 = vpop.permute.xlu0 %3830
      %3832 = vrot.lane.b32.xlu0 %v3238, 32
      %v3833 = vpop.permute.xlu0 %3832
      %3834 = vrot.lane.b32.xlu0 %v3239, 32
      %v3835 = vpop.permute.xlu0 %3834
      %3836 = vrot.lane.b32.xlu0 %v3240, 32
      %v3837 = vpop.permute.xlu0 %3836
      %3838 = vrot.lane.b32.xlu0 %v3241, 32
      %v3839 = vpop.permute.xlu0 %3838
      %3840 = vrot.lane.b32.xlu0 %v3242, 32
      %v3841 = vpop.permute.xlu0 %3840
      %3842 = vrot.lane.b32.xlu0 %v3243, 32
      %v3843 = vpop.permute.xlu0 %3842
      %3844 = vrot.lane.b32.xlu0 %v3244, 32
      %v3845 = vpop.permute.xlu0 %3844
      %3846 = vrot.lane.b32.xlu0 %v3245, 32
      %v3847 = vpop.permute.xlu0 %3846
      %3848 = vrot.lane.b32.xlu0 %v3246, 32
      %v3849 = vpop.permute.xlu0 %3848
      %3850 = vrot.lane.b32.xlu0 %v3247, 32
      %v3851 = vpop.permute.xlu0 %3850
      %3852 = vrot.lane.b32.xlu0 %v3248, 32
      %v3853 = vpop.permute.xlu0 %3852
      %3854 = vrot.lane.b32.xlu0 %v3249, 32
      %v3855 = vpop.permute.xlu0 %3854
      %3856 = vrot.lane.b32.xlu0 %v3250, 32
      %v3857 = vpop.permute.xlu0 %3856
      %3858 = vrot.lane.b32.xlu0 %v3251, 32
      %v3859 = vpop.permute.xlu0 %3858
      %3860 = vrot.lane.b32.xlu0 %v3252, 32
      %v3861 = vpop.permute.xlu0 %3860
      %3926 = vrot.lane.b32.xlu0 %v3253, 40
      %v3927 = vpop.permute.xlu0 %3926
      %3928 = vrot.lane.b32.xlu0 %v3254, 40
      %v3929 = vpop.permute.xlu0 %3928
      %3930 = vrot.lane.b32.xlu0 %v3255, 40
      %v3931 = vpop.permute.xlu0 %3930
      %3932 = vrot.lane.b32.xlu0 %v3256, 40
      %v3933 = vpop.permute.xlu0 %3932
      %3934 = vrot.lane.b32.xlu0 %v3257, 40
      %v3935 = vpop.permute.xlu0 %3934
      %3936 = vrot.lane.b32.xlu0 %v3258, 40
      %v3937 = vpop.permute.xlu0 %3936
      %3938 = vrot.lane.b32.xlu0 %v3259, 40
      %v3939 = vpop.permute.xlu0 %3938
      %3940 = vrot.lane.b32.xlu0 %v3260, 40
      %v3941 = vpop.permute.xlu0 %3940
      %3942 = vrot.lane.b32.xlu0 %v3261, 40
      %v3943 = vpop.permute.xlu0 %3942
      %3944 = vrot.lane.b32.xlu0 %v3262, 40
      %v3945 = vpop.permute.xlu0 %3944
      %3946 = vrot.lane.b32.xlu0 %v3263, 40
      %v3947 = vpop.permute.xlu0 %3946
      %3948 = vrot.lane.b32.xlu0 %v3264, 40
      %v3949 = vpop.permute.xlu0 %3948
      %3950 = vrot.lane.b32.xlu0 %v3265, 40
      %v3951 = vpop.permute.xlu0 %3950
      %3952 = vrot.lane.b32.xlu0 %v3266, 40
      %v3953 = vpop.permute.xlu0 %3952
      %3954 = vrot.lane.b32.xlu0 %v3267, 40
      %v3955 = vpop.permute.xlu0 %3954
      %3956 = vrot.lane.b32.xlu0 %v3268, 40
      %v3957 = vpop.permute.xlu0 %3956
      %3958 = vrot.lane.b32.xlu0 %v3269, 40
      %v3959 = vpop.permute.xlu0 %3958
      %3960 = vrot.lane.b32.xlu0 %v3270, 40
      %v3961 = vpop.permute.xlu0 %3960
      %3962 = vrot.lane.b32.xlu0 %v3271, 40
      %v3963 = vpop.permute.xlu0 %3962
      %3964 = vrot.lane.b32.xlu0 %v3272, 40
      %v3965 = vpop.permute.xlu0 %3964
      %3966 = vrot.lane.b32.xlu0 %v3273, 40
      %v3967 = vpop.permute.xlu0 %3966
      %3968 = vrot.lane.b32.xlu0 %v3274, 40
      %v3969 = vpop.permute.xlu0 %3968
      %3970 = vrot.lane.b32.xlu0 %v3275, 40
      %v3971 = vpop.permute.xlu0 %3970
      %3972 = vrot.lane.b32.xlu0 %v3276, 40
      %v3973 = vpop.permute.xlu0 %3972
      %3974 = vrot.lane.b32.xlu0 %v3277, 40
      %v3975 = vpop.permute.xlu0 %3974
      %3976 = vrot.lane.b32.xlu0 %v3278, 40
      %v3977 = vpop.permute.xlu0 %3976
      %3978 = vrot.lane.b32.xlu0 %v3279, 40
      %v3979 = vpop.permute.xlu0 %3978
      %3980 = vrot.lane.b32.xlu0 %v3280, 40
      %v3981 = vpop.permute.xlu0 %3980
      %3982 = vrot.lane.b32.xlu0 %v3281, 40
      %v3983 = vpop.permute.xlu0 %3982
      %3984 = vrot.lane.b32.xlu0 %v3282, 40
      %v3985 = vpop.permute.xlu0 %3984
      %3986 = vrot.lane.b32.xlu0 %v3283, 40
      %v3987 = vpop.permute.xlu0 %3986
      %3988 = vrot.lane.b32.xlu0 %v3284, 40
      %v3989 = vpop.permute.xlu0 %3988
      %4054 = vrot.lane.b32.xlu0 %v3286, 48
      %v4055 = vpop.permute.xlu0 %4054
      %4056 = vrot.lane.b32.xlu0 %v3287, 48
      %v4057 = vpop.permute.xlu0 %4056
      %4058 = vrot.lane.b32.xlu0 %v3288, 48
      %v4059 = vpop.permute.xlu0 %4058
      %4060 = vrot.lane.b32.xlu0 %v3289, 48
      %v4061 = vpop.permute.xlu0 %4060
      %4062 = vrot.lane.b32.xlu0 %v3290, 48
      %v4063 = vpop.permute.xlu0 %4062
      %4064 = vrot.lane.b32.xlu0 %v3291, 48
      %v4065 = vpop.permute.xlu0 %4064
      %4066 = vrot.lane.b32.xlu0 %v3292, 48
      %v4067 = vpop.permute.xlu0 %4066
      %4068 = vrot.lane.b32.xlu0 %v3293, 48
      %v4069 = vpop.permute.xlu0 %4068
      %4070 = vrot.lane.b32.xlu0 %v3294, 48
      %v4071 = vpop.permute.xlu0 %4070
      %4072 = vrot.lane.b32.xlu0 %v3295, 48
      %v4073 = vpop.permute.xlu0 %4072
      %4074 = vrot.lane.b32.xlu0 %v3296, 48
      %v4075 = vpop.permute.xlu0 %4074
      %4076 = vrot.lane.b32.xlu0 %v3297, 48
      %v4077 = vpop.permute.xlu0 %4076
      %4078 = vrot.lane.b32.xlu0 %v3298, 48
      %v4079 = vpop.permute.xlu0 %4078
      %4080 = vrot.lane.b32.xlu0 %v3299, 48
      %v4081 = vpop.permute.xlu0 %4080
      %4082 = vrot.lane.b32.xlu0 %v3300, 48
      %v4083 = vpop.permute.xlu0 %4082
      %4084 = vrot.lane.b32.xlu0 %v3301, 48
      %v4085 = vpop.permute.xlu0 %4084
      %4086 = vrot.lane.b32.xlu0 %v3302, 48
      %v4087 = vpop.permute.xlu0 %4086
      %4088 = vrot.lane.b32.xlu0 %v3303, 48
      %v4089 = vpop.permute.xlu0 %4088
      %4090 = vrot.lane.b32.xlu0 %v3304, 48
      %v4091 = vpop.permute.xlu0 %4090
      %4092 = vrot.lane.b32.xlu0 %v3305, 48
      %v4093 = vpop.permute.xlu0 %4092
      %4094 = vrot.lane.b32.xlu0 %v3306, 48
      %v4095 = vpop.permute.xlu0 %4094
      %4096 = vrot.lane.b32.xlu0 %v3307, 48
      %v4097 = vpop.permute.xlu0 %4096
      %4098 = vrot.lane.b32.xlu0 %v3308, 48
      %v4099 = vpop.permute.xlu0 %4098
      %4100 = vrot.lane.b32.xlu0 %v3309, 48
      %v4101 = vpop.permute.xlu0 %4100
      %4102 = vrot.lane.b32.xlu0 %v3310, 48
      %v4103 = vpop.permute.xlu0 %4102
      %4104 = vrot.lane.b32.xlu0 %v3311, 48
      %v4105 = vpop.permute.xlu0 %4104
      %4106 = vrot.lane.b32.xlu0 %v3312, 48
      %v4107 = vpop.permute.xlu0 %4106
      %4108 = vrot.lane.b32.xlu0 %v3313, 48
      %v4109 = vpop.permute.xlu0 %4108
      %4110 = vrot.lane.b32.xlu0 %v3314, 48
      %v4111 = vpop.permute.xlu0 %4110
      %4112 = vrot.lane.b32.xlu0 %v3315, 48
      %v4113 = vpop.permute.xlu0 %4112
      %4114 = vrot.lane.b32.xlu0 %v3316, 48
      %v4115 = vpop.permute.xlu0 %4114
      %4116 = vrot.lane.b32.xlu0 %v3317, 48
      %v4117 = vpop.permute.xlu0 %4116
      %4182 = vrot.lane.b32.xlu0 %v3318, 56
      %v4183 = vpop.permute.xlu0 %4182
      %4184 = vrot.lane.b32.xlu0 %v3319, 56
      %v4185 = vpop.permute.xlu0 %4184
      %4186 = vrot.lane.b32.xlu0 %v3320, 56
      %v4187 = vpop.permute.xlu0 %4186
      %4188 = vrot.lane.b32.xlu0 %v3321, 56
      %v4189 = vpop.permute.xlu0 %4188
      %4190 = vrot.lane.b32.xlu0 %v3322, 56
      %v4191 = vpop.permute.xlu0 %4190
      %4192 = vrot.lane.b32.xlu0 %v3323, 56
      %v4193 = vpop.permute.xlu0 %4192
      %4194 = vrot.lane.b32.xlu0 %v3324, 56
      %v4195 = vpop.permute.xlu0 %4194
      %4196 = vrot.lane.b32.xlu0 %v3325, 56
      %v4197 = vpop.permute.xlu0 %4196
      %4198 = vrot.lane.b32.xlu0 %v3326, 56
      %v4199 = vpop.permute.xlu0 %4198
      %4200 = vrot.lane.b32.xlu0 %v3327, 56
      %v4201 = vpop.permute.xlu0 %4200
      %4202 = vrot.lane.b32.xlu0 %v3328, 56
      %v4203 = vpop.permute.xlu0 %4202
      %4204 = vrot.lane.b32.xlu0 %v3329, 56
      %v4205 = vpop.permute.xlu0 %4204
      %4206 = vrot.lane.b32.xlu0 %v3330, 56
      %v4207 = vpop.permute.xlu0 %4206
      %4208 = vrot.lane.b32.xlu0 %v3331, 56
      %v4209 = vpop.permute.xlu0 %4208
      %4210 = vrot.lane.b32.xlu0 %v3332, 56
      %v4211 = vpop.permute.xlu0 %4210
      %4212 = vrot.lane.b32.xlu0 %v3333, 56
      %v4213 = vpop.permute.xlu0 %4212
      %4214 = vrot.lane.b32.xlu0 %v3334, 56
      %v4215 = vpop.permute.xlu0 %4214
      %4216 = vrot.lane.b32.xlu0 %v3335, 56
      %v4217 = vpop.permute.xlu0 %4216
      %4218 = vrot.lane.b32.xlu0 %v3336, 56
      %v4219 = vpop.permute.xlu0 %4218
      %4220 = vrot.lane.b32.xlu0 %v3337, 56
      %v4221 = vpop.permute.xlu0 %4220
      %4222 = vrot.lane.b32.xlu0 %v3338, 56
      %v4223 = vpop.permute.xlu0 %4222
      %4224 = vrot.lane.b32.xlu0 %v3339, 56
      %v4225 = vpop.permute.xlu0 %4224
      %4226 = vrot.lane.b32.xlu0 %v3340, 56
      %v4227 = vpop.permute.xlu0 %4226
      %4228 = vrot.lane.b32.xlu0 %v3341, 56
      %v4229 = vpop.permute.xlu0 %4228
      %4230 = vrot.lane.b32.xlu0 %v3342, 56
      %v4231 = vpop.permute.xlu0 %4230
      %4232 = vrot.lane.b32.xlu0 %v3343, 56
      %v4233 = vpop.permute.xlu0 %4232
      %4234 = vrot.lane.b32.xlu0 %v3344, 56
      %v4235 = vpop.permute.xlu0 %4234
      %4236 = vrot.lane.b32.xlu0 %v3345, 56
      %v4237 = vpop.permute.xlu0 %4236
      %4238 = vrot.lane.b32.xlu0 %v3346, 56
      %v4239 = vpop.permute.xlu0 %4238
      %4240 = vrot.lane.b32.xlu0 %v3347, 56
      %v4241 = vpop.permute.xlu0 %4240
      %4242 = vrot.lane.b32.xlu0 %v3348, 56
      %v4243 = vpop.permute.xlu0 %4242
      %4244 = vrot.lane.b32.xlu0 %v3349, 56
      %v4245 = vpop.permute.xlu0 %4244
      %4310 = vrot.lane.b32.xlu0 %v3350, 64
      %v4311 = vpop.permute.xlu0 %4310
      %4312 = vrot.lane.b32.xlu0 %v3351, 64
      %v4313 = vpop.permute.xlu0 %4312
      %4314 = vrot.lane.b32.xlu0 %v3352, 64
      %v4315 = vpop.permute.xlu0 %4314
      %4316 = vrot.lane.b32.xlu0 %v3353, 64
      %v4317 = vpop.permute.xlu0 %4316
      %4318 = vrot.lane.b32.xlu0 %v3354, 64
      %v4319 = vpop.permute.xlu0 %4318
      %4320 = vrot.lane.b32.xlu0 %v3355, 64
      %v4321 = vpop.permute.xlu0 %4320
      %4322 = vrot.lane.b32.xlu0 %v3356, 64
      %v4323 = vpop.permute.xlu0 %4322
      %4324 = vrot.lane.b32.xlu0 %v3357, 64
      %v4325 = vpop.permute.xlu0 %4324
      %4326 = vrot.lane.b32.xlu0 %v3358, 64
      %v4327 = vpop.permute.xlu0 %4326
      %4328 = vrot.lane.b32.xlu0 %v3359, 64
      %v4329 = vpop.permute.xlu0 %4328
      %4330 = vrot.lane.b32.xlu0 %v3360, 64
      %v4331 = vpop.permute.xlu0 %4330
      %4332 = vrot.lane.b32.xlu0 %v3361, 64
      %v4333 = vpop.permute.xlu0 %4332
      %4334 = vrot.lane.b32.xlu0 %v3362, 64
      %v4335 = vpop.permute.xlu0 %4334
      %4336 = vrot.lane.b32.xlu0 %v3363, 64
      %v4337 = vpop.permute.xlu0 %4336
      %4338 = vrot.lane.b32.xlu0 %v3364, 64
      %v4339 = vpop.permute.xlu0 %4338
      %4340 = vrot.lane.b32.xlu0 %v3365, 64
      %v4341 = vpop.permute.xlu0 %4340
      %4342 = vrot.lane.b32.xlu0 %v3366, 64
      %v4343 = vpop.permute.xlu0 %4342
      %4344 = vrot.lane.b32.xlu0 %v3367, 64
      %v4345 = vpop.permute.xlu0 %4344
      %4346 = vrot.lane.b32.xlu0 %v3368, 64
      %v4347 = vpop.permute.xlu0 %4346
      %4348 = vrot.lane.b32.xlu0 %v3369, 64
      %v4349 = vpop.permute.xlu0 %4348
      %4350 = vrot.lane.b32.xlu0 %v3370, 64
      %v4351 = vpop.permute.xlu0 %4350
      %4352 = vrot.lane.b32.xlu0 %v3371, 64
      %v4353 = vpop.permute.xlu0 %4352
      %4354 = vrot.lane.b32.xlu0 %v3372, 64
      %v4355 = vpop.permute.xlu0 %4354
      %4356 = vrot.lane.b32.xlu0 %v3373, 64
      %v4357 = vpop.permute.xlu0 %4356
      %4358 = vrot.lane.b32.xlu0 %v3374, 64
      %v4359 = vpop.permute.xlu0 %4358
      %4360 = vrot.lane.b32.xlu0 %v3375, 64
      %v4361 = vpop.permute.xlu0 %4360
      %4362 = vrot.lane.b32.xlu0 %v3376, 64
      %v4363 = vpop.permute.xlu0 %4362
      %4364 = vrot.lane.b32.xlu0 %v3377, 64
      %v4365 = vpop.permute.xlu0 %4364
      %4366 = vrot.lane.b32.xlu0 %v3378, 64
      %v4367 = vpop.permute.xlu0 %4366
      %4368 = vrot.lane.b32.xlu0 %v3379, 64
      %v4369 = vpop.permute.xlu0 %4368
      %4370 = vrot.lane.b32.xlu0 %v3380, 64
      %v4371 = vpop.permute.xlu0 %4370
      %4372 = vrot.lane.b32.xlu0 %v3381, 64
      %v4373 = vpop.permute.xlu0 %4372
      %v4406 = vsel %vm1539, %v3093, %v3415
      %v4407 = vsel %vm1539, %v3094, %v3417
      %v4408 = vsel %vm1539, %v3095, %v3419
      %v4409 = vsel %vm1539, %v3096, %v3421
      %v4410 = vsel %vm1539, %v3097, %v3423
      %v4411 = vsel %vm1539, %v3098, %v3425
      %v4412 = vsel %vm1539, %v3099, %v3427
      %v4413 = vsel %vm1539, %v3100, %v3429
      %v4414 = vsel %vm1539, %v3101, %v3431
      %v4415 = vsel %vm1539, %v3102, %v3433
      %v4416 = vsel %vm1539, %v3103, %v3435
      %v4417 = vsel %vm1539, %v3104, %v3437
      %v4418 = vsel %vm1539, %v3105, %v3439
      %v4419 = vsel %vm1539, %v3106, %v3441
      %v4420 = vsel %vm1539, %v3107, %v3443
      %v4421 = vsel %vm1539, %v3108, %v3445
      %v4422 = vsel %vm1539, %v3109, %v3447
      %v4423 = vsel %vm1539, %v3110, %v3449
      %v4424 = vsel %vm1539, %v3111, %v3451
      %v4425 = vsel %vm1539, %v3112, %v3453
      %v4426 = vsel %vm1539, %v3113, %v3455
      %v4427 = vsel %vm1539, %v3114, %v3457
      %v4428 = vsel %vm1539, %v3115, %v3459
      %v4429 = vsel %vm1539, %v3116, %v3461
      %v4430 = vsel %vm1539, %v3117, %v3463
      %v4431 = vsel %vm1539, %v3118, %v3465
      %v4432 = vsel %vm1539, %v3119, %v3467
      %v4433 = vsel %vm1539, %v3120, %v3469
      %v4434 = vsel %vm1539, %v3121, %v3471
      %v4435 = vsel %vm1539, %v3122, %v3473
      %v4436 = vsel %vm1539, %v3123, %v3475
      %v4437 = vsel %vm1539, %v3124, %v3477
      %v4438 = vsel %vm1572, %v4406, %v3543
      %v4439 = vsel %vm1572, %v4407, %v3545
      %v4440 = vsel %vm1572, %v4408, %v3547
      %v4441 = vsel %vm1572, %v4409, %v3549
      %v4442 = vsel %vm1572, %v4410, %v3551
      %v4443 = vsel %vm1572, %v4411, %v3553
      %v4444 = vsel %vm1572, %v4412, %v3555
      %v4445 = vsel %vm1572, %v4413, %v3557
      %v4446 = vsel %vm1572, %v4414, %v3559
      %v4447 = vsel %vm1572, %v4415, %v3561
      %v4448 = vsel %vm1572, %v4416, %v3563
      %v4449 = vsel %vm1572, %v4417, %v3565
      %v4450 = vsel %vm1572, %v4418, %v3567
      %v4451 = vsel %vm1572, %v4419, %v3569
      %v4452 = vsel %vm1572, %v4420, %v3571
      %v4453 = vsel %vm1572, %v4421, %v3573
      %v4454 = vsel %vm1572, %v4422, %v3575
      %v4455 = vsel %vm1572, %v4423, %v3577
      %v4456 = vsel %vm1572, %v4424, %v3579
      %v4457 = vsel %vm1572, %v4425, %v3581
      %v4458 = vsel %vm1572, %v4426, %v3583
      %v4459 = vsel %vm1572, %v4427, %v3585
      %v4460 = vsel %vm1572, %v4428, %v3587
      %v4461 = vsel %vm1572, %v4429, %v3589
      %v4462 = vsel %vm1572, %v4430, %v3591
      %v4463 = vsel %vm1572, %v4431, %v3593
      %v4464 = vsel %vm1572, %v4432, %v3595
      %v4465 = vsel %vm1572, %v4433, %v3597
      %v4466 = vsel %vm1572, %v4434, %v3599
      %v4467 = vsel %vm1572, %v4435, %v3601
      %v4468 = vsel %vm1572, %v4436, %v3603
      %v4469 = vsel %vm1572, %v4437, %v3605
      %v4470 = vsel %vm1605, %v4438, %v3671
      %v4471 = vsel %vm1605, %v4439, %v3673
      %v4472 = vsel %vm1605, %v4440, %v3675
      %v4473 = vsel %vm1605, %v4441, %v3677
      %v4474 = vsel %vm1605, %v4442, %v3679
      %v4475 = vsel %vm1605, %v4443, %v3681
      %v4476 = vsel %vm1605, %v4444, %v3683
      %v4477 = vsel %vm1605, %v4445, %v3685
      %v4478 = vsel %vm1605, %v4446, %v3687
      %v4479 = vsel %vm1605, %v4447, %v3689
      %v4480 = vsel %vm1605, %v4448, %v3691
      %v4481 = vsel %vm1605, %v4449, %v3693
      %v4482 = vsel %vm1605, %v4450, %v3695
      %v4483 = vsel %vm1605, %v4451, %v3697
      %v4484 = vsel %vm1605, %v4452, %v3699
      %v4485 = vsel %vm1605, %v4453, %v3701
      %v4486 = vsel %vm1605, %v4454, %v3703
      %v4487 = vsel %vm1605, %v4455, %v3705
      %v4488 = vsel %vm1605, %v4456, %v3707
      %v4489 = vsel %vm1605, %v4457, %v3709
      %v4490 = vsel %vm1605, %v4458, %v3711
      %v4491 = vsel %vm1605, %v4459, %v3713
      %v4492 = vsel %vm1605, %v4460, %v3715
      %v4493 = vsel %vm1605, %v4461, %v3717
      %v4494 = vsel %vm1605, %v4462, %v3719
      %v4495 = vsel %vm1605, %v4463, %v3721
      %v4496 = vsel %vm1605, %v4464, %v3723
      %v4497 = vsel %vm1605, %v4465, %v3725
      %v4498 = vsel %vm1605, %v4466, %v3727
      %v4499 = vsel %vm1605, %v4467, %v3729
      %v4500 = vsel %vm1605, %v4468, %v3731
      %v4501 = vsel %vm1605, %v4469, %v3733
      %v4502 = vsel %vm1638, %v4470, %v3799
      %v4503 = vsel %vm1638, %v4471, %v3801
      %v4504 = vsel %vm1638, %v4472, %v3803
      %v4505 = vsel %vm1638, %v4473, %v3805
      %v4506 = vsel %vm1638, %v4474, %v3807
      %v4507 = vsel %vm1638, %v4475, %v3809
      %v4508 = vsel %vm1638, %v4476, %v3811
      %v4509 = vsel %vm1638, %v4477, %v3813
      %v4510 = vsel %vm1638, %v4478, %v3815
      %v4511 = vsel %vm1638, %v4479, %v3817
      %v4512 = vsel %vm1638, %v4480, %v3819
      %v4513 = vsel %vm1638, %v4481, %v3821
      %v4514 = vsel %vm1638, %v4482, %v3823
      %v4515 = vsel %vm1638, %v4483, %v3825
      %v4516 = vsel %vm1638, %v4484, %v3827
      %v4517 = vsel %vm1638, %v4485, %v3829
      %v4518 = vsel %vm1638, %v4486, %v3831
      %v4519 = vsel %vm1638, %v4487, %v3833
      %v4520 = vsel %vm1638, %v4488, %v3835
      %v4521 = vsel %vm1638, %v4489, %v3837
      %v4522 = vsel %vm1638, %v4490, %v3839
      %v4523 = vsel %vm1638, %v4491, %v3841
      %v4524 = vsel %vm1638, %v4492, %v3843
      %v4525 = vsel %vm1638, %v4493, %v3845
      %v4526 = vsel %vm1638, %v4494, %v3847
      %v4527 = vsel %vm1638, %v4495, %v3849
      %v4528 = vsel %vm1638, %v4496, %v3851
      %v4529 = vsel %vm1638, %v4497, %v3853
      %v4530 = vsel %vm1638, %v4498, %v3855
      %v4531 = vsel %vm1638, %v4499, %v3857
      %v4532 = vsel %vm1638, %v4500, %v3859
      %v4533 = vsel %vm1638, %v4501, %v3861
      %v4534 = vsel %vm1671, %v4502, %v3927
      %v4535 = vsel %vm1671, %v4503, %v3929
      %v4536 = vsel %vm1671, %v4504, %v3931
      %v4537 = vsel %vm1671, %v4505, %v3933
      %v4538 = vsel %vm1671, %v4506, %v3935
      %v4539 = vsel %vm1671, %v4507, %v3937
      %v4540 = vsel %vm1671, %v4508, %v3939
      %v4541 = vsel %vm1671, %v4509, %v3941
      %v4542 = vsel %vm1671, %v4510, %v3943
      %v4543 = vsel %vm1671, %v4511, %v3945
      %v4544 = vsel %vm1671, %v4512, %v3947
      %v4545 = vsel %vm1671, %v4513, %v3949
      %v4546 = vsel %vm1671, %v4514, %v3951
      %v4547 = vsel %vm1671, %v4515, %v3953
      %v4548 = vsel %vm1671, %v4516, %v3955
      %v4549 = vsel %vm1671, %v4517, %v3957
      %v4550 = vsel %vm1671, %v4518, %v3959
      %v4551 = vsel %vm1671, %v4519, %v3961
      %v4552 = vsel %vm1671, %v4520, %v3963
      %v4553 = vsel %vm1671, %v4521, %v3965
      %v4554 = vsel %vm1671, %v4522, %v3967
      %v4555 = vsel %vm1671, %v4523, %v3969
      %v4556 = vsel %vm1671, %v4524, %v3971
      %v4557 = vsel %vm1671, %v4525, %v3973
      %v4558 = vsel %vm1671, %v4526, %v3975
      %v4559 = vsel %vm1671, %v4527, %v3977
      %v4560 = vsel %vm1671, %v4528, %v3979
      %v4561 = vsel %vm1671, %v4529, %v3981
      %v4562 = vsel %vm1671, %v4530, %v3983
      %v4563 = vsel %vm1671, %v4531, %v3985
      %v4564 = vsel %vm1671, %v4532, %v3987
      %v4565 = vsel %vm1671, %v4533, %v3989
      %v4566 = vsel %vm1704, %v4534, %v4055
      %v4567 = vsel %vm1704, %v4535, %v4057
      %v4568 = vsel %vm1704, %v4536, %v4059
      %v4569 = vsel %vm1704, %v4537, %v4061
      %v4570 = vsel %vm1704, %v4538, %v4063
      %v4571 = vsel %vm1704, %v4539, %v4065
      %v4572 = vsel %vm1704, %v4540, %v4067
      %v4573 = vsel %vm1704, %v4541, %v4069
      %v4574 = vsel %vm1704, %v4542, %v4071
      %v4575 = vsel %vm1704, %v4543, %v4073
      %v4576 = vsel %vm1704, %v4544, %v4075
      %v4577 = vsel %vm1704, %v4545, %v4077
      %v4578 = vsel %vm1704, %v4546, %v4079
      %v4579 = vsel %vm1704, %v4547, %v4081
      %v4580 = vsel %vm1704, %v4548, %v4083
      %v4581 = vsel %vm1704, %v4549, %v4085
      %v4582 = vsel %vm1704, %v4550, %v4087
      %v4583 = vsel %vm1704, %v4551, %v4089
      %v4584 = vsel %vm1704, %v4552, %v4091
      %v4585 = vsel %vm1704, %v4553, %v4093
      %v4586 = vsel %vm1704, %v4554, %v4095
      %v4587 = vsel %vm1704, %v4555, %v4097
      %v4588 = vsel %vm1704, %v4556, %v4099
      %v4589 = vsel %vm1704, %v4557, %v4101
      %v4590 = vsel %vm1704, %v4558, %v4103
      %v4591 = vsel %vm1704, %v4559, %v4105
      %v4592 = vsel %vm1704, %v4560, %v4107
      %v4593 = vsel %vm1704, %v4561, %v4109
      %v4594 = vsel %vm1704, %v4562, %v4111
      %v4595 = vsel %vm1704, %v4563, %v4113
      %v4596 = vsel %vm1704, %v4564, %v4115
      %v4597 = vsel %vm1704, %v4565, %v4117
      %v4598 = vsel %vm1737, %v4566, %v4183
      %v4599 = vsel %vm1737, %v4567, %v4185
      %v4600 = vsel %vm1737, %v4568, %v4187
      %v4601 = vsel %vm1737, %v4569, %v4189
      %v4602 = vsel %vm1737, %v4570, %v4191
      %v4603 = vsel %vm1737, %v4571, %v4193
      %v4604 = vsel %vm1737, %v4572, %v4195
      %v4605 = vsel %vm1737, %v4573, %v4197
      %v4606 = vsel %vm1737, %v4574, %v4199
      %v4607 = vsel %vm1737, %v4575, %v4201
      %v4608 = vsel %vm1737, %v4576, %v4203
      %v4609 = vsel %vm1737, %v4577, %v4205
      %v4610 = vsel %vm1737, %v4578, %v4207
      %v4611 = vsel %vm1737, %v4579, %v4209
      %v4612 = vsel %vm1737, %v4580, %v4211
      %v4613 = vsel %vm1737, %v4581, %v4213
      %v4614 = vsel %vm1737, %v4582, %v4215
      %v4615 = vsel %vm1737, %v4583, %v4217
      %v4616 = vsel %vm1737, %v4584, %v4219
      %v4617 = vsel %vm1737, %v4585, %v4221
      %v4618 = vsel %vm1737, %v4586, %v4223
      %v4619 = vsel %vm1737, %v4587, %v4225
      %v4620 = vsel %vm1737, %v4588, %v4227
      %v4621 = vsel %vm1737, %v4589, %v4229
      %v4622 = vsel %vm1737, %v4590, %v4231
      %v4623 = vsel %vm1737, %v4591, %v4233
      %v4624 = vsel %vm1737, %v4592, %v4235
      %v4625 = vsel %vm1737, %v4593, %v4237
      %v4626 = vsel %vm1737, %v4594, %v4239
      %v4627 = vsel %vm1737, %v4595, %v4241
      %v4628 = vsel %vm1737, %v4596, %v4243
      %v4629 = vsel %vm1737, %v4597, %v4245
      %v4630 = vsel %vm1770, %v4598, %v4311
      %v4631 = vsel %vm1770, %v4599, %v4313
      %v4632 = vsel %vm1770, %v4600, %v4315
      %v4633 = vsel %vm1770, %v4601, %v4317
      %v4634 = vsel %vm1770, %v4602, %v4319
      %v4635 = vsel %vm1770, %v4603, %v4321
      %v4636 = vsel %vm1770, %v4604, %v4323
      %v4637 = vsel %vm1770, %v4605, %v4325
      %v4638 = vsel %vm1770, %v4606, %v4327
      %v4639 = vsel %vm1770, %v4607, %v4329
      %v4640 = vsel %vm1770, %v4608, %v4331
      %v4641 = vsel %vm1770, %v4609, %v4333
      %v4642 = vsel %vm1770, %v4610, %v4335
      %v4643 = vsel %vm1770, %v4611, %v4337
      %v4644 = vsel %vm1770, %v4612, %v4339
      %v4645 = vsel %vm1770, %v4613, %v4341
      %v4646 = vsel %vm1770, %v4614, %v4343
      %v4647 = vsel %vm1770, %v4615, %v4345
      %v4648 = vsel %vm1770, %v4616, %v4347
      %v4649 = vsel %vm1770, %v4617, %v4349
      %v4650 = vsel %vm1770, %v4618, %v4351
      %v4651 = vsel %vm1770, %v4619, %v4353
      %v4652 = vsel %vm1770, %v4620, %v4355
      %v4653 = vsel %vm1770, %v4621, %v4357
      %v4654 = vsel %vm1770, %v4622, %v4359
      %v4655 = vsel %vm1770, %v4623, %v4361
      %v4656 = vsel %vm1770, %v4624, %v4363
      %v4657 = vsel %vm1770, %v4625, %v4365
      %v4658 = vsel %vm1770, %v4626, %v4367
      %v4659 = vsel %vm1770, %v4627, %v4369
      %v4660 = vsel %vm1770, %v4628, %v4371
      %v4661 = vsel %vm1770, %v4629, %v4373
      %v4662 = vld [vmem:[%s3] sm:$0xff]
      %v4663 = vld [vmem:[%s3 + $0x8] sm:$0xff]
      %v4664 = vld [vmem:[%s3 + $0x10] sm:$0xff]
      %v4665 = vld [vmem:[%s3 + $0x18] sm:$0xff]
      %v4666 = vld [vmem:[%s3 + $0x20] sm:$0xff]
      %v4667 = vld [vmem:[%s3 + $0x28] sm:$0xff]
      %v4668 = vld [vmem:[%s3 + $0x30] sm:$0xff]
      %v4669 = vld [vmem:[%s3 + $0x38] sm:$0xff]
      %v4670 = vld [vmem:[%s3 + $0x40] sm:$0xff]
      %v4671 = vld [vmem:[%s321 + $0x1] sm:$0xff]
      %v4672 = vld [vmem:[%s321 + $0x9] sm:$0xff]
      %v4673 = vld [vmem:[%s321 + $0x19] sm:$0xff]
      %v4674 = vld [vmem:[%s321 + $0x21] sm:$0xff]
      %v4675 = vld [vmem:[%s321 + $0x31] sm:$0xff]
      %v4676 = vld [vmem:[%s321 + $0x39] sm:$0xff]
      %v4677 = vld [vmem:[%s321 + $0x49] sm:$0xff]
      %v4678 = vld [vmem:[%s321 + $0x51] sm:$0xff]
      %v4679 = vld [vmem:[%s321 + $0x61] sm:$0xff]
      %v4680 = vld [vmem:[%s321 + $0x69] sm:$0xff]
      %v4681 = vld [vmem:[%s321 + $0x79] sm:$0xff]
      %v4682 = vld [vmem:[%s321 + $0x81] sm:$0xff]
      %v4683 = vld [vmem:[%s321 + $0x91] sm:$0xff]
      %v4684 = vld [vmem:[%s321 + $0x99] sm:$0xff]
      %v4685 = vld [vmem:[%s321 + $0xa9] sm:$0xff]
      %v4686 = vld [vmem:[%s321 + $0xb1] sm:$0xff]
      %v4687 = vld [vmem:[%s321 + $0xc1] sm:$0xff]
      %v4688 = vld [vmem:[%s321 + $0xc9] sm:$0xff]
      %v4689 = vld [vmem:[%s321 + $0xd9] sm:$0xff]
      %v4690 = vld [vmem:[%s321 + $0xe1] sm:$0xff]
      %v4691 = vld [vmem:[%s321 + $0xf1] sm:$0xff]
      %v4692 = vld [vmem:[%s321 + $0xf9] sm:$0xff]
      %v4693 = vld [vmem:[%s321 + $0x109] sm:$0xff]
      %v4694 = vld [vmem:[%s321 + $0x111] sm:$0xff]
      %v4695 = vld [vmem:[%s321 + $0x121] sm:$0xff]
      %v4696 = vld [vmem:[%s321 + $0x129] sm:$0xff]
      %v4697 = vld [vmem:[%s321 + $0x139] sm:$0xff]
      %v4698 = vld [vmem:[%s321 + $0x141] sm:$0xff]
      %v4699 = vld [vmem:[%s321 + $0x151] sm:$0xff]
      %v4700 = vld [vmem:[%s321 + $0x159] sm:$0xff]
      %v4701 = vld [vmem:[%s321 + $0x169] sm:$0xff]
      %v4702 = vld [vmem:[%s321 + $0x171] sm:$0xff]
      %v4703 = vld [vmem:[%s4] sm:$0x1]
      %v4705 = vlaneseq
      %v4706 = vshrl.u32 %v4705, 7
      %v4707 = vsub.s32 0, %v4706
      %v4708 = vrot.slane %v4703, %v4707
      %v4711 = vsel %vm1819, %v4630, 0
      %v4714 = vsel %vm1819, %v4631, 0
      %v4717 = vsel %vm1819, %v4632, 0
      %v4720 = vsel %vm1819, %v4633, 0
      %v4723 = vsel %vm1819, %v4634, 0
      %v4726 = vsel %vm1819, %v4635, 0
      %v4729 = vsel %vm1819, %v4636, 0
      %v4732 = vsel %vm1819, %v4637, 0
      %v4735 = vsel %vm1819, %v4638, 0
      %v4738 = vsel %vm1819, %v4639, 0
      %v4741 = vsel %vm1819, %v4640, 0
      %v4744 = vsel %vm1819, %v4641, 0
      %v4747 = vsel %vm1819, %v4642, 0
      %v4750 = vsel %vm1819, %v4643, 0
      %v4753 = vsel %vm1819, %v4644, 0
      %v4756 = vsel %vm1819, %v4645, 0
      %v4759 = vsel %vm1819, %v4646, 0
      %v4762 = vsel %vm1819, %v4647, 0
      %v4765 = vsel %vm1819, %v4648, 0
      %v4768 = vsel %vm1819, %v4649, 0
      %v4771 = vsel %vm1819, %v4650, 0
      %v4774 = vsel %vm1819, %v4651, 0
      %v4777 = vsel %vm1819, %v4652, 0
      %v4780 = vsel %vm1819, %v4653, 0
      %v4783 = vsel %vm1819, %v4654, 0
      %v4786 = vsel %vm1819, %v4655, 0
      %v4789 = vsel %vm1819, %v4656, 0
      %v4792 = vsel %vm1819, %v4657, 0
      %v4795 = vsel %vm1819, %v4658, 0
      %v4798 = vsel %vm1819, %v4659, 0
      %v4801 = vsel %vm1819, %v4660, 0
      %v4804 = vsel %vm1819, %v4661, 0
      %4806 = vmatprep.subr.mxu0 0.0
      %4807 = vmatpush1.msra.mxu0 %v4662
      %4808 = vmatprep.subr.mxu0 0.0
      %4809 = vmatpush1.msra.mxu0 %v4663
      %4810 = vmatprep.subr.mxu0 0.0
      %4811 = vmatpush1.msra.mxu0 %v4664
      %4812 = vmatprep.subr.mxu0 0.0
      %4813 = vmatpush1.msra.mxu0 %v4665
      %4814 = vmatprep.subr.mxu0 0.0
      %4815 = vmatpush1.msra.mxu0 %v4666
      %4816 = vmatprep.subr.mxu0 0.0
      %4817 = vmatpush1.msra.mxu0 %v4667
      %4818 = vmatprep.subr.mxu0 0.0
      %4819 = vmatpush1.msra.mxu0 %v4668
      %4820 = vmatprep.subr.mxu0 0.0
      %4821 = vmatpush1.msra.mxu0 %v4669
      %4822 = vmatprep.subr.mxu0 0.0
      %4823 = vmatpush1.msra.mxu0 %v4670
      %4824 = vmatprep.subr.mxu0 0.0
      %4825 = vmatpush1.msra.mxu0 0.0
      %4826 = vmatprep.subr.mxu0 0.0
      %4827 = vmatpush1.msra.mxu0 0.0
      %4828 = vmatprep.subr.mxu0 0.0
      %4829 = vmatpush1.msra.mxu0 0.0
      %4830 = vmatprep.subr.mxu0 0.0
      %4831 = vmatpush1.msra.mxu0 0.0
      %4832 = vmatprep.subr.mxu0 0.0
      %4833 = vmatpush1.msra.mxu0 0.0
      %4834 = vmatprep.subr.mxu0 0.0
      %4835 = vmatpush1.msra.mxu0 0.0
      %4836 = vmatprep.subr.mxu0 0.0
      %4837 = vmatpush1.msra.mxu0 0.0
      %4838 = vmatprep.subr.mxu0 0.0
      %4839 = vmatpush1.msra.mxu0 0.0
      %4840 = vmatprep.subr.mxu0 0.0
      %4841 = vmatpush1.msra.mxu0 0.0
      %4842 = vmatprep.subr.mxu0 0.0
      %4843 = vmatpush1.msra.mxu0 0.0
      %4844 = vmatprep.subr.mxu0 0.0
      %4845 = vmatpush1.msra.mxu0 0.0
      %4846 = vmatprep.subr.mxu0 0.0
      %4847 = vmatpush1.msra.mxu0 0.0
      %4848 = vmatprep.subr.mxu0 0.0
      %4849 = vmatpush1.msra.mxu0 0.0
      %4850 = vmatprep.subr.mxu0 0.0
      %4851 = vmatpush1.msra.mxu0 0.0
      %4852 = vmatprep.subr.mxu0 0.0
      %4853 = vmatpush1.msra.mxu0 0.0
      %4854 = vmatprep.subr.mxu0 0.0
      %4855 = vmatpush1.msra.mxu0 0.0
      %4856 = vmatprep.subr.mxu0 0.0
      %4857 = vmatpush1.msra.mxu0 0.0
      %4858 = vmatprep.subr.mxu0 0.0
      %4859 = vmatpush1.msra.mxu0 0.0
      %4860 = vmatprep.subr.mxu0 0.0
      %4861 = vmatpush1.msra.mxu0 0.0
      %4862 = vmatprep.subr.mxu0 0.0
      %4863 = vmatpush1.msra.mxu0 0.0
      %4864 = vmatprep.subr.mxu0 0.0
      %4865 = vmatpush1.msra.mxu0 0.0
      %4866 = vmatprep.subr.mxu0 0.0
      %4867 = vmatpush1.msra.mxu0 0.0
      %4868 = vmatprep.subr.mxu0 0.0
      %4869 = vmatpush1.msra.mxu0 0.0
      %4870 = vmatprep.mubr.f32.mxu0 0.0
      %4871 = vmatmul.mubr.f32.gmra.mrb[0].mxu0 %v4711
      %v4872 = vpop.f32.mrb[0].mxu0
      %v4873 = vadd.f32 %v4708, %v4872
      %v4874 = vpop.f32.mrb[0].mxu0
      %4875 = vmatprep.mubr.f32.mxu0 0.0
      %4876 = vmatmul.mubr.f32.gmra.mrb[0].mxu0 %v4714
      %v4877 = vpop.f32.mrb[0].mxu0
      %v4878 = vadd.f32 %v4708, %v4877
      %v4879 = vpop.f32.mrb[0].mxu0
      %4880 = vmatprep.mubr.f32.mxu0 0.0
      %4881 = vmatmul.mubr.f32.gmra.mrb[0].mxu0 %v4717
      %v4882 = vpop.f32.mrb[0].mxu0
      %v4883 = vadd.f32 %v4708, %v4882
      %v4884 = vpop.f32.mrb[0].mxu0
      %4885 = vmatprep.mubr.f32.mxu0 0.0
      %4886 = vmatmul.mubr.f32.gmra.mrb[0].mxu0 %v4720
      %v4887 = vpop.f32.mrb[0].mxu0
      %v4888 = vadd.f32 %v4708, %v4887
      %v4889 = vpop.f32.mrb[0].mxu0
      %4890 = vmatprep.mubr.f32.mxu0 0.0
      %4891 = vmatmul.mubr.f32.gmra.mrb[0].mxu0 %v4723
      %v4892 = vpop.f32.mrb[0].mxu0
      %v4893 = vadd.f32 %v4708, %v4892
      %v4894 = vpop.f32.mrb[0].mxu0
      %4895 = vmatprep.mubr.f32.mxu0 0.0
      %4896 = vmatmul.mubr.f32.gmra.mrb[0].mxu0 %v4726
      %v4897 = vpop.f32.mrb[0].mxu0
      %v4898 = vadd.f32 %v4708, %v4897
      %v4899 = vpop.f32.mrb[0].mxu0
      %4900 = vmatprep.mubr.f32.mxu0 0.0
      %4901 = vmatmul.mubr.f32.gmra.mrb[0].mxu0 %v4729
      %v4902 = vpop.f32.mrb[0].mxu0
      %v4903 = vadd.f32 %v4708, %v4902
      %v4904 = vpop.f32.mrb[0].mxu0
      %4905 = vmatprep.mubr.f32.mxu0 0.0
      %4906 = vmatmul.mubr.f32.gmra.mrb[0].mxu0 %v4732
      %v4907 = vpop.f32.mrb[0].mxu0
      %v4908 = vadd.f32 %v4708, %v4907
      %v4909 = vpop.f32.mrb[0].mxu0
      %4910 = vmatprep.mubr.f32.mxu0 0.0
      %4911 = vmatmul.mubr.f32.gmra.mrb[0].mxu0 %v4735
      %v4912 = vpop.f32.mrb[0].mxu0
      %v4913 = vadd.f32 %v4708, %v4912
      %v4914 = vpop.f32.mrb[0].mxu0
      %4915 = vmatprep.mubr.f32.mxu0 0.0
      %4916 = vmatmul.mubr.f32.gmra.mrb[0].mxu0 %v4738
      %v4917 = vpop.f32.mrb[0].mxu0
      %v4918 = vadd.f32 %v4708, %v4917
      %v4919 = vpop.f32.mrb[0].mxu0
      %4920 = vmatprep.mubr.f32.mxu0 0.0
      %4921 = vmatmul.mubr.f32.gmra.mrb[0].mxu0 %v4741
      %v4922 = vpop.f32.mrb[0].mxu0
      %v4923 = vadd.f32 %v4708, %v4922
      %v4924 = vpop.f32.mrb[0].mxu0
      %4925 = vmatprep.mubr.f32.mxu0 0.0
      %4926 = vmatmul.mubr.f32.gmra.mrb[0].mxu0 %v4744
      %v4927 = vpop.f32.mrb[0].mxu0
      %v4928 = vadd.f32 %v4708, %v4927
      %v4929 = vpop.f32.mrb[0].mxu0
      %4930 = vmatprep.mubr.f32.mxu0 0.0
      %4931 = vmatmul.mubr.f32.gmra.mrb[0].mxu0 %v4747
      %v4932 = vpop.f32.mrb[0].mxu0
      %v4933 = vadd.f32 %v4708, %v4932
      %v4934 = vpop.f32.mrb[0].mxu0
      %4935 = vmatprep.mubr.f32.mxu0 0.0
      %4936 = vmatmul.mubr.f32.gmra.mrb[0].mxu0 %v4750
      %v4937 = vpop.f32.mrb[0].mxu0
      %v4938 = vadd.f32 %v4708, %v4937
      %v4939 = vpop.f32.mrb[0].mxu0
      %4940 = vmatprep.mubr.f32.mxu0 0.0
      %4941 = vmatmul.mubr.f32.gmra.mrb[0].mxu0 %v4753
      %v4942 = vpop.f32.mrb[0].mxu0
      %v4943 = vadd.f32 %v4708, %v4942
      %v4944 = vpop.f32.mrb[0].mxu0
      %4945 = vmatprep.mubr.f32.mxu0 0.0
      %4946 = vmatmul.mubr.f32.gmra.mrb[0].mxu0 %v4756
      %v4947 = vpop.f32.mrb[0].mxu0
      %v4948 = vadd.f32 %v4708, %v4947
      %v4949 = vpop.f32.mrb[0].mxu0
      %4950 = vmatprep.mubr.f32.mxu0 0.0
      %4951 = vmatmul.mubr.f32.gmra.mrb[0].mxu0 %v4759
      %v4952 = vpop.f32.mrb[0].mxu0
      %v4953 = vadd.f32 %v4708, %v4952
      %v4954 = vpop.f32.mrb[0].mxu0
      %4955 = vmatprep.mubr.f32.mxu0 0.0
      %4956 = vmatmul.mubr.f32.gmra.mrb[0].mxu0 %v4762
      %v4957 = vpop.f32.mrb[0].mxu0
      %v4958 = vadd.f32 %v4708, %v4957
      %v4959 = vpop.f32.mrb[0].mxu0
      %4960 = vmatprep.mubr.f32.mxu0 0.0
      %4961 = vmatmul.mubr.f32.gmra.mrb[0].mxu0 %v4765
      %v4962 = vpop.f32.mrb[0].mxu0
      %v4963 = vadd.f32 %v4708, %v4962
      %v4964 = vpop.f32.mrb[0].mxu0
      %4965 = vmatprep.mubr.f32.mxu0 0.0
      %4966 = vmatmul.mubr.f32.gmra.mrb[0].mxu0 %v4768
      %v4967 = vpop.f32.mrb[0].mxu0
      %v4968 = vadd.f32 %v4708, %v4967
      %v4969 = vpop.f32.mrb[0].mxu0
      %4970 = vmatprep.mubr.f32.mxu0 0.0
      %4971 = vmatmul.mubr.f32.gmra.mrb[0].mxu0 %v4771
      %v4972 = vpop.f32.mrb[0].mxu0
      %v4973 = vadd.f32 %v4708, %v4972
      %v4974 = vpop.f32.mrb[0].mxu0
      %4975 = vmatprep.mubr.f32.mxu0 0.0
      %4976 = vmatmul.mubr.f32.gmra.mrb[0].mxu0 %v4774
      %v4977 = vpop.f32.mrb[0].mxu0
      %v4978 = vadd.f32 %v4708, %v4977
      %v4979 = vpop.f32.mrb[0].mxu0
      %4980 = vmatprep.mubr.f32.mxu0 0.0
      %4981 = vmatmul.mubr.f32.gmra.mrb[0].mxu0 %v4777
      %v4982 = vpop.f32.mrb[0].mxu0
      %v4983 = vadd.f32 %v4708, %v4982
      %v4984 = vpop.f32.mrb[0].mxu0
      %4985 = vmatprep.mubr.f32.mxu0 0.0
      %4986 = vmatmul.mubr.f32.gmra.mrb[0].mxu0 %v4780
      %v4987 = vpop.f32.mrb[0].mxu0
      %v4988 = vadd.f32 %v4708, %v4987
      %v4989 = vpop.f32.mrb[0].mxu0
      %4990 = vmatprep.mubr.f32.mxu0 0.0
      %4991 = vmatmul.mubr.f32.gmra.mrb[0].mxu0 %v4783
      %v4992 = vpop.f32.mrb[0].mxu0
      %v4993 = vadd.f32 %v4708, %v4992
      %v4994 = vpop.f32.mrb[0].mxu0
      %4995 = vmatprep.mubr.f32.mxu0 0.0
      %4996 = vmatmul.mubr.f32.gmra.mrb[0].mxu0 %v4786
      %v4997 = vpop.f32.mrb[0].mxu0
      %v4998 = vadd.f32 %v4708, %v4997
      %v4999 = vpop.f32.mrb[0].mxu0
      %5000 = vmatprep.mubr.f32.mxu0 0.0
      %5001 = vmatmul.mubr.f32.gmra.mrb[0].mxu0 %v4789
      %v5002 = vpop.f32.mrb[0].mxu0
      %v5003 = vadd.f32 %v4708, %v5002
      %v5004 = vpop.f32.mrb[0].mxu0
      %5005 = vmatprep.mubr.f32.mxu0 0.0
      %5006 = vmatmul.mubr.f32.gmra.mrb[0].mxu0 %v4792
      %v5007 = vpop.f32.mrb[0].mxu0
      %v5008 = vadd.f32 %v4708, %v5007
      %v5009 = vpop.f32.mrb[0].mxu0
      %5010 = vmatprep.mubr.f32.mxu0 0.0
      %5011 = vmatmul.mubr.f32.gmra.mrb[0].mxu0 %v4795
      %v5012 = vpop.f32.mrb[0].mxu0
      %v5013 = vadd.f32 %v4708, %v5012
      %v5014 = vpop.f32.mrb[0].mxu0
      %5015 = vmatprep.mubr.f32.mxu0 0.0
      %5016 = vmatmul.mubr.f32.gmra.mrb[0].mxu0 %v4798
      %v5017 = vpop.f32.mrb[0].mxu0
      %v5018 = vadd.f32 %v4708, %v5017
      %v5019 = vpop.f32.mrb[0].mxu0
      %5020 = vmatprep.mubr.f32.mxu0 0.0
      %5021 = vmatmul.mubr.f32.gmra.mrb[0].mxu0 %v4801
      %v5022 = vpop.f32.mrb[0].mxu0
      %v5023 = vadd.f32 %v4708, %v5022
      %v5024 = vpop.f32.mrb[0].mxu0
      %5025 = vmatprep.mubr.f32.mxu0 0.0
      %5026 = vmatmul.mubr.f32.gmra.mrb[0].mxu0 %v4804
      %v5027 = vpop.f32.mrb[0].mxu0
      %v5028 = vadd.f32 %v4708, %v5027
      %v5029 = vpop.f32.mrb[0].mxu0
      %5030 = vdwg.mxu0
      %v5031 = vadd.f32 %v4873, %v4671
      %v5032 = vadd.f32 %v4878, %v4672
      %v5033 = vadd.f32 %v4883, %v4673
      %v5034 = vadd.f32 %v4888, %v4674
      %v5035 = vadd.f32 %v4893, %v4675
      %v5036 = vadd.f32 %v4898, %v4676
      %v5037 = vadd.f32 %v4903, %v4677
      %v5038 = vadd.f32 %v4908, %v4678
      %v5039 = vadd.f32 %v4913, %v4679
      %v5040 = vadd.f32 %v4918, %v4680
      %v5041 = vadd.f32 %v4923, %v4681
      %v5042 = vadd.f32 %v4928, %v4682
      %v5043 = vadd.f32 %v4933, %v4683
      %v5044 = vadd.f32 %v4938, %v4684
      %v5045 = vadd.f32 %v4943, %v4685
      %v5046 = vadd.f32 %v4948, %v4686
      %v5047 = vadd.f32 %v4953, %v4687
      %v5048 = vadd.f32 %v4958, %v4688
      %v5049 = vadd.f32 %v4963, %v4689
      %v5050 = vadd.f32 %v4968, %v4690
      %v5051 = vadd.f32 %v4973, %v4691
      %v5052 = vadd.f32 %v4978, %v4692
      %v5053 = vadd.f32 %v4983, %v4693
      %v5054 = vadd.f32 %v4988, %v4694
      %v5055 = vadd.f32 %v4993, %v4695
      %v5056 = vadd.f32 %v4998, %v4696
      %v5057 = vadd.f32 %v5003, %v4697
      %v5058 = vadd.f32 %v5008, %v4698
      %v5059 = vadd.f32 %v5013, %v4699
      %v5060 = vadd.f32 %v5018, %v4700
      %v5061 = vadd.f32 %v5023, %v4701
      %v5062 = vadd.f32 %v5028, %v4702
      %v5063 = vmul.f32 %v5031, 0.5
      %v5064 = vmul.f32 %v5032, 0.5
      %v5065 = vmul.f32 %v5033, 0.5
      %v5066 = vmul.f32 %v5034, 0.5
      %v5067 = vmul.f32 %v5035, 0.5
      %v5068 = vmul.f32 %v5036, 0.5
      %v5069 = vmul.f32 %v5037, 0.5
      %v5070 = vmul.f32 %v5038, 0.5
      %v5071 = vmul.f32 %v5039, 0.5
      %v5072 = vmul.f32 %v5040, 0.5
      %v5073 = vmul.f32 %v5041, 0.5
      %v5074 = vmul.f32 %v5042, 0.5
      %v5075 = vmul.f32 %v5043, 0.5
      %v5076 = vmul.f32 %v5044, 0.5
      %v5077 = vmul.f32 %v5045, 0.5
      %v5078 = vmul.f32 %v5046, 0.5
      %v5079 = vmul.f32 %v5047, 0.5
      %v5080 = vmul.f32 %v5048, 0.5
      %v5081 = vmul.f32 %v5049, 0.5
      %v5082 = vmul.f32 %v5050, 0.5
      %v5083 = vmul.f32 %v5051, 0.5
      %v5084 = vmul.f32 %v5052, 0.5
      %v5085 = vmul.f32 %v5053, 0.5
      %v5086 = vmul.f32 %v5054, 0.5
      %v5087 = vmul.f32 %v5055, 0.5
      %v5088 = vmul.f32 %v5056, 0.5
      %v5089 = vmul.f32 %v5057, 0.5
      %v5090 = vmul.f32 %v5058, 0.5
      %v5091 = vmul.f32 %v5059, 0.5
      %v5092 = vmul.f32 %v5060, 0.5
      %v5093 = vmul.f32 %v5061, 0.5
      %v5094 = vmul.f32 %v5062, 0.5
      %v5095 = vmul.f32 %v5031, 0.70710677
      %v5096 = vmul.f32 %v5032, 0.70710677
      %v5097 = vmul.f32 %v5033, 0.70710677
      %v5098 = vmul.f32 %v5034, 0.70710677
      %v5099 = vmul.f32 %v5035, 0.70710677
      %v5100 = vmul.f32 %v5036, 0.70710677
      %v5101 = vmul.f32 %v5037, 0.70710677
      %v5102 = vmul.f32 %v5038, 0.70710677
      %v5103 = vmul.f32 %v5039, 0.70710677
      %v5104 = vmul.f32 %v5040, 0.70710677
      %v5105 = vmul.f32 %v5041, 0.70710677
      %v5106 = vmul.f32 %v5042, 0.70710677
      %v5107 = vmul.f32 %v5043, 0.70710677
      %v5108 = vmul.f32 %v5044, 0.70710677
      %v5109 = vmul.f32 %v5045, 0.70710677
      %v5110 = vmul.f32 %v5046, 0.70710677
      %v5111 = vmul.f32 %v5047, 0.70710677
      %v5112 = vmul.f32 %v5048, 0.70710677
      %v5113 = vmul.f32 %v5049, 0.70710677
      %v5114 = vmul.f32 %v5050, 0.70710677
      %v5115 = vmul.f32 %v5051, 0.70710677
      %v5116 = vmul.f32 %v5052, 0.70710677
      %v5117 = vmul.f32 %v5053, 0.70710677
      %v5118 = vmul.f32 %v5054, 0.70710677
      %v5119 = vmul.f32 %v5055, 0.70710677
      %v5120 = vmul.f32 %v5056, 0.70710677
      %v5121 = vmul.f32 %v5057, 0.70710677
      %v5122 = vmul.f32 %v5058, 0.70710677
      %v5123 = vmul.f32 %v5059, 0.70710677
      %v5124 = vmul.f32 %v5060, 0.70710677
      %v5125 = vmul.f32 %v5061, 0.70710677
      %v5126 = vmul.f32 %v5062, 0.70710677
      %vm5127 = vcmp.ge.f32.partialorder %v5095, 0.0
      %vm5128 = vcmp.ge.f32.partialorder %v5096, 0.0
      %vm5129 = vcmp.ge.f32.partialorder %v5097, 0.0
      %vm5130 = vcmp.ge.f32.partialorder %v5098, 0.0
      %vm5131 = vcmp.ge.f32.partialorder %v5099, 0.0
      %vm5132 = vcmp.ge.f32.partialorder %v5100, 0.0
      %vm5133 = vcmp.ge.f32.partialorder %v5101, 0.0
      %vm5134 = vcmp.ge.f32.partialorder %v5102, 0.0
      %vm5135 = vcmp.ge.f32.partialorder %v5103, 0.0
      %vm5136 = vcmp.ge.f32.partialorder %v5104, 0.0
      %vm5137 = vcmp.ge.f32.partialorder %v5105, 0.0
      %vm5138 = vcmp.ge.f32.partialorder %v5106, 0.0
      %vm5139 = vcmp.ge.f32.partialorder %v5107, 0.0
      %vm5140 = vcmp.ge.f32.partialorder %v5108, 0.0
      %vm5141 = vcmp.ge.f32.partialorder %v5109, 0.0
      %vm5142 = vcmp.ge.f32.partialorder %v5110, 0.0
      %vm5143 = vcmp.ge.f32.partialorder %v5111, 0.0
      %vm5144 = vcmp.ge.f32.partialorder %v5112, 0.0
      %vm5145 = vcmp.ge.f32.partialorder %v5113, 0.0
      %vm5146 = vcmp.ge.f32.partialorder %v5114, 0.0
      %vm5147 = vcmp.ge.f32.partialorder %v5115, 0.0
      %vm5148 = vcmp.ge.f32.partialorder %v5116, 0.0
      %vm5149 = vcmp.ge.f32.partialorder %v5117, 0.0
      %vm5150 = vcmp.ge.f32.partialorder %v5118, 0.0
      %vm5151 = vcmp.ge.f32.partialorder %v5119, 0.0
      %vm5152 = vcmp.ge.f32.partialorder %v5120, 0.0
      %vm5153 = vcmp.ge.f32.partialorder %v5121, 0.0
      %vm5154 = vcmp.ge.f32.partialorder %v5122, 0.0
      %vm5155 = vcmp.ge.f32.partialorder %v5123, 0.0
      %vm5156 = vcmp.ge.f32.partialorder %v5124, 0.0
      %vm5157 = vcmp.ge.f32.partialorder %v5125, 0.0
      %vm5158 = vcmp.ge.f32.partialorder %v5126, 0.0
      %v5159 = vsel %vm5127, 1.0, -1.0
      %v5160 = vsel %vm5128, 1.0, -1.0
      %v5161 = vsel %vm5129, 1.0, -1.0
      %v5162 = vsel %vm5130, 1.0, -1.0
      %v5163 = vsel %vm5131, 1.0, -1.0
      %v5164 = vsel %vm5132, 1.0, -1.0
      %v5165 = vsel %vm5133, 1.0, -1.0
      %v5166 = vsel %vm5134, 1.0, -1.0
      %v5167 = vsel %vm5135, 1.0, -1.0
      %v5168 = vsel %vm5136, 1.0, -1.0
      %v5169 = vsel %vm5137, 1.0, -1.0
      %v5170 = vsel %vm5138, 1.0, -1.0
      %v5171 = vsel %vm5139, 1.0, -1.0
      %v5172 = vsel %vm5140, 1.0, -1.0
      %v5173 = vsel %vm5141, 1.0, -1.0
      %v5174 = vsel %vm5142, 1.0, -1.0
      %v5175 = vsel %vm5143, 1.0, -1.0
      %v5176 = vsel %vm5144, 1.0, -1.0
      %v5177 = vsel %vm5145, 1.0, -1.0
      %v5178 = vsel %vm5146, 1.0, -1.0
      %v5179 = vsel %vm5147, 1.0, -1.0
      %v5180 = vsel %vm5148, 1.0, -1.0
      %v5181 = vsel %vm5149, 1.0, -1.0
      %v5182 = vsel %vm5150, 1.0, -1.0
      %v5183 = vsel %vm5151, 1.0, -1.0
      %v5184 = vsel %vm5152, 1.0, -1.0
      %v5185 = vsel %vm5153, 1.0, -1.0
      %v5186 = vsel %vm5154, 1.0, -1.0
      %v5187 = vsel %vm5155, 1.0, -1.0
      %v5188 = vsel %vm5156, 1.0, -1.0
      %v5189 = vsel %vm5157, 1.0, -1.0
      %v5190 = vsel %vm5158, 1.0, -1.0
      %v5191 = vand.u32 2147483647, %v5095
      %v5192 = vand.u32 2147483647, %v5096
      %v5193 = vand.u32 2147483647, %v5097
      %v5194 = vand.u32 2147483647, %v5098
      %v5195 = vand.u32 2147483647, %v5099
      %v5196 = vand.u32 2147483647, %v5100
      %v5197 = vand.u32 2147483647, %v5101
      %v5198 = vand.u32 2147483647, %v5102
      %v5199 = vand.u32 2147483647, %v5103
      %v5200 = vand.u32 2147483647, %v5104
      %v5201 = vand.u32 2147483647, %v5105
      %v5202 = vand.u32 2147483647, %v5106
      %v5203 = vand.u32 2147483647, %v5107
      %v5204 = vand.u32 2147483647, %v5108
      %v5205 = vand.u32 2147483647, %v5109
      %v5206 = vand.u32 2147483647, %v5110
      %v5207 = vand.u32 2147483647, %v5111
      %v5208 = vand.u32 2147483647, %v5112
      %v5209 = vand.u32 2147483647, %v5113
      %v5210 = vand.u32 2147483647, %v5114
      %v5211 = vand.u32 2147483647, %v5115
      %v5212 = vand.u32 2147483647, %v5116
      %v5213 = vand.u32 2147483647, %v5117
      %v5214 = vand.u32 2147483647, %v5118
      %v5215 = vand.u32 2147483647, %v5119
      %v5216 = vand.u32 2147483647, %v5120
      %v5217 = vand.u32 2147483647, %v5121
      %v5218 = vand.u32 2147483647, %v5122
      %v5219 = vand.u32 2147483647, %v5123
      %v5220 = vand.u32 2147483647, %v5124
      %v5221 = vand.u32 2147483647, %v5125
      %v5222 = vand.u32 2147483647, %v5126
      %v5223 = vmul.f32 %v5191, 0.3275911
      %v5224 = vmul.f32 %v5192, 0.3275911
      %v5225 = vmul.f32 %v5193, 0.3275911
      %v5226 = vmul.f32 %v5194, 0.3275911
      %v5227 = vmul.f32 %v5195, 0.3275911
      %v5228 = vmul.f32 %v5196, 0.3275911
      %v5229 = vmul.f32 %v5197, 0.3275911
      %v5230 = vmul.f32 %v5198, 0.3275911
      %v5231 = vmul.f32 %v5199, 0.3275911
      %v5232 = vmul.f32 %v5200, 0.3275911
      %v5233 = vmul.f32 %v5201, 0.3275911
      %v5234 = vmul.f32 %v5202, 0.3275911
      %v5235 = vmul.f32 %v5203, 0.3275911
      %v5236 = vmul.f32 %v5204, 0.3275911
      %v5237 = vmul.f32 %v5205, 0.3275911
      %v5238 = vmul.f32 %v5206, 0.3275911
      %v5239 = vmul.f32 %v5207, 0.3275911
      %v5240 = vmul.f32 %v5208, 0.3275911
      %v5241 = vmul.f32 %v5209, 0.3275911
      %v5242 = vmul.f32 %v5210, 0.3275911
      %v5243 = vmul.f32 %v5211, 0.3275911
      %v5244 = vmul.f32 %v5212, 0.3275911
      %v5245 = vmul.f32 %v5213, 0.3275911
      %v5246 = vmul.f32 %v5214, 0.3275911
      %v5247 = vmul.f32 %v5215, 0.3275911
      %v5248 = vmul.f32 %v5216, 0.3275911
      %v5249 = vmul.f32 %v5217, 0.3275911
      %v5250 = vmul.f32 %v5218, 0.3275911
      %v5251 = vmul.f32 %v5219, 0.3275911
      %v5252 = vmul.f32 %v5220, 0.3275911
      %v5253 = vmul.f32 %v5221, 0.3275911
      %v5254 = vmul.f32 %v5222, 0.3275911
      %v5255 = vadd.f32 %v5223, 1.0
      %v5256 = vadd.f32 %v5224, 1.0
      %v5257 = vadd.f32 %v5225, 1.0
      %v5258 = vadd.f32 %v5226, 1.0
      %v5259 = vadd.f32 %v5227, 1.0
      %v5260 = vadd.f32 %v5228, 1.0
      %v5261 = vadd.f32 %v5229, 1.0
      %v5262 = vadd.f32 %v5230, 1.0
      %v5263 = vadd.f32 %v5231, 1.0
      %v5264 = vadd.f32 %v5232, 1.0
      %v5265 = vadd.f32 %v5233, 1.0
      %v5266 = vadd.f32 %v5234, 1.0
      %v5267 = vadd.f32 %v5235, 1.0
      %v5268 = vadd.f32 %v5236, 1.0
      %v5269 = vadd.f32 %v5237, 1.0
      %v5270 = vadd.f32 %v5238, 1.0
      %v5271 = vadd.f32 %v5239, 1.0
      %v5272 = vadd.f32 %v5240, 1.0
      %v5273 = vadd.f32 %v5241, 1.0
      %v5274 = vadd.f32 %v5242, 1.0
      %v5275 = vadd.f32 %v5243, 1.0
      %v5276 = vadd.f32 %v5244, 1.0
      %v5277 = vadd.f32 %v5245, 1.0
      %v5278 = vadd.f32 %v5246, 1.0
      %v5279 = vadd.f32 %v5247, 1.0
      %v5280 = vadd.f32 %v5248, 1.0
      %v5281 = vadd.f32 %v5249, 1.0
      %v5282 = vadd.f32 %v5250, 1.0
      %v5283 = vadd.f32 %v5251, 1.0
      %v5284 = vadd.f32 %v5252, 1.0
      %v5285 = vadd.f32 %v5253, 1.0
      %v5286 = vadd.f32 %v5254, 1.0
      %v5287 = vrcp.pop %v5255
      %v5288 = vmul.f32 1.0, %v5287
      %v5289 = vrcp.pop %v5256
      %v5290 = vmul.f32 1.0, %v5289
      %v5291 = vrcp.pop %v5257
      %v5292 = vmul.f32 1.0, %v5291
      %v5293 = vrcp.pop %v5258
      %v5294 = vmul.f32 1.0, %v5293
      %v5295 = vrcp.pop %v5259
      %v5296 = vmul.f32 1.0, %v5295
      %v5297 = vrcp.pop %v5260
      %v5298 = vmul.f32 1.0, %v5297
      %v5299 = vrcp.pop %v5261
      %v5300 = vmul.f32 1.0, %v5299
      %v5301 = vrcp.pop %v5262
      %v5302 = vmul.f32 1.0, %v5301
      %v5303 = vrcp.pop %v5263
      %v5304 = vmul.f32 1.0, %v5303
      %v5305 = vrcp.pop %v5264
      %v5306 = vmul.f32 1.0, %v5305
      %v5307 = vrcp.pop %v5265
      %v5308 = vmul.f32 1.0, %v5307
      %v5309 = vrcp.pop %v5266
      %v5310 = vmul.f32 1.0, %v5309
      %v5311 = vrcp.pop %v5267
      %v5312 = vmul.f32 1.0, %v5311
      %v5313 = vrcp.pop %v5268
      %v5314 = vmul.f32 1.0, %v5313
      %v5315 = vrcp.pop %v5269
      %v5316 = vmul.f32 1.0, %v5315
      %v5317 = vrcp.pop %v5270
      %v5318 = vmul.f32 1.0, %v5317
      %v5319 = vrcp.pop %v5271
      %v5320 = vmul.f32 1.0, %v5319
      %v5321 = vrcp.pop %v5272
      %v5322 = vmul.f32 1.0, %v5321
      %v5323 = vrcp.pop %v5273
      %v5324 = vmul.f32 1.0, %v5323
      %v5325 = vrcp.pop %v5274
      %v5326 = vmul.f32 1.0, %v5325
      %v5327 = vrcp.pop %v5275
      %v5328 = vmul.f32 1.0, %v5327
      %v5329 = vrcp.pop %v5276
      %v5330 = vmul.f32 1.0, %v5329
      %v5331 = vrcp.pop %v5277
      %v5332 = vmul.f32 1.0, %v5331
      %v5333 = vrcp.pop %v5278
      %v5334 = vmul.f32 1.0, %v5333
      %v5335 = vrcp.pop %v5279
      %v5336 = vmul.f32 1.0, %v5335
      %v5337 = vrcp.pop %v5280
      %v5338 = vmul.f32 1.0, %v5337
      %v5339 = vrcp.pop %v5281
      %v5340 = vmul.f32 1.0, %v5339
      %v5341 = vrcp.pop %v5282
      %v5342 = vmul.f32 1.0, %v5341
      %v5343 = vrcp.pop %v5283
      %v5344 = vmul.f32 1.0, %v5343
      %v5345 = vrcp.pop %v5284
      %v5346 = vmul.f32 1.0, %v5345
      %v5347 = vrcp.pop %v5285
      %v5348 = vmul.f32 1.0, %v5347
      %v5349 = vrcp.pop %v5286
      %v5350 = vmul.f32 1.0, %v5349
      %v5351 = vmul.f32 %v5288, 1.0614054
      %v5352 = vmul.f32 %v5290, 1.0614054
      %v5353 = vmul.f32 %v5292, 1.0614054
      %v5354 = vmul.f32 %v5294, 1.0614054
      %v5355 = vmul.f32 %v5296, 1.0614054
      %v5356 = vmul.f32 %v5298, 1.0614054
      %v5357 = vmul.f32 %v5300, 1.0614054
      %v5358 = vmul.f32 %v5302, 1.0614054
      %v5359 = vmul.f32 %v5304, 1.0614054
      %v5360 = vmul.f32 %v5306, 1.0614054
      %v5361 = vmul.f32 %v5308, 1.0614054
      %v5362 = vmul.f32 %v5310, 1.0614054
      %v5363 = vmul.f32 %v5312, 1.0614054
      %v5364 = vmul.f32 %v5314, 1.0614054
      %v5365 = vmul.f32 %v5316, 1.0614054
      %v5366 = vmul.f32 %v5318, 1.0614054
      %v5367 = vmul.f32 %v5320, 1.0614054
      %v5368 = vmul.f32 %v5322, 1.0614054
      %v5369 = vmul.f32 %v5324, 1.0614054
      %v5370 = vmul.f32 %v5326, 1.0614054
      %v5371 = vmul.f32 %v5328, 1.0614054
      %v5372 = vmul.f32 %v5330, 1.0614054
      %v5373 = vmul.f32 %v5332, 1.0614054
      %v5374 = vmul.f32 %v5334, 1.0614054
      %v5375 = vmul.f32 %v5336, 1.0614054
      %v5376 = vmul.f32 %v5338, 1.0614054
      %v5377 = vmul.f32 %v5340, 1.0614054
      %v5378 = vmul.f32 %v5342, 1.0614054
      %v5379 = vmul.f32 %v5344, 1.0614054
      %v5380 = vmul.f32 %v5346, 1.0614054
      %v5381 = vmul.f32 %v5348, 1.0614054
      %v5382 = vmul.f32 %v5350, 1.0614054
      %v5383 = vadd.f32 %v5351, -1.4531521
      %v5384 = vadd.f32 %v5352, -1.4531521
      %v5385 = vadd.f32 %v5353, -1.4531521
      %v5386 = vadd.f32 %v5354, -1.4531521
      %v5387 = vadd.f32 %v5355, -1.4531521
      %v5388 = vadd.f32 %v5356, -1.4531521
      %v5389 = vadd.f32 %v5357, -1.4531521
      %v5390 = vadd.f32 %v5358, -1.4531521
      %v5391 = vadd.f32 %v5359, -1.4531521
      %v5392 = vadd.f32 %v5360, -1.4531521
      %v5393 = vadd.f32 %v5361, -1.4531521
      %v5394 = vadd.f32 %v5362, -1.4531521
      %v5395 = vadd.f32 %v5363, -1.4531521
      %v5396 = vadd.f32 %v5364, -1.4531521
      %v5397 = vadd.f32 %v5365, -1.4531521
      %v5398 = vadd.f32 %v5366, -1.4531521
      %v5399 = vadd.f32 %v5367, -1.4531521
      %v5400 = vadd.f32 %v5368, -1.4531521
      %v5401 = vadd.f32 %v5369, -1.4531521
      %v5402 = vadd.f32 %v5370, -1.4531521
      %v5403 = vadd.f32 %v5371, -1.4531521
      %v5404 = vadd.f32 %v5372, -1.4531521
      %v5405 = vadd.f32 %v5373, -1.4531521
      %v5406 = vadd.f32 %v5374, -1.4531521
      %v5407 = vadd.f32 %v5375, -1.4531521
      %v5408 = vadd.f32 %v5376, -1.4531521
      %v5409 = vadd.f32 %v5377, -1.4531521
      %v5410 = vadd.f32 %v5378, -1.4531521
      %v5411 = vadd.f32 %v5379, -1.4531521
      %v5412 = vadd.f32 %v5380, -1.4531521
      %v5413 = vadd.f32 %v5381, -1.4531521
      %v5414 = vadd.f32 %v5382, -1.4531521
      %v5415 = vmul.f32 %v5383, %v5288
      %v5416 = vmul.f32 %v5384, %v5290
      %v5417 = vmul.f32 %v5385, %v5292
      %v5418 = vmul.f32 %v5386, %v5294
      %v5419 = vmul.f32 %v5387, %v5296
      %v5420 = vmul.f32 %v5388, %v5298
      %v5421 = vmul.f32 %v5389, %v5300
      %v5422 = vmul.f32 %v5390, %v5302
      %v5423 = vmul.f32 %v5391, %v5304
      %v5424 = vmul.f32 %v5392, %v5306
      %v5425 = vmul.f32 %v5393, %v5308
      %v5426 = vmul.f32 %v5394, %v5310
      %v5427 = vmul.f32 %v5395, %v5312
      %v5428 = vmul.f32 %v5396, %v5314
      %v5429 = vmul.f32 %v5397, %v5316
      %v5430 = vmul.f32 %v5398, %v5318
      %v5431 = vmul.f32 %v5399, %v5320
      %v5432 = vmul.f32 %v5400, %v5322
      %v5433 = vmul.f32 %v5401, %v5324
      %v5434 = vmul.f32 %v5402, %v5326
      %v5435 = vmul.f32 %v5403, %v5328
      %v5436 = vmul.f32 %v5404, %v5330
      %v5437 = vmul.f32 %v5405, %v5332
      %v5438 = vmul.f32 %v5406, %v5334
      %v5439 = vmul.f32 %v5407, %v5336
      %v5440 = vmul.f32 %v5408, %v5338
      %v5441 = vmul.f32 %v5409, %v5340
      %v5442 = vmul.f32 %v5410, %v5342
      %v5443 = vmul.f32 %v5411, %v5344
      %v5444 = vmul.f32 %v5412, %v5346
      %v5445 = vmul.f32 %v5413, %v5348
      %v5446 = vmul.f32 %v5414, %v5350
      %v5447 = vadd.f32 %v5415, 1.4214138
      %v5448 = vadd.f32 %v5416, 1.4214138
      %v5449 = vadd.f32 %v5417, 1.4214138
      %v5450 = vadd.f32 %v5418, 1.4214138
      %v5451 = vadd.f32 %v5419, 1.4214138
      %v5452 = vadd.f32 %v5420, 1.4214138
      %v5453 = vadd.f32 %v5421, 1.4214138
      %v5454 = vadd.f32 %v5422, 1.4214138
      %v5455 = vadd.f32 %v5423, 1.4214138
      %v5456 = vadd.f32 %v5424, 1.4214138
      %v5457 = vadd.f32 %v5425, 1.4214138
      %v5458 = vadd.f32 %v5426, 1.4214138
      %v5459 = vadd.f32 %v5427, 1.4214138
      %v5460 = vadd.f32 %v5428, 1.4214138
      %v5461 = vadd.f32 %v5429, 1.4214138
      %v5462 = vadd.f32 %v5430, 1.4214138
      %v5463 = vadd.f32 %v5431, 1.4214138
      %v5464 = vadd.f32 %v5432, 1.4214138
      %v5465 = vadd.f32 %v5433, 1.4214138
      %v5466 = vadd.f32 %v5434, 1.4214138
      %v5467 = vadd.f32 %v5435, 1.4214138
      %v5468 = vadd.f32 %v5436, 1.4214138
      %v5469 = vadd.f32 %v5437, 1.4214138
      %v5470 = vadd.f32 %v5438, 1.4214138
      %v5471 = vadd.f32 %v5439, 1.4214138
      %v5472 = vadd.f32 %v5440, 1.4214138
      %v5473 = vadd.f32 %v5441, 1.4214138
      %v5474 = vadd.f32 %v5442, 1.4214138
      %v5475 = vadd.f32 %v5443, 1.4214138
      %v5476 = vadd.f32 %v5444, 1.4214138
      %v5477 = vadd.f32 %v5445, 1.4214138
      %v5478 = vadd.f32 %v5446, 1.4214138
      %v5479 = vmul.f32 %v5447, %v5288
      %v5480 = vmul.f32 %v5448, %v5290
      %v5481 = vmul.f32 %v5449, %v5292
      %v5482 = vmul.f32 %v5450, %v5294
      %v5483 = vmul.f32 %v5451, %v5296
      %v5484 = vmul.f32 %v5452, %v5298
      %v5485 = vmul.f32 %v5453, %v5300
      %v5486 = vmul.f32 %v5454, %v5302
      %v5487 = vmul.f32 %v5455, %v5304
      %v5488 = vmul.f32 %v5456, %v5306
      %v5489 = vmul.f32 %v5457, %v5308
      %v5490 = vmul.f32 %v5458, %v5310
      %v5491 = vmul.f32 %v5459, %v5312
      %v5492 = vmul.f32 %v5460, %v5314
      %v5493 = vmul.f32 %v5461, %v5316
      %v5494 = vmul.f32 %v5462, %v5318
      %v5495 = vmul.f32 %v5463, %v5320
      %v5496 = vmul.f32 %v5464, %v5322
      %v5497 = vmul.f32 %v5465, %v5324
      %v5498 = vmul.f32 %v5466, %v5326
      %v5499 = vmul.f32 %v5467, %v5328
      %v5500 = vmul.f32 %v5468, %v5330
      %v5501 = vmul.f32 %v5469, %v5332
      %v5502 = vmul.f32 %v5470, %v5334
      %v5503 = vmul.f32 %v5471, %v5336
      %v5504 = vmul.f32 %v5472, %v5338
      %v5505 = vmul.f32 %v5473, %v5340
      %v5506 = vmul.f32 %v5474, %v5342
      %v5507 = vmul.f32 %v5475, %v5344
      %v5508 = vmul.f32 %v5476, %v5346
      %v5509 = vmul.f32 %v5477, %v5348
      %v5510 = vmul.f32 %v5478, %v5350
      %v5511 = vadd.f32 %v5479, -0.28449672
      %v5512 = vadd.f32 %v5480, -0.28449672
      %v5513 = vadd.f32 %v5481, -0.28449672
      %v5514 = vadd.f32 %v5482, -0.28449672
      %v5515 = vadd.f32 %v5483, -0.28449672
      %v5516 = vadd.f32 %v5484, -0.28449672
      %v5517 = vadd.f32 %v5485, -0.28449672
      %v5518 = vadd.f32 %v5486, -0.28449672
      %v5519 = vadd.f32 %v5487, -0.28449672
      %v5520 = vadd.f32 %v5488, -0.28449672
      %v5521 = vadd.f32 %v5489, -0.28449672
      %v5522 = vadd.f32 %v5490, -0.28449672
      %v5523 = vadd.f32 %v5491, -0.28449672
      %v5524 = vadd.f32 %v5492, -0.28449672
      %v5525 = vadd.f32 %v5493, -0.28449672
      %v5526 = vadd.f32 %v5494, -0.28449672
      %v5527 = vadd.f32 %v5495, -0.28449672
      %v5528 = vadd.f32 %v5496, -0.28449672
      %v5529 = vadd.f32 %v5497, -0.28449672
      %v5530 = vadd.f32 %v5498, -0.28449672
      %v5531 = vadd.f32 %v5499, -0.28449672
      %v5532 = vadd.f32 %v5500, -0.28449672
      %v5533 = vadd.f32 %v5501, -0.28449672
      %v5534 = vadd.f32 %v5502, -0.28449672
      %v5535 = vadd.f32 %v5503, -0.28449672
      %v5536 = vadd.f32 %v5504, -0.28449672
      %v5537 = vadd.f32 %v5505, -0.28449672
      %v5538 = vadd.f32 %v5506, -0.28449672
      %v5539 = vadd.f32 %v5507, -0.28449672
      %v5540 = vadd.f32 %v5508, -0.28449672
      %v5541 = vadd.f32 %v5509, -0.28449672
      %v5542 = vadd.f32 %v5510, -0.28449672
      %v5543 = vmul.f32 %v5511, %v5288
      %v5544 = vmul.f32 %v5512, %v5290
      %v5545 = vmul.f32 %v5513, %v5292
      %v5546 = vmul.f32 %v5514, %v5294
      %v5547 = vmul.f32 %v5515, %v5296
      %v5548 = vmul.f32 %v5516, %v5298
      %v5549 = vmul.f32 %v5517, %v5300
      %v5550 = vmul.f32 %v5518, %v5302
      %v5551 = vmul.f32 %v5519, %v5304
      %v5552 = vmul.f32 %v5520, %v5306
      %v5553 = vmul.f32 %v5521, %v5308
      %v5554 = vmul.f32 %v5522, %v5310
      %v5555 = vmul.f32 %v5523, %v5312
      %v5556 = vmul.f32 %v5524, %v5314
      %v5557 = vmul.f32 %v5525, %v5316
      %v5558 = vmul.f32 %v5526, %v5318
      %v5559 = vmul.f32 %v5527, %v5320
      %v5560 = vmul.f32 %v5528, %v5322
      %v5561 = vmul.f32 %v5529, %v5324
      %v5562 = vmul.f32 %v5530, %v5326
      %v5563 = vmul.f32 %v5531, %v5328
      %v5564 = vmul.f32 %v5532, %v5330
      %v5565 = vmul.f32 %v5533, %v5332
      %v5566 = vmul.f32 %v5534, %v5334
      %v5567 = vmul.f32 %v5535, %v5336
      %v5568 = vmul.f32 %v5536, %v5338
      %v5569 = vmul.f32 %v5537, %v5340
      %v5570 = vmul.f32 %v5538, %v5342
      %v5571 = vmul.f32 %v5539, %v5344
      %v5572 = vmul.f32 %v5540, %v5346
      %v5573 = vmul.f32 %v5541, %v5348
      %v5574 = vmul.f32 %v5542, %v5350
      %v5575 = vadd.f32 %v5543, 0.2548296
      %v5576 = vadd.f32 %v5544, 0.2548296
      %v5577 = vadd.f32 %v5545, 0.2548296
      %v5578 = vadd.f32 %v5546, 0.2548296
      %v5579 = vadd.f32 %v5547, 0.2548296
      %v5580 = vadd.f32 %v5548, 0.2548296
      %v5581 = vadd.f32 %v5549, 0.2548296
      %v5582 = vadd.f32 %v5550, 0.2548296
      %v5583 = vadd.f32 %v5551, 0.2548296
      %v5584 = vadd.f32 %v5552, 0.2548296
      %v5585 = vadd.f32 %v5553, 0.2548296
      %v5586 = vadd.f32 %v5554, 0.2548296
      %v5587 = vadd.f32 %v5555, 0.2548296
      %v5588 = vadd.f32 %v5556, 0.2548296
      %v5589 = vadd.f32 %v5557, 0.2548296
      %v5590 = vadd.f32 %v5558, 0.2548296
      %v5591 = vadd.f32 %v5559, 0.2548296
      %v5592 = vadd.f32 %v5560, 0.2548296
      %v5593 = vadd.f32 %v5561, 0.2548296
      %v5594 = vadd.f32 %v5562, 0.2548296
      %v5595 = vadd.f32 %v5563, 0.2548296
      %v5596 = vadd.f32 %v5564, 0.2548296
      %v5597 = vadd.f32 %v5565, 0.2548296
      %v5598 = vadd.f32 %v5566, 0.2548296
      %v5599 = vadd.f32 %v5567, 0.2548296
      %v5600 = vadd.f32 %v5568, 0.2548296
      %v5601 = vadd.f32 %v5569, 0.2548296
      %v5602 = vadd.f32 %v5570, 0.2548296
      %v5603 = vadd.f32 %v5571, 0.2548296
      %v5604 = vadd.f32 %v5572, 0.2548296
      %v5605 = vadd.f32 %v5573, 0.2548296
      %v5606 = vadd.f32 %v5574, 0.2548296
      %v5607 = vmul.f32 %v5575, %v5288
      %v5608 = vmul.f32 %v5576, %v5290
      %v5609 = vmul.f32 %v5577, %v5292
      %v5610 = vmul.f32 %v5578, %v5294
      %v5611 = vmul.f32 %v5579, %v5296
      %v5612 = vmul.f32 %v5580, %v5298
      %v5613 = vmul.f32 %v5581, %v5300
      %v5614 = vmul.f32 %v5582, %v5302
      %v5615 = vmul.f32 %v5583, %v5304
      %v5616 = vmul.f32 %v5584, %v5306
      %v5617 = vmul.f32 %v5585, %v5308
      %v5618 = vmul.f32 %v5586, %v5310
      %v5619 = vmul.f32 %v5587, %v5312
      %v5620 = vmul.f32 %v5588, %v5314
      %v5621 = vmul.f32 %v5589, %v5316
      %v5622 = vmul.f32 %v5590, %v5318
      %v5623 = vmul.f32 %v5591, %v5320
      %v5624 = vmul.f32 %v5592, %v5322
      %v5625 = vmul.f32 %v5593, %v5324
      %v5626 = vmul.f32 %v5594, %v5326
      %v5627 = vmul.f32 %v5595, %v5328
      %v5628 = vmul.f32 %v5596, %v5330
      %v5629 = vmul.f32 %v5597, %v5332
      %v5630 = vmul.f32 %v5598, %v5334
      %v5631 = vmul.f32 %v5599, %v5336
      %v5632 = vmul.f32 %v5600, %v5338
      %v5633 = vmul.f32 %v5601, %v5340
      %v5634 = vmul.f32 %v5602, %v5342
      %v5635 = vmul.f32 %v5603, %v5344
      %v5636 = vmul.f32 %v5604, %v5346
      %v5637 = vmul.f32 %v5605, %v5348
      %v5638 = vmul.f32 %v5606, %v5350
      %v5639 = vsub.f32 0.0, %v5191
      %v5640 = vsub.f32 0.0, %v5192
      %v5641 = vsub.f32 0.0, %v5193
      %v5642 = vsub.f32 0.0, %v5194
      %v5643 = vsub.f32 0.0, %v5195
      %v5644 = vsub.f32 0.0, %v5196
      %v5645 = vsub.f32 0.0, %v5197
      %v5646 = vsub.f32 0.0, %v5198
      %v5647 = vsub.f32 0.0, %v5199
      %v5648 = vsub.f32 0.0, %v5200
      %v5649 = vsub.f32 0.0, %v5201
      %v5650 = vsub.f32 0.0, %v5202
      %v5651 = vsub.f32 0.0, %v5203
      %v5652 = vsub.f32 0.0, %v5204
      %v5653 = vsub.f32 0.0, %v5205
      %v5654 = vsub.f32 0.0, %v5206
      %v5655 = vsub.f32 0.0, %v5207
      %v5656 = vsub.f32 0.0, %v5208
      %v5657 = vsub.f32 0.0, %v5209
      %v5658 = vsub.f32 0.0, %v5210
      %v5659 = vsub.f32 0.0, %v5211
      %v5660 = vsub.f32 0.0, %v5212
      %v5661 = vsub.f32 0.0, %v5213
      %v5662 = vsub.f32 0.0, %v5214
      %v5663 = vsub.f32 0.0, %v5215
      %v5664 = vsub.f32 0.0, %v5216
      %v5665 = vsub.f32 0.0, %v5217
      %v5666 = vsub.f32 0.0, %v5218
      %v5667 = vsub.f32 0.0, %v5219
      %v5668 = vsub.f32 0.0, %v5220
      %v5669 = vsub.f32 0.0, %v5221
      %v5670 = vsub.f32 0.0, %v5222
      %v5671 = vmul.f32 %v5639, %v5191
      %v5672 = vmul.f32 %v5640, %v5192
      %v5673 = vmul.f32 %v5641, %v5193
      %v5674 = vmul.f32 %v5642, %v5194
      %v5675 = vmul.f32 %v5643, %v5195
      %v5676 = vmul.f32 %v5644, %v5196
      %v5677 = vmul.f32 %v5645, %v5197
      %v5678 = vmul.f32 %v5646, %v5198
      %v5679 = vmul.f32 %v5647, %v5199
      %v5680 = vmul.f32 %v5648, %v5200
      %v5681 = vmul.f32 %v5649, %v5201
      %v5682 = vmul.f32 %v5650, %v5202
      %v5683 = vmul.f32 %v5651, %v5203
      %v5684 = vmul.f32 %v5652, %v5204
      %v5685 = vmul.f32 %v5653, %v5205
      %v5686 = vmul.f32 %v5654, %v5206
      %v5687 = vmul.f32 %v5655, %v5207
      %v5688 = vmul.f32 %v5656, %v5208
      %v5689 = vmul.f32 %v5657, %v5209
      %v5690 = vmul.f32 %v5658, %v5210
      %v5691 = vmul.f32 %v5659, %v5211
      %v5692 = vmul.f32 %v5660, %v5212
      %v5693 = vmul.f32 %v5661, %v5213
      %v5694 = vmul.f32 %v5662, %v5214
      %v5695 = vmul.f32 %v5663, %v5215
      %v5696 = vmul.f32 %v5664, %v5216
      %v5697 = vmul.f32 %v5665, %v5217
      %v5698 = vmul.f32 %v5666, %v5218
      %v5699 = vmul.f32 %v5667, %v5219
      %v5700 = vmul.f32 %v5668, %v5220
      %v5701 = vmul.f32 %v5669, %v5221
      %v5702 = vmul.f32 %v5670, %v5222
      %v5703 = vmul.f32 %v5671, 1.442695
      %v5704 = vpow.pop %v5703
      %v5705 = vmul.f32 %v5672, 1.442695
      %v5706 = vpow.pop %v5705
      %v5707 = vmul.f32 %v5673, 1.442695
      %v5708 = vpow.pop %v5707
      %v5709 = vmul.f32 %v5674, 1.442695
      %v5710 = vpow.pop %v5709
      %v5711 = vmul.f32 %v5675, 1.442695
      %v5712 = vpow.pop %v5711
      %v5713 = vmul.f32 %v5676, 1.442695
      %v5714 = vpow.pop %v5713
      %v5715 = vmul.f32 %v5677, 1.442695
      %v5716 = vpow.pop %v5715
      %v5717 = vmul.f32 %v5678, 1.442695
      %v5718 = vpow.pop %v5717
      %v5719 = vmul.f32 %v5679, 1.442695
      %v5720 = vpow.pop %v5719
      %v5721 = vmul.f32 %v5680, 1.442695
      %v5722 = vpow.pop %v5721
      %v5723 = vmul.f32 %v5681, 1.442695
      %v5724 = vpow.pop %v5723
      %v5725 = vmul.f32 %v5682, 1.442695
      %v5726 = vpow.pop %v5725
      %v5727 = vmul.f32 %v5683, 1.442695
      %v5728 = vpow.pop %v5727
      %v5729 = vmul.f32 %v5684, 1.442695
      %v5730 = vpow.pop %v5729
      %v5731 = vmul.f32 %v5685, 1.442695
      %v5732 = vpow.pop %v5731
      %v5733 = vmul.f32 %v5686, 1.442695
      %v5734 = vpow.pop %v5733
      %v5735 = vmul.f32 %v5687, 1.442695
      %v5736 = vpow.pop %v5735
      %v5737 = vmul.f32 %v5688, 1.442695
      %v5738 = vpow.pop %v5737
      %v5739 = vmul.f32 %v5689, 1.442695
      %v5740 = vpow.pop %v5739
      %v5741 = vmul.f32 %v5690, 1.442695
      %v5742 = vpow.pop %v5741
      %v5743 = vmul.f32 %v5691, 1.442695
      %v5744 = vpow.pop %v5743
      %v5745 = vmul.f32 %v5692, 1.442695
      %v5746 = vpow.pop %v5745
      %v5747 = vmul.f32 %v5693, 1.442695
      %v5748 = vpow.pop %v5747
      %v5749 = vmul.f32 %v5694, 1.442695
      %v5750 = vpow.pop %v5749
      %v5751 = vmul.f32 %v5695, 1.442695
      %v5752 = vpow.pop %v5751
      %v5753 = vmul.f32 %v5696, 1.442695
      %v5754 = vpow.pop %v5753
      %v5755 = vmul.f32 %v5697, 1.442695
      %v5756 = vpow.pop %v5755
      %v5757 = vmul.f32 %v5698, 1.442695
      %v5758 = vpow.pop %v5757
      %v5759 = vmul.f32 %v5699, 1.442695
      %v5760 = vpow.pop %v5759
      %v5761 = vmul.f32 %v5700, 1.442695
      %v5762 = vpow.pop %v5761
      %v5763 = vmul.f32 %v5701, 1.442695
      %v5764 = vpow.pop %v5763
      %v5765 = vmul.f32 %v5702, 1.442695
      %v5766 = vpow.pop %v5765
      %v5767 = vmul.f32 %v5607, %v5704
      %v5768 = vmul.f32 %v5608, %v5706
      %v5769 = vmul.f32 %v5609, %v5708
      %v5770 = vmul.f32 %v5610, %v5710
      %v5771 = vmul.f32 %v5611, %v5712
      %v5772 = vmul.f32 %v5612, %v5714
      %v5773 = vmul.f32 %v5613, %v5716
      %v5774 = vmul.f32 %v5614, %v5718
      %v5775 = vmul.f32 %v5615, %v5720
      %v5776 = vmul.f32 %v5616, %v5722
      %v5777 = vmul.f32 %v5617, %v5724
      %v5778 = vmul.f32 %v5618, %v5726
      %v5779 = vmul.f32 %v5619, %v5728
      %v5780 = vmul.f32 %v5620, %v5730
      %v5781 = vmul.f32 %v5621, %v5732
      %v5782 = vmul.f32 %v5622, %v5734
      %v5783 = vmul.f32 %v5623, %v5736
      %v5784 = vmul.f32 %v5624, %v5738
      %v5785 = vmul.f32 %v5625, %v5740
      %v5786 = vmul.f32 %v5626, %v5742
      %v5787 = vmul.f32 %v5627, %v5744
      %v5788 = vmul.f32 %v5628, %v5746
      %v5789 = vmul.f32 %v5629, %v5748
      %v5790 = vmul.f32 %v5630, %v5750
      %v5791 = vmul.f32 %v5631, %v5752
      %v5792 = vmul.f32 %v5632, %v5754
      %v5793 = vmul.f32 %v5633, %v5756
      %v5794 = vmul.f32 %v5634, %v5758
      %v5795 = vmul.f32 %v5635, %v5760
      %v5796 = vmul.f32 %v5636, %v5762
      %v5797 = vmul.f32 %v5637, %v5764
      %v5798 = vmul.f32 %v5638, %v5766
      %v5799 = vsub.f32 1.0, %v5767
      %v5800 = vsub.f32 1.0, %v5768
      %v5801 = vsub.f32 1.0, %v5769
      %v5802 = vsub.f32 1.0, %v5770
      %v5803 = vsub.f32 1.0, %v5771
      %v5804 = vsub.f32 1.0, %v5772
      %v5805 = vsub.f32 1.0, %v5773
      %v5806 = vsub.f32 1.0, %v5774
      %v5807 = vsub.f32 1.0, %v5775
      %v5808 = vsub.f32 1.0, %v5776
      %v5809 = vsub.f32 1.0, %v5777
      %v5810 = vsub.f32 1.0, %v5778
      %v5811 = vsub.f32 1.0, %v5779
      %v5812 = vsub.f32 1.0, %v5780
      %v5813 = vsub.f32 1.0, %v5781
      %v5814 = vsub.f32 1.0, %v5782
      %v5815 = vsub.f32 1.0, %v5783
      %v5816 = vsub.f32 1.0, %v5784
      %v5817 = vsub.f32 1.0, %v5785
      %v5818 = vsub.f32 1.0, %v5786
      %v5819 = vsub.f32 1.0, %v5787
      %v5820 = vsub.f32 1.0, %v5788
      %v5821 = vsub.f32 1.0, %v5789
      %v5822 = vsub.f32 1.0, %v5790
      %v5823 = vsub.f32 1.0, %v5791
      %v5824 = vsub.f32 1.0, %v5792
      %v5825 = vsub.f32 1.0, %v5793
      %v5826 = vsub.f32 1.0, %v5794
      %v5827 = vsub.f32 1.0, %v5795
      %v5828 = vsub.f32 1.0, %v5796
      %v5829 = vsub.f32 1.0, %v5797
      %v5830 = vsub.f32 1.0, %v5798
      %v5831 = vmul.f32 %v5159, %v5799
      %v5832 = vmul.f32 %v5160, %v5800
      %v5833 = vmul.f32 %v5161, %v5801
      %v5834 = vmul.f32 %v5162, %v5802
      %v5835 = vmul.f32 %v5163, %v5803
      %v5836 = vmul.f32 %v5164, %v5804
      %v5837 = vmul.f32 %v5165, %v5805
      %v5838 = vmul.f32 %v5166, %v5806
      %v5839 = vmul.f32 %v5167, %v5807
      %v5840 = vmul.f32 %v5168, %v5808
      %v5841 = vmul.f32 %v5169, %v5809
      %v5842 = vmul.f32 %v5170, %v5810
      %v5843 = vmul.f32 %v5171, %v5811
      %v5844 = vmul.f32 %v5172, %v5812
      %v5845 = vmul.f32 %v5173, %v5813
      %v5846 = vmul.f32 %v5174, %v5814
      %v5847 = vmul.f32 %v5175, %v5815
      %v5848 = vmul.f32 %v5176, %v5816
      %v5849 = vmul.f32 %v5177, %v5817
      %v5850 = vmul.f32 %v5178, %v5818
      %v5851 = vmul.f32 %v5179, %v5819
      %v5852 = vmul.f32 %v5180, %v5820
      %v5853 = vmul.f32 %v5181, %v5821
      %v5854 = vmul.f32 %v5182, %v5822
      %v5855 = vmul.f32 %v5183, %v5823
      %v5856 = vmul.f32 %v5184, %v5824
      %v5857 = vmul.f32 %v5185, %v5825
      %v5858 = vmul.f32 %v5186, %v5826
      %v5859 = vmul.f32 %v5187, %v5827
      %v5860 = vmul.f32 %v5188, %v5828
      %v5861 = vmul.f32 %v5189, %v5829
      %v5862 = vmul.f32 %v5190, %v5830
      %v5863 = vadd.f32 %v5831, 1.0
      %v5864 = vadd.f32 %v5832, 1.0
      %v5865 = vadd.f32 %v5833, 1.0
      %v5866 = vadd.f32 %v5834, 1.0
      %v5867 = vadd.f32 %v5835, 1.0
      %v5868 = vadd.f32 %v5836, 1.0
      %v5869 = vadd.f32 %v5837, 1.0
      %v5870 = vadd.f32 %v5838, 1.0
      %v5871 = vadd.f32 %v5839, 1.0
      %v5872 = vadd.f32 %v5840, 1.0
      %v5873 = vadd.f32 %v5841, 1.0
      %v5874 = vadd.f32 %v5842, 1.0
      %v5875 = vadd.f32 %v5843, 1.0
      %v5876 = vadd.f32 %v5844, 1.0
      %v5877 = vadd.f32 %v5845, 1.0
      %v5878 = vadd.f32 %v5846, 1.0
      %v5879 = vadd.f32 %v5847, 1.0
      %v5880 = vadd.f32 %v5848, 1.0
      %v5881 = vadd.f32 %v5849, 1.0
      %v5882 = vadd.f32 %v5850, 1.0
      %v5883 = vadd.f32 %v5851, 1.0
      %v5884 = vadd.f32 %v5852, 1.0
      %v5885 = vadd.f32 %v5853, 1.0
      %v5886 = vadd.f32 %v5854, 1.0
      %v5887 = vadd.f32 %v5855, 1.0
      %v5888 = vadd.f32 %v5856, 1.0
      %v5889 = vadd.f32 %v5857, 1.0
      %v5890 = vadd.f32 %v5858, 1.0
      %v5891 = vadd.f32 %v5859, 1.0
      %v5892 = vadd.f32 %v5860, 1.0
      %v5893 = vadd.f32 %v5861, 1.0
      %v5894 = vadd.f32 %v5862, 1.0
      %v5895 = vmul.f32 %v5063, %v5863
      %v5896 = vmul.f32 %v5064, %v5864
      %v5897 = vmul.f32 %v5065, %v5865
      %v5898 = vmul.f32 %v5066, %v5866
      %v5899 = vmul.f32 %v5067, %v5867
      %v5900 = vmul.f32 %v5068, %v5868
      %v5901 = vmul.f32 %v5069, %v5869
      %v5902 = vmul.f32 %v5070, %v5870
      %v5903 = vmul.f32 %v5071, %v5871
      %v5904 = vmul.f32 %v5072, %v5872
      %v5905 = vmul.f32 %v5073, %v5873
      %v5906 = vmul.f32 %v5074, %v5874
      %v5907 = vmul.f32 %v5075, %v5875
      %v5908 = vmul.f32 %v5076, %v5876
      %v5909 = vmul.f32 %v5077, %v5877
      %v5910 = vmul.f32 %v5078, %v5878
      %v5911 = vmul.f32 %v5079, %v5879
      %v5912 = vmul.f32 %v5080, %v5880
      %v5913 = vmul.f32 %v5081, %v5881
      %v5914 = vmul.f32 %v5082, %v5882
      %v5915 = vmul.f32 %v5083, %v5883
      %v5916 = vmul.f32 %v5084, %v5884
      %v5917 = vmul.f32 %v5085, %v5885
      %v5918 = vmul.f32 %v5086, %v5886
      %v5919 = vmul.f32 %v5087, %v5887
      %v5920 = vmul.f32 %v5088, %v5888
      %v5921 = vmul.f32 %v5089, %v5889
      %v5922 = vmul.f32 %v5090, %v5890
      %v5923 = vmul.f32 %v5091, %v5891
      %v5924 = vmul.f32 %v5092, %v5892
      %v5925 = vmul.f32 %v5093, %v5893
      %v5926 = vmul.f32 %v5094, %v5894
      %5927 = vst.msk [vmem:[%s224] sm:$0xff] %vm1539, %v5895
      %5928 = vst.msk [vmem:[%s224 + $0x8] sm:$0xff] %vm1539, %v5896
      %5929 = vst.msk [vmem:[%s224 + $0x10] sm:$0xff] %vm1539, %v5897
      %5930 = vst.msk [vmem:[%s224 + $0x18] sm:$0xff] %vm1539, %v5898
      %5931 = vst.msk [vmem:[%s224 + $0x20] sm:$0xff] %vm1539, %v5899
      %5932 = vst.msk [vmem:[%s224 + $0x28] sm:$0xff] %vm1539, %v5900
      %5933 = vst.msk [vmem:[%s224 + $0x30] sm:$0xff] %vm1539, %v5901
      %5934 = vst.msk [vmem:[%s224 + $0x38] sm:$0xff] %vm1539, %v5902
      %5935 = vst.msk [vmem:[%s224 + $0x40] sm:$0xff] %vm1539, %v5903
      %5936 = vst.msk [vmem:[%s224 + $0x48] sm:$0xff] %vm1539, %v5904
      %5937 = vst.msk [vmem:[%s224 + $0x50] sm:$0xff] %vm1539, %v5905
      %5938 = vst.msk [vmem:[%s224 + $0x58] sm:$0xff] %vm1539, %v5906
      %5939 = vst.msk [vmem:[%s224 + $0x60] sm:$0xff] %vm1539, %v5907
      %5940 = vst.msk [vmem:[%s224 + $0x68] sm:$0xff] %vm1539, %v5908
      %5941 = vst.msk [vmem:[%s224 + $0x70] sm:$0xff] %vm1539, %v5909
      %5942 = vst.msk [vmem:[%s224 + $0x78] sm:$0xff] %vm1539, %v5910
      %5943 = vst.msk [vmem:[%s224 + $0x80] sm:$0xff] %vm1539, %v5911
      %5944 = vst.msk [vmem:[%s224 + $0x88] sm:$0xff] %vm1539, %v5912
      %5945 = vst.msk [vmem:[%s224 + $0x90] sm:$0xff] %vm1539, %v5913
      %5946 = vst.msk [vmem:[%s224 + $0x98] sm:$0xff] %vm1539, %v5914
      %5947 = vst.msk [vmem:[%s224 + $0xa0] sm:$0xff] %vm1539, %v5915
      %5948 = vst.msk [vmem:[%s224 + $0xa8] sm:$0xff] %vm1539, %v5916
      %5949 = vst.msk [vmem:[%s224 + $0xb0] sm:$0xff] %vm1539, %v5917
      %5950 = vst.msk [vmem:[%s224 + $0xb8] sm:$0xff] %vm1539, %v5918
      %5951 = vst.msk [vmem:[%s224 + $0xc0] sm:$0xff] %vm1539, %v5919
      %5952 = vst.msk [vmem:[%s224 + $0xc8] sm:$0xff] %vm1539, %v5920
      %5953 = vst.msk [vmem:[%s224 + $0xd0] sm:$0xff] %vm1539, %v5921
      %5954 = vst.msk [vmem:[%s224 + $0xd8] sm:$0xff] %vm1539, %v5922
      %5955 = vst.msk [vmem:[%s224 + $0xe0] sm:$0xff] %vm1539, %v5923
      %5956 = vst.msk [vmem:[%s224 + $0xe8] sm:$0xff] %vm1539, %v5924
      %5957 = vst.msk [vmem:[%s224 + $0xf0] sm:$0xff] %vm1539, %v5925
      %5958 = vst.msk [vmem:[%s224 + $0xf8] sm:$0xff] %vm1539, %v5926
      %p5959 = scmp.lt.s32.totalorder %s16, 1
      %s5960 = scalar_select %p5959, %s16, 1
      %s5961 = smul.addr %s5960, 32
      %s5962 = smul.addr %s5961, 8
      %s5963 = scalar_lea.vmem %s5, %s5962
      // Predicated region
      $region41: #{basic_block_forward.1} parent=39 // pred_check
        %p5964 = pneg %p144
      $region42: #{basic_block_forward.1} parent=39 // pred_check_branch
        %5966 = sbr.rel (%p5964) target = $region44
      $region43: #{basic_block_forward.1} parent=39 // pred_region
        _
      $region44: #{basic_block_forward.1} parent=39 // pred_fallthru
        _
    $region40: #{basic_block_forward.1} parent=5 // pred_fallthru
      _
    %p5967 = scmp.le.s32.totalorder 2, %s11
    // Predicated region
    $region45: #{basic_block_forward.1} parent=5 // pred_check
      %p5968 = pneg %p5967
    $region46: #{basic_block_forward.1} parent=5 // pred_check_branch
      %5970 = sbr.rel (%p5968) target = $region48
    $region47: #{basic_block_forward.1} parent=5 // pred_region
      %s5971 = ssub.s32 %s11, 2
      // Predicated region
      $region49: #{basic_block_forward.1} parent=47 // pred_check
        %p5972 = pneg %p150
      $region50: #{basic_block_forward.1} parent=47 // pred_check_branch
        %5974 = sbr.rel (%p5972) target = $region52
      $region51: #{basic_block_forward.1} parent=47 // pred_region
        %p5975 = scmp.lt.s32.totalorder %s17, 1
        %s5976 = scalar_select %p5975, %s17, 1
        %s5977 = smul.addr %s5976, 32
        %s5978 = smul.addr %s5977, 8
        %s5979 = scalar_lea.vmem %s5, %s5978
      $region52: #{basic_block_forward.1} parent=47 // pred_fallthru
        _
    $region48: #{basic_block_forward.1} parent=5 // pred_fallthru
      _
  $region6: #{basic_block_forward.1} parent=0 // loop_footer
    %s15 = sadd.s32 1, %s11
  $region7: #{basic_block_forward.1} parent=0 // loop_footer_branch
    %10 = sbr.rel target = $region3
  $region8: #{basic_block_forward.1} parent=0 // loop_exit
    _

</llo_original>
